<compile_context>
chip_gen: v7x
topology: tpu7x:2x2x1
jax: 0.10.0
libtpu: 0.0.40
codegen_flags: <defaults>
</compile_context>

<pallas_src>
import numpy as np
import jax
import jax.numpy as jnp
from jax import lax
from jax.experimental import pallas as pl
from jax.experimental.pallas import tpu as pltpu

_INV_SQRT2 = 0.7071067811865476
_GN_EPS = 1e-5


def _gelu(x):
    # exact (erf-based) GELU - matches torch nn.GELU() / F.gelu defaults
    return 0.5 * x * (1.0 + lax.erf(x * _INV_SQRT2))


def down_kernel(xp_ref, t_ref,
                w1_ref, g1_ref, b1_ref,
                w2_ref, g2_ref, b2_ref,
                w3_ref, g3_ref, b3_ref,
                w4_ref, g4_ref, b4_ref,
                ew_ref, eb_ref,
                out_ref,
                pad_a, pad_b):
    hh = pad_a.shape[0] - 2
    ww = pad_a.shape[1] - 2
    n = hh * ww

    def zero_border(pad_ref):
        # Zero only the 1-element padding border, once per grid step.  Every
        # conv fully overwrites the interior and never touches the border.
        ph, pw, pc = pad_ref.shape
        zrow = jnp.zeros((1, pw, pc), jnp.float32)
        zcol = jnp.zeros((ph, 1, pc), jnp.float32)
        pad_ref[0:1, :, :] = zrow
        pad_ref[ph - 1:ph, :, :] = zrow
        pad_ref[:, 0:1, :] = zcol
        pad_ref[:, pw - 1:pw, :] = zcol

    def conv3x3(act, w_ref, pad_ref):
        # act: (n, cin) f32 ; w_ref: (9, cin, cout) bf16 ;
        # pad_ref: (hh+2, ww+2, cin) f32 (border already zero)
        cin = pad_ref.shape[2]
        pad_ref[1:hh + 1, 1:ww + 1, :] = act.reshape(hh, ww, cin)
        acc = None
        for k in range(9):                       # 9 shifted taps -> 2-D MXU dots
            dy, dx = k // 3, k % 3
            patch = pad_ref[dy:dy + hh, dx:dx + ww, :].reshape(n, cin)
            d = jnp.dot(patch.astype(jnp.bfloat16), w_ref[k],
                        preferred_element_type=jnp.float32)
            acc = d if acc is None else acc + d
        return acc                               # (n, cout) f32

    def group_norm(y, g_ref, b_ref):
        # GroupNorm(num_groups=1, C): normalize over all of (H, W, C) / sample.
        # Fused single-pass statistics: var = E[y^2] - mu^2.
        mu = jnp.mean(y)
        var = jnp.maximum(jnp.mean(y * y) - mu * mu, 0.0)
        y_n = (y - mu) * lax.rsqrt(var + _GN_EPS)
        return y_n * g_ref[...] + b_ref[...]     # (1, C) affine, broadcast over n

    zero_border(pad_a)
    zero_border(pad_b)

    # --- MaxPool2d(2): elementwise max over the 4 pre-split window positions ---
    p = jnp.maximum(jnp.maximum(xp_ref[0, 0], xp_ref[0, 1]),
                    jnp.maximum(xp_ref[0, 2], xp_ref[0, 3]))     # (n, Cin) f32

    # --- DoubleConv(in_channels, in_channels, residual=True) ---
    h = _gelu(group_norm(conv3x3(p, w1_ref, pad_a), g1_ref, b1_ref))
    h = group_norm(conv3x3(h, w2_ref, pad_a), g2_ref, b2_ref)
    r = _gelu(p + h)

    # --- DoubleConv(in_channels, out_channels) ---
    h = _gelu(group_norm(conv3x3(r, w3_ref, pad_a), g3_ref, b3_ref))
    h = group_norm(conv3x3(h, w4_ref, pad_b), g4_ref, b4_ref)

    # --- emb_layer: SiLU -> Linear(emb_dim, out_channels), broadcast over HxW ---
    tt = t_ref[0]                                # (1, E) f32
    s = tt * jax.nn.sigmoid(tt)                  # SiLU in f32
    e = jnp.dot(s.astype(jnp.bfloat16), ew_ref[...],
                preferred_element_type=jnp.float32) + eb_ref[...]   # (1, Cout)

    out_ref[0] = (h + e).astype(out_ref.dtype)   # (n, Cout)


def down_pallas(x, t, params):
    """x: (B, Cin, H, W) NCHW (PyTorch convention); t: (B, E).
    Returns (B, Cout, H//2, W//2) NCHW."""
    B, Cin, H, W = x.shape
    E = t.shape[1]
    Cout = params["w4"].shape[-1]
    H2, W2 = H // 2, W // 2
    N = H2 * W2

    # NCHW -> NHWC, split the 2x2 pool windows onto a leading size-4 axis,
    # then flatten spatial to (N, C) slabs (all glue reshapes).
    x_nhwc = jnp.transpose(x, (0, 2, 3, 1))
    xp = x_nhwc.reshape(B, H2, 2, W2, 2, Cin)
    xp = jnp.transpose(xp, (0, 2, 4, 1, 3, 5)).reshape(B, 4, N, Cin)
    t3 = t.reshape(B, 1, E)

    # Weights in bf16 for the MXU; GroupNorm affine / emb bias stay f32.
    def wconv(w):
        return w.astype(jnp.bfloat16)            # (9, ci, co)

    def aff(v):
        return v.reshape(1, -1).astype(jnp.float32)

    w1, w2, w3, w4 = (wconv(params[k]) for k in ("w1", "w2", "w3", "w4"))
    g1, b1 = aff(params["g1"]), aff(params["b1"])
    g2, b2 = aff(params["g2"]), aff(params["b2"])
    g3, b3 = aff(params["g3"]), aff(params["b3"])
    g4, b4 = aff(params["g4"]), aff(params["b4"])
    ew = params["ew"].astype(jnp.bfloat16)
    eb = aff(params["eb"])

    def full_spec(arr):                          # grid-invariant block -> fetched once
        nd = arr.ndim
        return pl.BlockSpec(arr.shape, lambda b, _nd=nd: (0,) * _nd)

    in_specs = [
        pl.BlockSpec((1, 4, N, Cin), lambda b: (b, 0, 0, 0)),
        pl.BlockSpec((1, 1, E), lambda b: (b, 0, 0)),
        full_spec(w1), full_spec(g1), full_spec(b1),
        full_spec(w2), full_spec(g2), full_spec(b2),
        full_spec(w3), full_spec(g3), full_spec(b3),
        full_spec(w4), full_spec(g4), full_spec(b4),
        full_spec(ew), full_spec(eb),
    ]

    y = pl.pallas_call(
        down_kernel,
        out_shape=jax.ShapeDtypeStruct((B, N, Cout), x.dtype),
        grid=(B,),
        in_specs=in_specs,
        out_specs=pl.BlockSpec((1, N, Cout), lambda b: (b, 0, 0)),
        scratch_shapes=[pltpu.VMEM((H2 + 2, W2 + 2, Cin), jnp.float32),
                        pltpu.VMEM((H2 + 2, W2 + 2, Cout), jnp.float32)],
        compiler_params=pltpu.CompilerParams(
            dimension_semantics=("parallel",),        # v7x: shard batch over 2 TCs
            vmem_limit_bytes=32 * 1024 * 1024),       # explicit VMEM budget
    )(xp, t3,
      w1, g1, b1, w2, g2, b2, w3, g3, b3, w4, g4, b4, ew, eb)

    return jnp.transpose(y.reshape(B, H2, W2, Cout), (0, 3, 1, 2))   # back to NCHW


def down_reference(x, t, params):
    """Pure-JAX reference (NCHW).  Mirrors the kernel's precision policy:
    matmul/conv operands rounded to bf16 with f32 accumulation; GroupNorm,
    GELU, SiLU and the residual in f32 (per the review's correctness note)."""
    def conv3x3(a, w):
        w4 = w.reshape(3, 3, w.shape[1], w.shape[2]).astype(jnp.bfloat16)  # HWIO
        return lax.conv_general_dilated(
            a.astype(jnp.bfloat16), w4, window_strides=(1, 1),
            padding=((1, 1), (1, 1)),
            dimension_numbers=("NCHW", "HWIO", "NCHW"),
            preferred_element_type=jnp.float32)

    def gn(a, g, b):
        mu = jnp.mean(a, axis=(1, 2, 3), keepdims=True)
        var = jnp.mean((a - mu) ** 2, axis=(1, 2, 3), keepdims=True)
        a_n = (a - mu) / jnp.sqrt(var + _GN_EPS)
        return a_n * g.reshape(1, -1, 1, 1) + b.reshape(1, -1, 1, 1)

    B, C, H, W = x.shape
    p = jnp.max(x.reshape(B, C, H // 2, 2, W // 2, 2), axis=(3, 5))
    h = _gelu(gn(conv3x3(p, params["w1"]), params["g1"], params["b1"]))
    h = gn(conv3x3(h, params["w2"]), params["g2"], params["b2"])
    r = _gelu(p + h)
    h = _gelu(gn(conv3x3(r, params["w3"]), params["g3"], params["b3"]))
    h = gn(conv3x3(h, params["w4"]), params["g4"], params["b4"])
    e = jnp.dot(jax.nn.silu(t).astype(jnp.bfloat16),
                params["ew"].astype(jnp.bfloat16),
                preferred_element_type=jnp.float32) + params["eb"]
    return h + e[:, :, None, None]


def init_params(key, cin, cout, emb_dim):
    keys = jax.random.split(key, 10)

    def conv_w(k, ci, co):
        scale = 1.0 / (9.0 * ci) ** 0.5                  # fan_in = 3*3*ci
        return scale * jax.random.normal(k, (9, ci, co), jnp.float32)

    def gn_p(k, c):
        kg, kb = jax.random.split(k)
        g = 1.0 + 0.1 * jax.random.normal(kg, (1, 1, c), jnp.float32)
        b = 0.1 * jax.random.normal(kb, (1, 1, c), jnp.float32)
        return g, b

    w1 = conv_w(keys[0], cin, cin);   g1, b1 = gn_p(keys[1], cin)
    w2 = conv_w(keys[2], cin, cin);   g2, b2 = gn_p(keys[3], cin)
    w3 = conv_w(keys[4], cin, cout);  g3, b3 = gn_p(keys[5], cout)
    w4 = conv_w(keys[6], cout, cout); g4, b4 = gn_p(keys[7], cout)
    ew = (1.0 / emb_dim ** 0.5) * jax.random.normal(keys[8], (emb_dim, cout), jnp.float32)
    eb = 0.1 * jax.random.normal(keys[9], (1, cout), jnp.float32)
    return dict(w1=w1, g1=g1, b1=b1, w2=w2, g2=g2, b2=b2,
                w3=w3, g3=g3, b3=b3, w4=w4, g4=g4, b4=b4, ew=ew, eb=eb)


if __name__ == "__main__":
    B, Cin, Cout, H, W, E = 2, 4, 8, 16, 16, 32
    key = jax.random.PRNGKey(0)
    kx, kt, kp = jax.random.split(key, 3)
    x = jax.random.normal(kx, (B, Cin, H, W), jnp.float32)
    t = jax.random.normal(kt, (B, E), jnp.float32)
    params = init_params(kp, Cin, Cout, E)

    y = jax.jit(down_pallas)(x, t, params)
    y = jax.block_until_ready(y)

    assert y.shape == (B, Cout, H // 2, W // 2), y.shape

    y_ref = down_reference(x, t, params)
    np.testing.assert_allclose(np.asarray(y), np.asarray(y_ref),
                               atol=2e-2, rtol=2e-2)
    print("KERNEL_OK")
</pallas_src>

<mosaic_0001>
module attributes {stable_mosaic.version = 11 : i64} {
  func.func @down_kernel(%arg0: i32, %arg1: memref<1x4x64x4xf32, #tpu.memory_space<vmem>>, %arg2: memref<1x1x32xf32, #tpu.memory_space<vmem>>, %arg3: memref<9x4x4xbf16, #tpu.memory_space<vmem>>, %arg4: memref<1x4xf32, #tpu.memory_space<vmem>>, %arg5: memref<1x4xf32, #tpu.memory_space<vmem>>, %arg6: memref<9x4x4xbf16, #tpu.memory_space<vmem>>, %arg7: memref<1x4xf32, #tpu.memory_space<vmem>>, %arg8: memref<1x4xf32, #tpu.memory_space<vmem>>, %arg9: memref<9x4x8xbf16, #tpu.memory_space<vmem>>, %arg10: memref<1x8xf32, #tpu.memory_space<vmem>>, %arg11: memref<1x8xf32, #tpu.memory_space<vmem>>, %arg12: memref<9x8x8xbf16, #tpu.memory_space<vmem>>, %arg13: memref<1x8xf32, #tpu.memory_space<vmem>>, %arg14: memref<1x8xf32, #tpu.memory_space<vmem>>, %arg15: memref<32x8xbf16, #tpu.memory_space<vmem>>, %arg16: memref<1x8xf32, #tpu.memory_space<vmem>>, %arg17: memref<1x64x8xf32, #tpu.memory_space<vmem>>, %arg18: memref<10x10x4xf32, #tpu.memory_space<vmem>>, %arg19: memref<10x10x8xf32, #tpu.memory_space<vmem>>) attributes {dimension_semantics = [#tpu.dimension_semantics<parallel>], iteration_bounds = array<i64: 2>, scalar_prefetch = 0 : i64, scratch_operands = 2 : i64, tpu.core_type = #tpu.core_type<tc>, window_params = [{transform_indices = @transform_0, window_bounds = array<i64: 1, 4, 64, 4>}, {transform_indices = @transform_1, window_bounds = array<i64: 1, 1, 32>}, {pipeline_mode = #tpu.pipeline_mode<synchronous>, transform_indices = @transform_2, window_bounds = array<i64: 9, 4, 4>}, {pipeline_mode = #tpu.pipeline_mode<synchronous>, transform_indices = @transform_3, window_bounds = array<i64: 1, 4>}, {pipeline_mode = #tpu.pipeline_mode<synchronous>, transform_indices = @transform_4, window_bounds = array<i64: 1, 4>}, {pipeline_mode = #tpu.pipeline_mode<synchronous>, transform_indices = @transform_5, window_bounds = array<i64: 9, 4, 4>}, {pipeline_mode = #tpu.pipeline_mode<synchronous>, transform_indices = @transform_6, window_bounds = array<i64: 1, 4>}, {pipeline_mode = #tpu.pipeline_mode<synchronous>, transform_indices = @transform_7, window_bounds = array<i64: 1, 4>}, {pipeline_mode = #tpu.pipeline_mode<synchronous>, transform_indices = @transform_8, window_bounds = array<i64: 9, 4, 8>}, {pipeline_mode = #tpu.pipeline_mode<synchronous>, transform_indices = @transform_9, window_bounds = array<i64: 1, 8>}, {pipeline_mode = #tpu.pipeline_mode<synchronous>, transform_indices = @transform_10, window_bounds = array<i64: 1, 8>}, {pipeline_mode = #tpu.pipeline_mode<synchronous>, transform_indices = @transform_11, window_bounds = array<i64: 9, 8, 8>}, {pipeline_mode = #tpu.pipeline_mode<synchronous>, transform_indices = @transform_12, window_bounds = array<i64: 1, 8>}, {pipeline_mode = #tpu.pipeline_mode<synchronous>, transform_indices = @transform_13, window_bounds = array<i64: 1, 8>}, {pipeline_mode = #tpu.pipeline_mode<synchronous>, transform_indices = @transform_14, window_bounds = array<i64: 32, 8>}, {pipeline_mode = #tpu.pipeline_mode<synchronous>, transform_indices = @transform_15, window_bounds = array<i64: 1, 8>}, {transform_indices = @transform_16, window_bounds = array<i64: 1, 64, 8>}]} {
    %cst = arith.constant 0.000000e+00 : f32
    %0 = vector.broadcast %cst : f32 to vector<1x10x4xf32>
    %cst_0 = arith.constant 0.000000e+00 : f32
    %1 = vector.broadcast %cst_0 : f32 to vector<10x1x4xf32>
    %c0 = arith.constant 0 : index
    %c0_1 = arith.constant 0 : index
    %c0_2 = arith.constant 0 : index
    %2 = vector.load %arg18[%c0, %c0_1, %c0_2] : memref<10x10x4xf32, #tpu.memory_space<vmem>>, vector<1x10x4xf32>
    tpu.vector_store %arg18[%c0, %c0_1, %c0_2], %0 {strides = array<i32>} : memref<10x10x4xf32, #tpu.memory_space<vmem>>, vector<1x10x4xf32>,
    %c9 = arith.constant 9 : index
    %c0_3 = arith.constant 0 : index
    %c0_4 = arith.constant 0 : index
    %3 = vector.load %arg18[%c9, %c0_3, %c0_4] : memref<10x10x4xf32, #tpu.memory_space<vmem>>, vector<1x10x4xf32>
    tpu.vector_store %arg18[%c9, %c0_3, %c0_4], %0 {strides = array<i32>} : memref<10x10x4xf32, #tpu.memory_space<vmem>>, vector<1x10x4xf32>,
    %c0_5 = arith.constant 0 : index
    %c0_6 = arith.constant 0 : index
    %c0_7 = arith.constant 0 : index
    %4 = vector.load %arg18[%c0_5, %c0_6, %c0_7] : memref<10x10x4xf32, #tpu.memory_space<vmem>>, vector<10x1x4xf32>
    tpu.vector_store %arg18[%c0_5, %c0_6, %c0_7], %1 {strides = array<i32>} : memref<10x10x4xf32, #tpu.memory_space<vmem>>, vector<10x1x4xf32>,
    %c0_8 = arith.constant 0 : index
    %c9_9 = arith.constant 9 : index
    %c0_10 = arith.constant 0 : index
    %5 = vector.load %arg18[%c0_8, %c9_9, %c0_10] : memref<10x10x4xf32, #tpu.memory_space<vmem>>, vector<10x1x4xf32>
    tpu.vector_store %arg18[%c0_8, %c9_9, %c0_10], %1 {strides = array<i32>} : memref<10x10x4xf32, #tpu.memory_space<vmem>>, vector<10x1x4xf32>,
    %cst_11 = arith.constant 0.000000e+00 : f32
    %6 = vector.broadcast %cst_11 : f32 to vector<1x10x8xf32>
    %cst_12 = arith.constant 0.000000e+00 : f32
    %7 = vector.broadcast %cst_12 : f32 to vector<10x1x8xf32>
    %c0_13 = arith.constant 0 : index
    %c0_14 = arith.constant 0 : index
    %c0_15 = arith.constant 0 : index
    %8 = vector.load %arg19[%c0_13, %c0_14, %c0_15] : memref<10x10x8xf32, #tpu.memory_space<vmem>>, vector<1x10x8xf32>
    tpu.vector_store %arg19[%c0_13, %c0_14, %c0_15], %6 {strides = array<i32>} : memref<10x10x8xf32, #tpu.memory_space<vmem>>, vector<1x10x8xf32>,
    %c9_16 = arith.constant 9 : index
    %c0_17 = arith.constant 0 : index
    %c0_18 = arith.constant 0 : index
    %9 = vector.load %arg19[%c9_16, %c0_17, %c0_18] : memref<10x10x8xf32, #tpu.memory_space<vmem>>, vector<1x10x8xf32>
    tpu.vector_store %arg19[%c9_16, %c0_17, %c0_18], %6 {strides = array<i32>} : memref<10x10x8xf32, #tpu.memory_space<vmem>>, vector<1x10x8xf32>,
    %c0_19 = arith.constant 0 : index
    %c0_20 = arith.constant 0 : index
    %c0_21 = arith.constant 0 : index
    %10 = vector.load %arg19[%c0_19, %c0_20, %c0_21] : memref<10x10x8xf32, #tpu.memory_space<vmem>>, vector<10x1x8xf32>
    tpu.vector_store %arg19[%c0_19, %c0_20, %c0_21], %7 {strides = array<i32>} : memref<10x10x8xf32, #tpu.memory_space<vmem>>, vector<10x1x8xf32>,
    %c0_22 = arith.constant 0 : index
    %c9_23 = arith.constant 9 : index
    %c0_24 = arith.constant 0 : index
    %11 = vector.load %arg19[%c0_22, %c9_23, %c0_24] : memref<10x10x8xf32, #tpu.memory_space<vmem>>, vector<10x1x8xf32>
    tpu.vector_store %arg19[%c0_22, %c9_23, %c0_24], %7 {strides = array<i32>} : memref<10x10x8xf32, #tpu.memory_space<vmem>>, vector<10x1x8xf32>,
    %c0_25 = arith.constant 0 : index
    %c0_26 = arith.constant 0 : index
    %c0_27 = arith.constant 0 : index
    %c0_28 = arith.constant 0 : index
    %12 = vector.load %arg1[%c0_25, %c0_26, %c0_27, %c0_28] : memref<1x4x64x4xf32, #tpu.memory_space<vmem>>, vector<1x1x64x4xf32>
    %13 = vector.shape_cast %12 : vector<1x1x64x4xf32> to vector<64x4xf32>
    %c0_29 = arith.constant 0 : index
    %c1 = arith.constant 1 : index
    %c0_30 = arith.constant 0 : index
    %c0_31 = arith.constant 0 : index
    %14 = vector.load %arg1[%c0_29, %c1, %c0_30, %c0_31] : memref<1x4x64x4xf32, #tpu.memory_space<vmem>>, vector<1x1x64x4xf32>
    %15 = vector.shape_cast %14 : vector<1x1x64x4xf32> to vector<64x4xf32>
    %16 = arith.maximumf %13, %15 : vector<64x4xf32>
    %c0_32 = arith.constant 0 : index
    %c2 = arith.constant 2 : index
    %c0_33 = arith.constant 0 : index
    %c0_34 = arith.constant 0 : index
    %17 = vector.load %arg1[%c0_32, %c2, %c0_33, %c0_34] : memref<1x4x64x4xf32, #tpu.memory_space<vmem>>, vector<1x1x64x4xf32>
    %18 = vector.shape_cast %17 : vector<1x1x64x4xf32> to vector<64x4xf32>
    %c0_35 = arith.constant 0 : index
    %c3 = arith.constant 3 : index
    %c0_36 = arith.constant 0 : index
    %c0_37 = arith.constant 0 : index
    %19 = vector.load %arg1[%c0_35, %c3, %c0_36, %c0_37] : memref<1x4x64x4xf32, #tpu.memory_space<vmem>>, vector<1x1x64x4xf32>
    %20 = vector.shape_cast %19 : vector<1x1x64x4xf32> to vector<64x4xf32>
    %21 = arith.maximumf %18, %20 : vector<64x4xf32>
    %22 = arith.maximumf %16, %21 : vector<64x4xf32>
    %23 = vector.shape_cast %22 : vector<64x4xf32> to vector<8x8x4xf32>
    %c1_38 = arith.constant 1 : index
    %c1_39 = arith.constant 1 : index
    %c0_40 = arith.constant 0 : index
    %24 = vector.load %arg18[%c1_38, %c1_39, %c0_40] : memref<10x10x4xf32, #tpu.memory_space<vmem>>, vector<8x8x4xf32>
    tpu.vector_store %arg18[%c1_38, %c1_39, %c0_40], %23 {strides = array<i32>} : memref<10x10x4xf32, #tpu.memory_space<vmem>>, vector<8x8x4xf32>,
    %c0_41 = arith.constant 0 : index
    %c0_42 = arith.constant 0 : index
    %c0_43 = arith.constant 0 : index
    %25 = vector.load %arg18[%c0_41, %c0_42, %c0_43] : memref<10x10x4xf32, #tpu.memory_space<vmem>>, vector<8x8x4xf32>
    %26 = vector.shape_cast %25 : vector<8x8x4xf32> to vector<64x4xf32>
    %27 = arith.truncf %26 : vector<64x4xf32> to vector<64x4xbf16>
    %c0_44 = arith.constant 0 : index
    %c0_45 = arith.constant 0 : index
    %c0_46 = arith.constant 0 : index
    %28 = vector.load %arg3[%c0_44, %c0_45, %c0_46] : memref<9x4x4xbf16, #tpu.memory_space<vmem>>, vector<1x4x4xbf16>
    %29 = vector.shape_cast %28 : vector<1x4x4xbf16> to vector<4x4xbf16>
    %cst_47 = arith.constant dense<0.000000e+00> : vector<64x4xf32>
    %30 = tpu.matmul %27, %29, %cst_47 {dimension_numbers = #tpu.dot_dimension_numbers<[1], [0], [0], [1], [0, 0, 1, 1], [], []>} : vector<64x4xbf16>, vector<4x4xbf16>, vector<64x4xf32> -> vector<64x4xf32>
    %c0_48 = arith.constant 0 : index
    %c1_49 = arith.constant 1 : index
    %c0_50 = arith.constant 0 : index
    %31 = vector.load %arg18[%c0_48, %c1_49, %c0_50] : memref<10x10x4xf32, #tpu.memory_space<vmem>>, vector<8x8x4xf32>
    %32 = vector.shape_cast %31 : vector<8x8x4xf32> to vector<64x4xf32>
    %33 = arith.truncf %32 : vector<64x4xf32> to vector<64x4xbf16>
    %c1_51 = arith.constant 1 : index
    %c0_52 = arith.constant 0 : index
    %c0_53 = arith.constant 0 : index
    %34 = vector.load %arg3[%c1_51, %c0_52, %c0_53] : memref<9x4x4xbf16, #tpu.memory_space<vmem>>, vector<1x4x4xbf16>
    %35 = vector.shape_cast %34 : vector<1x4x4xbf16> to vector<4x4xbf16>
    %cst_54 = arith.constant dense<0.000000e+00> : vector<64x4xf32>
    %36 = tpu.matmul %33, %35, %cst_54 {dimension_numbers = #tpu.dot_dimension_numbers<[1], [0], [0], [1], [0, 0, 1, 1], [], []>} : vector<64x4xbf16>, vector<4x4xbf16>, vector<64x4xf32> -> vector<64x4xf32>
    %37 = arith.addf %30, %36 : vector<64x4xf32>
    %c0_55 = arith.constant 0 : index
    %c2_56 = arith.constant 2 : index
    %c0_57 = arith.constant 0 : index
    %38 = vector.load %arg18[%c0_55, %c2_56, %c0_57] : memref<10x10x4xf32, #tpu.memory_space<vmem>>, vector<8x8x4xf32>
    %39 = vector.shape_cast %38 : vector<8x8x4xf32> to vector<64x4xf32>
    %40 = arith.truncf %39 : vector<64x4xf32> to vector<64x4xbf16>
    %c2_58 = arith.constant 2 : index
    %c0_59 = arith.constant 0 : index
    %c0_60 = arith.constant 0 : index
    %41 = vector.load %arg3[%c2_58, %c0_59, %c0_60] : memref<9x4x4xbf16, #tpu.memory_space<vmem>>, vector<1x4x4xbf16>
    %42 = vector.shape_cast %41 : vector<1x4x4xbf16> to vector<4x4xbf16>
    %cst_61 = arith.constant dense<0.000000e+00> : vector<64x4xf32>
    %43 = tpu.matmul %40, %42, %cst_61 {dimension_numbers = #tpu.dot_dimension_numbers<[1], [0], [0], [1], [0, 0, 1, 1], [], []>} : vector<64x4xbf16>, vector<4x4xbf16>, vector<64x4xf32> -> vector<64x4xf32>
    %44 = arith.addf %37, %43 : vector<64x4xf32>
    %c1_62 = arith.constant 1 : index
    %c0_63 = arith.constant 0 : index
    %c0_64 = arith.constant 0 : index
    %45 = vector.load %arg18[%c1_62, %c0_63, %c0_64] : memref<10x10x4xf32, #tpu.memory_space<vmem>>, vector<8x8x4xf32>
    %46 = vector.shape_cast %45 : vector<8x8x4xf32> to vector<64x4xf32>
    %47 = arith.truncf %46 : vector<64x4xf32> to vector<64x4xbf16>
    %c3_65 = arith.constant 3 : index
    %c0_66 = arith.constant 0 : index
    %c0_67 = arith.constant 0 : index
    %48 = vector.load %arg3[%c3_65, %c0_66, %c0_67] : memref<9x4x4xbf16, #tpu.memory_space<vmem>>, vector<1x4x4xbf16>
    %49 = vector.shape_cast %48 : vector<1x4x4xbf16> to vector<4x4xbf16>
    %cst_68 = arith.constant dense<0.000000e+00> : vector<64x4xf32>
    %50 = tpu.matmul %47, %49, %cst_68 {dimension_numbers = #tpu.dot_dimension_numbers<[1], [0], [0], [1], [0, 0, 1, 1], [], []>} : vector<64x4xbf16>, vector<4x4xbf16>, vector<64x4xf32> -> vector<64x4xf32>
    %51 = arith.addf %44, %50 : vector<64x4xf32>
    %c1_69 = arith.constant 1 : index
    %c1_70 = arith.constant 1 : index
    %c0_71 = arith.constant 0 : index
    %52 = vector.load %arg18[%c1_69, %c1_70, %c0_71] : memref<10x10x4xf32, #tpu.memory_space<vmem>>, vector<8x8x4xf32>
    %53 = vector.shape_cast %52 : vector<8x8x4xf32> to vector<64x4xf32>
    %54 = arith.truncf %53 : vector<64x4xf32> to vector<64x4xbf16>
    %c4 = arith.constant 4 : index
    %c0_72 = arith.constant 0 : index
    %c0_73 = arith.constant 0 : index
    %55 = vector.load %arg3[%c4, %c0_72, %c0_73] : memref<9x4x4xbf16, #tpu.memory_space<vmem>>, vector<1x4x4xbf16>
    %56 = vector.shape_cast %55 : vector<1x4x4xbf16> to vector<4x4xbf16>
    %cst_74 = arith.constant dense<0.000000e+00> : vector<64x4xf32>
    %57 = tpu.matmul %54, %56, %cst_74 {dimension_numbers = #tpu.dot_dimension_numbers<[1], [0], [0], [1], [0, 0, 1, 1], [], []>} : vector<64x4xbf16>, vector<4x4xbf16>, vector<64x4xf32> -> vector<64x4xf32>
    %58 = arith.addf %51, %57 : vector<64x4xf32>
    %c1_75 = arith.constant 1 : index
    %c2_76 = arith.constant 2 : index
    %c0_77 = arith.constant 0 : index
    %59 = vector.load %arg18[%c1_75, %c2_76, %c0_77] : memref<10x10x4xf32, #tpu.memory_space<vmem>>, vector<8x8x4xf32>
    %60 = vector.shape_cast %59 : vector<8x8x4xf32> to vector<64x4xf32>
    %61 = arith.truncf %60 : vector<64x4xf32> to vector<64x4xbf16>
    %c5 = arith.constant 5 : index
    %c0_78 = arith.constant 0 : index
    %c0_79 = arith.constant 0 : index
    %62 = vector.load %arg3[%c5, %c0_78, %c0_79] : memref<9x4x4xbf16, #tpu.memory_space<vmem>>, vector<1x4x4xbf16>
    %63 = vector.shape_cast %62 : vector<1x4x4xbf16> to vector<4x4xbf16>
    %cst_80 = arith.constant dense<0.000000e+00> : vector<64x4xf32>
    %64 = tpu.matmul %61, %63, %cst_80 {dimension_numbers = #tpu.dot_dimension_numbers<[1], [0], [0], [1], [0, 0, 1, 1], [], []>} : vector<64x4xbf16>, vector<4x4xbf16>, vector<64x4xf32> -> vector<64x4xf32>
    %65 = arith.addf %58, %64 : vector<64x4xf32>
    %c2_81 = arith.constant 2 : index
    %c0_82 = arith.constant 0 : index
    %c0_83 = arith.constant 0 : index
    %66 = vector.load %arg18[%c2_81, %c0_82, %c0_83] : memref<10x10x4xf32, #tpu.memory_space<vmem>>, vector<8x8x4xf32>
    %67 = vector.shape_cast %66 : vector<8x8x4xf32> to vector<64x4xf32>
    %68 = arith.truncf %67 : vector<64x4xf32> to vector<64x4xbf16>
    %c6 = arith.constant 6 : index
    %c0_84 = arith.constant 0 : index
    %c0_85 = arith.constant 0 : index
    %69 = vector.load %arg3[%c6, %c0_84, %c0_85] : memref<9x4x4xbf16, #tpu.memory_space<vmem>>, vector<1x4x4xbf16>
    %70 = vector.shape_cast %69 : vector<1x4x4xbf16> to vector<4x4xbf16>
    %cst_86 = arith.constant dense<0.000000e+00> : vector<64x4xf32>
    %71 = tpu.matmul %68, %70, %cst_86 {dimension_numbers = #tpu.dot_dimension_numbers<[1], [0], [0], [1], [0, 0, 1, 1], [], []>} : vector<64x4xbf16>, vector<4x4xbf16>, vector<64x4xf32> -> vector<64x4xf32>
    %72 = arith.addf %65, %71 : vector<64x4xf32>
    %c2_87 = arith.constant 2 : index
    %c1_88 = arith.constant 1 : index
    %c0_89 = arith.constant 0 : index
    %73 = vector.load %arg18[%c2_87, %c1_88, %c0_89] : memref<10x10x4xf32, #tpu.memory_space<vmem>>, vector<8x8x4xf32>
    %74 = vector.shape_cast %73 : vector<8x8x4xf32> to vector<64x4xf32>
    %75 = arith.truncf %74 : vector<64x4xf32> to vector<64x4xbf16>
    %c7 = arith.constant 7 : index
    %c0_90 = arith.constant 0 : index
    %c0_91 = arith.constant 0 : index
    %76 = vector.load %arg3[%c7, %c0_90, %c0_91] : memref<9x4x4xbf16, #tpu.memory_space<vmem>>, vector<1x4x4xbf16>
    %77 = vector.shape_cast %76 : vector<1x4x4xbf16> to vector<4x4xbf16>
    %cst_92 = arith.constant dense<0.000000e+00> : vector<64x4xf32>
    %78 = tpu.matmul %75, %77, %cst_92 {dimension_numbers = #tpu.dot_dimension_numbers<[1], [0], [0], [1], [0, 0, 1, 1], [], []>} : vector<64x4xbf16>, vector<4x4xbf16>, vector<64x4xf32> -> vector<64x4xf32>
    %79 = arith.addf %72, %78 : vector<64x4xf32>
    %c2_93 = arith.constant 2 : index
    %c2_94 = arith.constant 2 : index
    %c0_95 = arith.constant 0 : index
    %80 = vector.load %arg18[%c2_93, %c2_94, %c0_95] : memref<10x10x4xf32, #tpu.memory_space<vmem>>, vector<8x8x4xf32>
    %81 = vector.shape_cast %80 : vector<8x8x4xf32> to vector<64x4xf32>
    %82 = arith.truncf %81 : vector<64x4xf32> to vector<64x4xbf16>
    %c8 = arith.constant 8 : index
    %c0_96 = arith.constant 0 : index
    %c0_97 = arith.constant 0 : index
    %83 = vector.load %arg3[%c8, %c0_96, %c0_97] : memref<9x4x4xbf16, #tpu.memory_space<vmem>>, vector<1x4x4xbf16>
    %84 = vector.shape_cast %83 : vector<1x4x4xbf16> to vector<4x4xbf16>
    %cst_98 = arith.constant dense<0.000000e+00> : vector<64x4xf32>
    %85 = tpu.matmul %82, %84, %cst_98 {dimension_numbers = #tpu.dot_dimension_numbers<[1], [0], [0], [1], [0, 0, 1, 1], [], []>} : vector<64x4xbf16>, vector<4x4xbf16>, vector<64x4xf32> -> vector<64x4xf32>
    %86 = arith.addf %79, %85 : vector<64x4xf32>
    %87 = vector.shape_cast %86 : vector<64x4xf32> to vector<1x64x4xf32>
    %cst_99 = arith.constant dense<0.000000e+00> : vector<1xf32>
    %88 = vector.multi_reduction <add>, %87, %cst_99 [1, 2] : vector<1x64x4xf32> to vector<1xf32>
    %89 = vector.shape_cast %88 : vector<1xf32> to vector<1x1x1xf32>
    %90 = vector.extract %89[0, 0, 0] : f32 from vector<1x1x1xf32>
    %cst_100 = arith.constant 2.560000e+02 : f32
    %91 = arith.divf %90, %cst_100 : f32
    %92 = arith.mulf %86, %86 : vector<64x4xf32>
    %93 = vector.shape_cast %92 : vector<64x4xf32> to vector<1x64x4xf32>
    %cst_101 = arith.constant dense<0.000000e+00> : vector<1xf32>
    %94 = vector.multi_reduction <add>, %93, %cst_101 [1, 2] : vector<1x64x4xf32> to vector<1xf32>
    %95 = vector.shape_cast %94 : vector<1xf32> to vector<1x1x1xf32>
    %96 = vector.extract %95[0, 0, 0] : f32 from vector<1x1x1xf32>
    %cst_102 = arith.constant 2.560000e+02 : f32
    %97 = arith.divf %96, %cst_102 : f32
    %98 = arith.mulf %91, %91 : f32
    %99 = arith.subf %97, %98 : f32
    %cst_103 = arith.constant 0.000000e+00 : f32
    %100 = arith.maximumf %99, %cst_103 : f32
    %101 = vector.broadcast %91 : f32 to vector<64x4xf32>
    %102 = arith.subf %86, %101 : vector<64x4xf32>
    %cst_104 = arith.constant 9.99999974E-6 : f32
    %103 = arith.addf %100, %cst_104 : f32
    %104 = math.rsqrt %103 : f32
    %105 = vector.broadcast %104 : f32 to vector<64x4xf32>
    %106 = arith.mulf %102, %105 : vector<64x4xf32>
    %c0_105 = arith.constant 0 : index
    %c0_106 = arith.constant 0 : index
    %107 = vector.load %arg4[%c0_105, %c0_106] : memref<1x4xf32, #tpu.memory_space<vmem>>, vector<1x4xf32>
    %108 = vector.broadcast %107 : vector<1x4xf32> to vector<64x4xf32>
    %109 = arith.mulf %106, %108 : vector<64x4xf32>
    %c0_107 = arith.constant 0 : index
    %c0_108 = arith.constant 0 : index
    %110 = vector.load %arg5[%c0_107, %c0_108] : memref<1x4xf32, #tpu.memory_space<vmem>>, vector<1x4xf32>
    %111 = vector.broadcast %110 : vector<1x4xf32> to vector<64x4xf32>
    %112 = arith.addf %109, %111 : vector<64x4xf32>
    %cst_109 = arith.constant 5.000000e-01 : f32
    %113 = vector.broadcast %cst_109 : f32 to vector<64x4xf32>
    %114 = arith.mulf %113, %112 : vector<64x4xf32>
    %cst_110 = arith.constant 0.707106769 : f32
    %115 = vector.broadcast %cst_110 : f32 to vector<64x4xf32>
    %116 = arith.mulf %112, %115 : vector<64x4xf32>
    %117 = math.erf %116 : vector<64x4xf32>
    %cst_111 = arith.constant 1.000000e+00 : f32
    %118 = vector.broadcast %cst_111 : f32 to vector<64x4xf32>
    %119 = arith.addf %118, %117 : vector<64x4xf32>
    %120 = arith.mulf %114, %119 : vector<64x4xf32>
    %121 = vector.shape_cast %120 : vector<64x4xf32> to vector<8x8x4xf32>
    %c1_112 = arith.constant 1 : index
    %c1_113 = arith.constant 1 : index
    %c0_114 = arith.constant 0 : index
    %122 = vector.load %arg18[%c1_112, %c1_113, %c0_114] : memref<10x10x4xf32, #tpu.memory_space<vmem>>, vector<8x8x4xf32>
    tpu.vector_store %arg18[%c1_112, %c1_113, %c0_114], %121 {strides = array<i32>} : memref<10x10x4xf32, #tpu.memory_space<vmem>>, vector<8x8x4xf32>,
    %c0_115 = arith.constant 0 : index
    %c0_116 = arith.constant 0 : index
    %c0_117 = arith.constant 0 : index
    %123 = vector.load %arg18[%c0_115, %c0_116, %c0_117] : memref<10x10x4xf32, #tpu.memory_space<vmem>>, vector<8x8x4xf32>
    %124 = vector.shape_cast %123 : vector<8x8x4xf32> to vector<64x4xf32>
    %125 = arith.truncf %124 : vector<64x4xf32> to vector<64x4xbf16>
    %c0_118 = arith.constant 0 : index
    %c0_119 = arith.constant 0 : index
    %c0_120 = arith.constant 0 : index
    %126 = vector.load %arg6[%c0_118, %c0_119, %c0_120] : memref<9x4x4xbf16, #tpu.memory_space<vmem>>, vector<1x4x4xbf16>
    %127 = vector.shape_cast %126 : vector<1x4x4xbf16> to vector<4x4xbf16>
    %cst_121 = arith.constant dense<0.000000e+00> : vector<64x4xf32>
    %128 = tpu.matmul %125, %127, %cst_121 {dimension_numbers = #tpu.dot_dimension_numbers<[1], [0], [0], [1], [0, 0, 1, 1], [], []>} : vector<64x4xbf16>, vector<4x4xbf16>, vector<64x4xf32> -> vector<64x4xf32>
    %c0_122 = arith.constant 0 : index
    %c1_123 = arith.constant 1 : index
    %c0_124 = arith.constant 0 : index
    %129 = vector.load %arg18[%c0_122, %c1_123, %c0_124] : memref<10x10x4xf32, #tpu.memory_space<vmem>>, vector<8x8x4xf32>
    %130 = vector.shape_cast %129 : vector<8x8x4xf32> to vector<64x4xf32>
    %131 = arith.truncf %130 : vector<64x4xf32> to vector<64x4xbf16>
    %c1_125 = arith.constant 1 : index
    %c0_126 = arith.constant 0 : index
    %c0_127 = arith.constant 0 : index
    %132 = vector.load %arg6[%c1_125, %c0_126, %c0_127] : memref<9x4x4xbf16, #tpu.memory_space<vmem>>, vector<1x4x4xbf16>
    %133 = vector.shape_cast %132 : vector<1x4x4xbf16> to vector<4x4xbf16>
    %cst_128 = arith.constant dense<0.000000e+00> : vector<64x4xf32>
    %134 = tpu.matmul %131, %133, %cst_128 {dimension_numbers = #tpu.dot_dimension_numbers<[1], [0], [0], [1], [0, 0, 1, 1], [], []>} : vector<64x4xbf16>, vector<4x4xbf16>, vector<64x4xf32> -> vector<64x4xf32>
    %135 = arith.addf %128, %134 : vector<64x4xf32>
    %c0_129 = arith.constant 0 : index
    %c2_130 = arith.constant 2 : index
    %c0_131 = arith.constant 0 : index
    %136 = vector.load %arg18[%c0_129, %c2_130, %c0_131] : memref<10x10x4xf32, #tpu.memory_space<vmem>>, vector<8x8x4xf32>
    %137 = vector.shape_cast %136 : vector<8x8x4xf32> to vector<64x4xf32>
    %138 = arith.truncf %137 : vector<64x4xf32> to vector<64x4xbf16>
    %c2_132 = arith.constant 2 : index
    %c0_133 = arith.constant 0 : index
    %c0_134 = arith.constant 0 : index
    %139 = vector.load %arg6[%c2_132, %c0_133, %c0_134] : memref<9x4x4xbf16, #tpu.memory_space<vmem>>, vector<1x4x4xbf16>
    %140 = vector.shape_cast %139 : vector<1x4x4xbf16> to vector<4x4xbf16>
    %cst_135 = arith.constant dense<0.000000e+00> : vector<64x4xf32>
    %141 = tpu.matmul %138, %140, %cst_135 {dimension_numbers = #tpu.dot_dimension_numbers<[1], [0], [0], [1], [0, 0, 1, 1], [], []>} : vector<64x4xbf16>, vector<4x4xbf16>, vector<64x4xf32> -> vector<64x4xf32>
    %142 = arith.addf %135, %141 : vector<64x4xf32>
    %c1_136 = arith.constant 1 : index
    %c0_137 = arith.constant 0 : index
    %c0_138 = arith.constant 0 : index
    %143 = vector.load %arg18[%c1_136, %c0_137, %c0_138] : memref<10x10x4xf32, #tpu.memory_space<vmem>>, vector<8x8x4xf32>
    %144 = vector.shape_cast %143 : vector<8x8x4xf32> to vector<64x4xf32>
    %145 = arith.truncf %144 : vector<64x4xf32> to vector<64x4xbf16>
    %c3_139 = arith.constant 3 : index
    %c0_140 = arith.constant 0 : index
    %c0_141 = arith.constant 0 : index
    %146 = vector.load %arg6[%c3_139, %c0_140, %c0_141] : memref<9x4x4xbf16, #tpu.memory_space<vmem>>, vector<1x4x4xbf16>
    %147 = vector.shape_cast %146 : vector<1x4x4xbf16> to vector<4x4xbf16>
    %cst_142 = arith.constant dense<0.000000e+00> : vector<64x4xf32>
    %148 = tpu.matmul %145, %147, %cst_142 {dimension_numbers = #tpu.dot_dimension_numbers<[1], [0], [0], [1], [0, 0, 1, 1], [], []>} : vector<64x4xbf16>, vector<4x4xbf16>, vector<64x4xf32> -> vector<64x4xf32>
    %149 = arith.addf %142, %148 : vector<64x4xf32>
    %c1_143 = arith.constant 1 : index
    %c1_144 = arith.constant 1 : index
    %c0_145 = arith.constant 0 : index
    %150 = vector.load %arg18[%c1_143, %c1_144, %c0_145] : memref<10x10x4xf32, #tpu.memory_space<vmem>>, vector<8x8x4xf32>
    %151 = vector.shape_cast %150 : vector<8x8x4xf32> to vector<64x4xf32>
    %152 = arith.truncf %151 : vector<64x4xf32> to vector<64x4xbf16>
    %c4_146 = arith.constant 4 : index
    %c0_147 = arith.constant 0 : index
    %c0_148 = arith.constant 0 : index
    %153 = vector.load %arg6[%c4_146, %c0_147, %c0_148] : memref<9x4x4xbf16, #tpu.memory_space<vmem>>, vector<1x4x4xbf16>
    %154 = vector.shape_cast %153 : vector<1x4x4xbf16> to vector<4x4xbf16>
    %cst_149 = arith.constant dense<0.000000e+00> : vector<64x4xf32>
    %155 = tpu.matmul %152, %154, %cst_149 {dimension_numbers = #tpu.dot_dimension_numbers<[1], [0], [0], [1], [0, 0, 1, 1], [], []>} : vector<64x4xbf16>, vector<4x4xbf16>, vector<64x4xf32> -> vector<64x4xf32>
    %156 = arith.addf %149, %155 : vector<64x4xf32>
    %c1_150 = arith.constant 1 : index
    %c2_151 = arith.constant 2 : index
    %c0_152 = arith.constant 0 : index
    %157 = vector.load %arg18[%c1_150, %c2_151, %c0_152] : memref<10x10x4xf32, #tpu.memory_space<vmem>>, vector<8x8x4xf32>
    %158 = vector.shape_cast %157 : vector<8x8x4xf32> to vector<64x4xf32>
    %159 = arith.truncf %158 : vector<64x4xf32> to vector<64x4xbf16>
    %c5_153 = arith.constant 5 : index
    %c0_154 = arith.constant 0 : index
    %c0_155 = arith.constant 0 : index
    %160 = vector.load %arg6[%c5_153, %c0_154, %c0_155] : memref<9x4x4xbf16, #tpu.memory_space<vmem>>, vector<1x4x4xbf16>
    %161 = vector.shape_cast %160 : vector<1x4x4xbf16> to vector<4x4xbf16>
    %cst_156 = arith.constant dense<0.000000e+00> : vector<64x4xf32>
    %162 = tpu.matmul %159, %161, %cst_156 {dimension_numbers = #tpu.dot_dimension_numbers<[1], [0], [0], [1], [0, 0, 1, 1], [], []>} : vector<64x4xbf16>, vector<4x4xbf16>, vector<64x4xf32> -> vector<64x4xf32>
    %163 = arith.addf %156, %162 : vector<64x4xf32>
    %c2_157 = arith.constant 2 : index
    %c0_158 = arith.constant 0 : index
    %c0_159 = arith.constant 0 : index
    %164 = vector.load %arg18[%c2_157, %c0_158, %c0_159] : memref<10x10x4xf32, #tpu.memory_space<vmem>>, vector<8x8x4xf32>
    %165 = vector.shape_cast %164 : vector<8x8x4xf32> to vector<64x4xf32>
    %166 = arith.truncf %165 : vector<64x4xf32> to vector<64x4xbf16>
    %c6_160 = arith.constant 6 : index
    %c0_161 = arith.constant 0 : index
    %c0_162 = arith.constant 0 : index
    %167 = vector.load %arg6[%c6_160, %c0_161, %c0_162] : memref<9x4x4xbf16, #tpu.memory_space<vmem>>, vector<1x4x4xbf16>
    %168 = vector.shape_cast %167 : vector<1x4x4xbf16> to vector<4x4xbf16>
    %cst_163 = arith.constant dense<0.000000e+00> : vector<64x4xf32>
    %169 = tpu.matmul %166, %168, %cst_163 {dimension_numbers = #tpu.dot_dimension_numbers<[1], [0], [0], [1], [0, 0, 1, 1], [], []>} : vector<64x4xbf16>, vector<4x4xbf16>, vector<64x4xf32> -> vector<64x4xf32>
    %170 = arith.addf %163, %169 : vector<64x4xf32>
    %c2_164 = arith.constant 2 : index
    %c1_165 = arith.constant 1 : index
    %c0_166 = arith.constant 0 : index
    %171 = vector.load %arg18[%c2_164, %c1_165, %c0_166] : memref<10x10x4xf32, #tpu.memory_space<vmem>>, vector<8x8x4xf32>
    %172 = vector.shape_cast %171 : vector<8x8x4xf32> to vector<64x4xf32>
    %173 = arith.truncf %172 : vector<64x4xf32> to vector<64x4xbf16>
    %c7_167 = arith.constant 7 : index
    %c0_168 = arith.constant 0 : index
    %c0_169 = arith.constant 0 : index
    %174 = vector.load %arg6[%c7_167, %c0_168, %c0_169] : memref<9x4x4xbf16, #tpu.memory_space<vmem>>, vector<1x4x4xbf16>
    %175 = vector.shape_cast %174 : vector<1x4x4xbf16> to vector<4x4xbf16>
    %cst_170 = arith.constant dense<0.000000e+00> : vector<64x4xf32>
    %176 = tpu.matmul %173, %175, %cst_170 {dimension_numbers = #tpu.dot_dimension_numbers<[1], [0], [0], [1], [0, 0, 1, 1], [], []>} : vector<64x4xbf16>, vector<4x4xbf16>, vector<64x4xf32> -> vector<64x4xf32>
    %177 = arith.addf %170, %176 : vector<64x4xf32>
    %c2_171 = arith.constant 2 : index
    %c2_172 = arith.constant 2 : index
    %c0_173 = arith.constant 0 : index
    %178 = vector.load %arg18[%c2_171, %c2_172, %c0_173] : memref<10x10x4xf32, #tpu.memory_space<vmem>>, vector<8x8x4xf32>
    %179 = vector.shape_cast %178 : vector<8x8x4xf32> to vector<64x4xf32>
    %180 = arith.truncf %179 : vector<64x4xf32> to vector<64x4xbf16>
    %c8_174 = arith.constant 8 : index
    %c0_175 = arith.constant 0 : index
    %c0_176 = arith.constant 0 : index
    %181 = vector.load %arg6[%c8_174, %c0_175, %c0_176] : memref<9x4x4xbf16, #tpu.memory_space<vmem>>, vector<1x4x4xbf16>
    %182 = vector.shape_cast %181 : vector<1x4x4xbf16> to vector<4x4xbf16>
    %cst_177 = arith.constant dense<0.000000e+00> : vector<64x4xf32>
    %183 = tpu.matmul %180, %182, %cst_177 {dimension_numbers = #tpu.dot_dimension_numbers<[1], [0], [0], [1], [0, 0, 1, 1], [], []>} : vector<64x4xbf16>, vector<4x4xbf16>, vector<64x4xf32> -> vector<64x4xf32>
    %184 = arith.addf %177, %183 : vector<64x4xf32>
    %185 = vector.shape_cast %184 : vector<64x4xf32> to vector<1x64x4xf32>
    %cst_178 = arith.constant dense<0.000000e+00> : vector<1xf32>
    %186 = vector.multi_reduction <add>, %185, %cst_178 [1, 2] : vector<1x64x4xf32> to vector<1xf32>
    %187 = vector.shape_cast %186 : vector<1xf32> to vector<1x1x1xf32>
    %188 = vector.extract %187[0, 0, 0] : f32 from vector<1x1x1xf32>
    %cst_179 = arith.constant 2.560000e+02 : f32
    %189 = arith.divf %188, %cst_179 : f32
    %190 = arith.mulf %184, %184 : vector<64x4xf32>
    %191 = vector.shape_cast %190 : vector<64x4xf32> to vector<1x64x4xf32>
    %cst_180 = arith.constant dense<0.000000e+00> : vector<1xf32>
    %192 = vector.multi_reduction <add>, %191, %cst_180 [1, 2] : vector<1x64x4xf32> to vector<1xf32>
    %193 = vector.shape_cast %192 : vector<1xf32> to vector<1x1x1xf32>
    %194 = vector.extract %193[0, 0, 0] : f32 from vector<1x1x1xf32>
    %cst_181 = arith.constant 2.560000e+02 : f32
    %195 = arith.divf %194, %cst_181 : f32
    %196 = arith.mulf %189, %189 : f32
    %197 = arith.subf %195, %196 : f32
    %cst_182 = arith.constant 0.000000e+00 : f32
    %198 = arith.maximumf %197, %cst_182 : f32
    %199 = vector.broadcast %189 : f32 to vector<64x4xf32>
    %200 = arith.subf %184, %199 : vector<64x4xf32>
    %cst_183 = arith.constant 9.99999974E-6 : f32
    %201 = arith.addf %198, %cst_183 : f32
    %202 = math.rsqrt %201 : f32
    %203 = vector.broadcast %202 : f32 to vector<64x4xf32>
    %204 = arith.mulf %200, %203 : vector<64x4xf32>
    %c0_184 = arith.constant 0 : index
    %c0_185 = arith.constant 0 : index
    %205 = vector.load %arg7[%c0_184, %c0_185] : memref<1x4xf32, #tpu.memory_space<vmem>>, vector<1x4xf32>
    %206 = vector.broadcast %205 : vector<1x4xf32> to vector<64x4xf32>
    %207 = arith.mulf %204, %206 : vector<64x4xf32>
    %c0_186 = arith.constant 0 : index
    %c0_187 = arith.constant 0 : index
    %208 = vector.load %arg8[%c0_186, %c0_187] : memref<1x4xf32, #tpu.memory_space<vmem>>, vector<1x4xf32>
    %209 = vector.broadcast %208 : vector<1x4xf32> to vector<64x4xf32>
    %210 = arith.addf %207, %209 : vector<64x4xf32>
    %211 = arith.addf %22, %210 : vector<64x4xf32>
    %cst_188 = arith.constant 5.000000e-01 : f32
    %212 = vector.broadcast %cst_188 : f32 to vector<64x4xf32>
    %213 = arith.mulf %212, %211 : vector<64x4xf32>
    %cst_189 = arith.constant 0.707106769 : f32
    %214 = vector.broadcast %cst_189 : f32 to vector<64x4xf32>
    %215 = arith.mulf %211, %214 : vector<64x4xf32>
    %216 = math.erf %215 : vector<64x4xf32>
    %cst_190 = arith.constant 1.000000e+00 : f32
    %217 = vector.broadcast %cst_190 : f32 to vector<64x4xf32>
    %218 = arith.addf %217, %216 : vector<64x4xf32>
    %219 = arith.mulf %213, %218 : vector<64x4xf32>
    %220 = vector.shape_cast %219 : vector<64x4xf32> to vector<8x8x4xf32>
    %c1_191 = arith.constant 1 : index
    %c1_192 = arith.constant 1 : index
    %c0_193 = arith.constant 0 : index
    %221 = vector.load %arg18[%c1_191, %c1_192, %c0_193] : memref<10x10x4xf32, #tpu.memory_space<vmem>>, vector<8x8x4xf32>
    tpu.vector_store %arg18[%c1_191, %c1_192, %c0_193], %220 {strides = array<i32>} : memref<10x10x4xf32, #tpu.memory_space<vmem>>, vector<8x8x4xf32>,
    %c0_194 = arith.constant 0 : index
    %c0_195 = arith.constant 0 : index
    %c0_196 = arith.constant 0 : index
    %222 = vector.load %arg18[%c0_194, %c0_195, %c0_196] : memref<10x10x4xf32, #tpu.memory_space<vmem>>, vector<8x8x4xf32>
    %223 = vector.shape_cast %222 : vector<8x8x4xf32> to vector<64x4xf32>
    %224 = arith.truncf %223 : vector<64x4xf32> to vector<64x4xbf16>
    %c0_197 = arith.constant 0 : index
    %c0_198 = arith.constant 0 : index
    %c0_199 = arith.constant 0 : index
    %225 = vector.load %arg9[%c0_197, %c0_198, %c0_199] : memref<9x4x8xbf16, #tpu.memory_space<vmem>>, vector<1x4x8xbf16>
    %226 = vector.shape_cast %225 : vector<1x4x8xbf16> to vector<4x8xbf16>
    %cst_200 = arith.constant dense<0.000000e+00> : vector<64x8xf32>
    %227 = tpu.matmul %224, %226, %cst_200 {dimension_numbers = #tpu.dot_dimension_numbers<[1], [0], [0], [1], [0, 0, 1, 1], [], []>} : vector<64x4xbf16>, vector<4x8xbf16>, vector<64x8xf32> -> vector<64x8xf32>
    %c0_201 = arith.constant 0 : index
    %c1_202 = arith.constant 1 : index
    %c0_203 = arith.constant 0 : index
    %228 = vector.load %arg18[%c0_201, %c1_202, %c0_203] : memref<10x10x4xf32, #tpu.memory_space<vmem>>, vector<8x8x4xf32>
    %229 = vector.shape_cast %228 : vector<8x8x4xf32> to vector<64x4xf32>
    %230 = arith.truncf %229 : vector<64x4xf32> to vector<64x4xbf16>
    %c1_204 = arith.constant 1 : index
    %c0_205 = arith.constant 0 : index
    %c0_206 = arith.constant 0 : index
    %231 = vector.load %arg9[%c1_204, %c0_205, %c0_206] : memref<9x4x8xbf16, #tpu.memory_space<vmem>>, vector<1x4x8xbf16>
    %232 = vector.shape_cast %231 : vector<1x4x8xbf16> to vector<4x8xbf16>
    %cst_207 = arith.constant dense<0.000000e+00> : vector<64x8xf32>
    %233 = tpu.matmul %230, %232, %cst_207 {dimension_numbers = #tpu.dot_dimension_numbers<[1], [0], [0], [1], [0, 0, 1, 1], [], []>} : vector<64x4xbf16>, vector<4x8xbf16>, vector<64x8xf32> -> vector<64x8xf32>
    %234 = arith.addf %227, %233 : vector<64x8xf32>
    %c0_208 = arith.constant 0 : index
    %c2_209 = arith.constant 2 : index
    %c0_210 = arith.constant 0 : index
    %235 = vector.load %arg18[%c0_208, %c2_209, %c0_210] : memref<10x10x4xf32, #tpu.memory_space<vmem>>, vector<8x8x4xf32>
    %236 = vector.shape_cast %235 : vector<8x8x4xf32> to vector<64x4xf32>
    %237 = arith.truncf %236 : vector<64x4xf32> to vector<64x4xbf16>
    %c2_211 = arith.constant 2 : index
    %c0_212 = arith.constant 0 : index
    %c0_213 = arith.constant 0 : index
    %238 = vector.load %arg9[%c2_211, %c0_212, %c0_213] : memref<9x4x8xbf16, #tpu.memory_space<vmem>>, vector<1x4x8xbf16>
    %239 = vector.shape_cast %238 : vector<1x4x8xbf16> to vector<4x8xbf16>
    %cst_214 = arith.constant dense<0.000000e+00> : vector<64x8xf32>
    %240 = tpu.matmul %237, %239, %cst_214 {dimension_numbers = #tpu.dot_dimension_numbers<[1], [0], [0], [1], [0, 0, 1, 1], [], []>} : vector<64x4xbf16>, vector<4x8xbf16>, vector<64x8xf32> -> vector<64x8xf32>
    %241 = arith.addf %234, %240 : vector<64x8xf32>
    %c1_215 = arith.constant 1 : index
    %c0_216 = arith.constant 0 : index
    %c0_217 = arith.constant 0 : index
    %242 = vector.load %arg18[%c1_215, %c0_216, %c0_217] : memref<10x10x4xf32, #tpu.memory_space<vmem>>, vector<8x8x4xf32>
    %243 = vector.shape_cast %242 : vector<8x8x4xf32> to vector<64x4xf32>
    %244 = arith.truncf %243 : vector<64x4xf32> to vector<64x4xbf16>
    %c3_218 = arith.constant 3 : index
    %c0_219 = arith.constant 0 : index
    %c0_220 = arith.constant 0 : index
    %245 = vector.load %arg9[%c3_218, %c0_219, %c0_220] : memref<9x4x8xbf16, #tpu.memory_space<vmem>>, vector<1x4x8xbf16>
    %246 = vector.shape_cast %245 : vector<1x4x8xbf16> to vector<4x8xbf16>
    %cst_221 = arith.constant dense<0.000000e+00> : vector<64x8xf32>
    %247 = tpu.matmul %244, %246, %cst_221 {dimension_numbers = #tpu.dot_dimension_numbers<[1], [0], [0], [1], [0, 0, 1, 1], [], []>} : vector<64x4xbf16>, vector<4x8xbf16>, vector<64x8xf32> -> vector<64x8xf32>
    %248 = arith.addf %241, %247 : vector<64x8xf32>
    %c1_222 = arith.constant 1 : index
    %c1_223 = arith.constant 1 : index
    %c0_224 = arith.constant 0 : index
    %249 = vector.load %arg18[%c1_222, %c1_223, %c0_224] : memref<10x10x4xf32, #tpu.memory_space<vmem>>, vector<8x8x4xf32>
    %250 = vector.shape_cast %249 : vector<8x8x4xf32> to vector<64x4xf32>
    %251 = arith.truncf %250 : vector<64x4xf32> to vector<64x4xbf16>
    %c4_225 = arith.constant 4 : index
    %c0_226 = arith.constant 0 : index
    %c0_227 = arith.constant 0 : index
    %252 = vector.load %arg9[%c4_225, %c0_226, %c0_227] : memref<9x4x8xbf16, #tpu.memory_space<vmem>>, vector<1x4x8xbf16>
    %253 = vector.shape_cast %252 : vector<1x4x8xbf16> to vector<4x8xbf16>
    %cst_228 = arith.constant dense<0.000000e+00> : vector<64x8xf32>
    %254 = tpu.matmul %251, %253, %cst_228 {dimension_numbers = #tpu.dot_dimension_numbers<[1], [0], [0], [1], [0, 0, 1, 1], [], []>} : vector<64x4xbf16>, vector<4x8xbf16>, vector<64x8xf32> -> vector<64x8xf32>
    %255 = arith.addf %248, %254 : vector<64x8xf32>
    %c1_229 = arith.constant 1 : index
    %c2_230 = arith.constant 2 : index
    %c0_231 = arith.constant 0 : index
    %256 = vector.load %arg18[%c1_229, %c2_230, %c0_231] : memref<10x10x4xf32, #tpu.memory_space<vmem>>, vector<8x8x4xf32>
    %257 = vector.shape_cast %256 : vector<8x8x4xf32> to vector<64x4xf32>
    %258 = arith.truncf %257 : vector<64x4xf32> to vector<64x4xbf16>
    %c5_232 = arith.constant 5 : index
    %c0_233 = arith.constant 0 : index
    %c0_234 = arith.constant 0 : index
    %259 = vector.load %arg9[%c5_232, %c0_233, %c0_234] : memref<9x4x8xbf16, #tpu.memory_space<vmem>>, vector<1x4x8xbf16>
    %260 = vector.shape_cast %259 : vector<1x4x8xbf16> to vector<4x8xbf16>
    %cst_235 = arith.constant dense<0.000000e+00> : vector<64x8xf32>
    %261 = tpu.matmul %258, %260, %cst_235 {dimension_numbers = #tpu.dot_dimension_numbers<[1], [0], [0], [1], [0, 0, 1, 1], [], []>} : vector<64x4xbf16>, vector<4x8xbf16>, vector<64x8xf32> -> vector<64x8xf32>
    %262 = arith.addf %255, %261 : vector<64x8xf32>
    %c2_236 = arith.constant 2 : index
    %c0_237 = arith.constant 0 : index
    %c0_238 = arith.constant 0 : index
    %263 = vector.load %arg18[%c2_236, %c0_237, %c0_238] : memref<10x10x4xf32, #tpu.memory_space<vmem>>, vector<8x8x4xf32>
    %264 = vector.shape_cast %263 : vector<8x8x4xf32> to vector<64x4xf32>
    %265 = arith.truncf %264 : vector<64x4xf32> to vector<64x4xbf16>
    %c6_239 = arith.constant 6 : index
    %c0_240 = arith.constant 0 : index
    %c0_241 = arith.constant 0 : index
    %266 = vector.load %arg9[%c6_239, %c0_240, %c0_241] : memref<9x4x8xbf16, #tpu.memory_space<vmem>>, vector<1x4x8xbf16>
    %267 = vector.shape_cast %266 : vector<1x4x8xbf16> to vector<4x8xbf16>
    %cst_242 = arith.constant dense<0.000000e+00> : vector<64x8xf32>
    %268 = tpu.matmul %265, %267, %cst_242 {dimension_numbers = #tpu.dot_dimension_numbers<[1], [0], [0], [1], [0, 0, 1, 1], [], []>} : vector<64x4xbf16>, vector<4x8xbf16>, vector<64x8xf32> -> vector<64x8xf32>
    %269 = arith.addf %262, %268 : vector<64x8xf32>
    %c2_243 = arith.constant 2 : index
    %c1_244 = arith.constant 1 : index
    %c0_245 = arith.constant 0 : index
    %270 = vector.load %arg18[%c2_243, %c1_244, %c0_245] : memref<10x10x4xf32, #tpu.memory_space<vmem>>, vector<8x8x4xf32>
    %271 = vector.shape_cast %270 : vector<8x8x4xf32> to vector<64x4xf32>
    %272 = arith.truncf %271 : vector<64x4xf32> to vector<64x4xbf16>
    %c7_246 = arith.constant 7 : index
    %c0_247 = arith.constant 0 : index
    %c0_248 = arith.constant 0 : index
    %273 = vector.load %arg9[%c7_246, %c0_247, %c0_248] : memref<9x4x8xbf16, #tpu.memory_space<vmem>>, vector<1x4x8xbf16>
    %274 = vector.shape_cast %273 : vector<1x4x8xbf16> to vector<4x8xbf16>
    %cst_249 = arith.constant dense<0.000000e+00> : vector<64x8xf32>
    %275 = tpu.matmul %272, %274, %cst_249 {dimension_numbers = #tpu.dot_dimension_numbers<[1], [0], [0], [1], [0, 0, 1, 1], [], []>} : vector<64x4xbf16>, vector<4x8xbf16>, vector<64x8xf32> -> vector<64x8xf32>
    %276 = arith.addf %269, %275 : vector<64x8xf32>
    %c2_250 = arith.constant 2 : index
    %c2_251 = arith.constant 2 : index
    %c0_252 = arith.constant 0 : index
    %277 = vector.load %arg18[%c2_250, %c2_251, %c0_252] : memref<10x10x4xf32, #tpu.memory_space<vmem>>, vector<8x8x4xf32>
    %278 = vector.shape_cast %277 : vector<8x8x4xf32> to vector<64x4xf32>
    %279 = arith.truncf %278 : vector<64x4xf32> to vector<64x4xbf16>
    %c8_253 = arith.constant 8 : index
    %c0_254 = arith.constant 0 : index
    %c0_255 = arith.constant 0 : index
    %280 = vector.load %arg9[%c8_253, %c0_254, %c0_255] : memref<9x4x8xbf16, #tpu.memory_space<vmem>>, vector<1x4x8xbf16>
    %281 = vector.shape_cast %280 : vector<1x4x8xbf16> to vector<4x8xbf16>
    %cst_256 = arith.constant dense<0.000000e+00> : vector<64x8xf32>
    %282 = tpu.matmul %279, %281, %cst_256 {dimension_numbers = #tpu.dot_dimension_numbers<[1], [0], [0], [1], [0, 0, 1, 1], [], []>} : vector<64x4xbf16>, vector<4x8xbf16>, vector<64x8xf32> -> vector<64x8xf32>
    %283 = arith.addf %276, %282 : vector<64x8xf32>
    %284 = vector.shape_cast %283 : vector<64x8xf32> to vector<1x64x8xf32>
    %cst_257 = arith.constant dense<0.000000e+00> : vector<1xf32>
    %285 = vector.multi_reduction <add>, %284, %cst_257 [1, 2] : vector<1x64x8xf32> to vector<1xf32>
    %286 = vector.shape_cast %285 : vector<1xf32> to vector<1x1x1xf32>
    %287 = vector.extract %286[0, 0, 0] : f32 from vector<1x1x1xf32>
    %cst_258 = arith.constant 5.120000e+02 : f32
    %288 = arith.divf %287, %cst_258 : f32
    %289 = arith.mulf %283, %283 : vector<64x8xf32>
    %290 = vector.shape_cast %289 : vector<64x8xf32> to vector<1x64x8xf32>
    %cst_259 = arith.constant dense<0.000000e+00> : vector<1xf32>
    %291 = vector.multi_reduction <add>, %290, %cst_259 [1, 2] : vector<1x64x8xf32> to vector<1xf32>
    %292 = vector.shape_cast %291 : vector<1xf32> to vector<1x1x1xf32>
    %293 = vector.extract %292[0, 0, 0] : f32 from vector<1x1x1xf32>
    %cst_260 = arith.constant 5.120000e+02 : f32
    %294 = arith.divf %293, %cst_260 : f32
    %295 = arith.mulf %288, %288 : f32
    %296 = arith.subf %294, %295 : f32
    %cst_261 = arith.constant 0.000000e+00 : f32
    %297 = arith.maximumf %296, %cst_261 : f32
    %298 = vector.broadcast %288 : f32 to vector<64x8xf32>
    %299 = arith.subf %283, %298 : vector<64x8xf32>
    %cst_262 = arith.constant 9.99999974E-6 : f32
    %300 = arith.addf %297, %cst_262 : f32
    %301 = math.rsqrt %300 : f32
    %302 = vector.broadcast %301 : f32 to vector<64x8xf32>
    %303 = arith.mulf %299, %302 : vector<64x8xf32>
    %c0_263 = arith.constant 0 : index
    %c0_264 = arith.constant 0 : index
    %304 = vector.load %arg10[%c0_263, %c0_264] : memref<1x8xf32, #tpu.memory_space<vmem>>, vector<1x8xf32>
    %305 = vector.broadcast %304 : vector<1x8xf32> to vector<64x8xf32>
    %306 = arith.mulf %303, %305 : vector<64x8xf32>
    %c0_265 = arith.constant 0 : index
    %c0_266 = arith.constant 0 : index
    %307 = vector.load %arg11[%c0_265, %c0_266] : memref<1x8xf32, #tpu.memory_space<vmem>>, vector<1x8xf32>
    %308 = vector.broadcast %307 : vector<1x8xf32> to vector<64x8xf32>
    %309 = arith.addf %306, %308 : vector<64x8xf32>
    %cst_267 = arith.constant 5.000000e-01 : f32
    %310 = vector.broadcast %cst_267 : f32 to vector<64x8xf32>
    %311 = arith.mulf %310, %309 : vector<64x8xf32>
    %cst_268 = arith.constant 0.707106769 : f32
    %312 = vector.broadcast %cst_268 : f32 to vector<64x8xf32>
    %313 = arith.mulf %309, %312 : vector<64x8xf32>
    %314 = math.erf %313 : vector<64x8xf32>
    %cst_269 = arith.constant 1.000000e+00 : f32
    %315 = vector.broadcast %cst_269 : f32 to vector<64x8xf32>
    %316 = arith.addf %315, %314 : vector<64x8xf32>
    %317 = arith.mulf %311, %316 : vector<64x8xf32>
    %318 = vector.shape_cast %317 : vector<64x8xf32> to vector<8x8x8xf32>
    %c1_270 = arith.constant 1 : index
    %c1_271 = arith.constant 1 : index
    %c0_272 = arith.constant 0 : index
    %319 = vector.load %arg19[%c1_270, %c1_271, %c0_272] : memref<10x10x8xf32, #tpu.memory_space<vmem>>, vector<8x8x8xf32>
    tpu.vector_store %arg19[%c1_270, %c1_271, %c0_272], %318 {strides = array<i32>} : memref<10x10x8xf32, #tpu.memory_space<vmem>>, vector<8x8x8xf32>,
    %c0_273 = arith.constant 0 : index
    %c0_274 = arith.constant 0 : index
    %c0_275 = arith.constant 0 : index
    %320 = vector.load %arg19[%c0_273, %c0_274, %c0_275] : memref<10x10x8xf32, #tpu.memory_space<vmem>>, vector<8x8x8xf32>
    %321 = vector.shape_cast %320 : vector<8x8x8xf32> to vector<64x8xf32>
    %322 = arith.truncf %321 : vector<64x8xf32> to vector<64x8xbf16>
    %c0_276 = arith.constant 0 : index
    %c0_277 = arith.constant 0 : index
    %c0_278 = arith.constant 0 : index
    %323 = vector.load %arg12[%c0_276, %c0_277, %c0_278] : memref<9x8x8xbf16, #tpu.memory_space<vmem>>, vector<1x8x8xbf16>
    %324 = vector.shape_cast %323 : vector<1x8x8xbf16> to vector<8x8xbf16>
    %cst_279 = arith.constant dense<0.000000e+00> : vector<64x8xf32>
    %325 = tpu.matmul %322, %324, %cst_279 {dimension_numbers = #tpu.dot_dimension_numbers<[1], [0], [0], [1], [0, 0, 1, 1], [], []>} : vector<64x8xbf16>, vector<8x8xbf16>, vector<64x8xf32> -> vector<64x8xf32>
    %c0_280 = arith.constant 0 : index
    %c1_281 = arith.constant 1 : index
    %c0_282 = arith.constant 0 : index
    %326 = vector.load %arg19[%c0_280, %c1_281, %c0_282] : memref<10x10x8xf32, #tpu.memory_space<vmem>>, vector<8x8x8xf32>
    %327 = vector.shape_cast %326 : vector<8x8x8xf32> to vector<64x8xf32>
    %328 = arith.truncf %327 : vector<64x8xf32> to vector<64x8xbf16>
    %c1_283 = arith.constant 1 : index
    %c0_284 = arith.constant 0 : index
    %c0_285 = arith.constant 0 : index
    %329 = vector.load %arg12[%c1_283, %c0_284, %c0_285] : memref<9x8x8xbf16, #tpu.memory_space<vmem>>, vector<1x8x8xbf16>
    %330 = vector.shape_cast %329 : vector<1x8x8xbf16> to vector<8x8xbf16>
    %cst_286 = arith.constant dense<0.000000e+00> : vector<64x8xf32>
    %331 = tpu.matmul %328, %330, %cst_286 {dimension_numbers = #tpu.dot_dimension_numbers<[1], [0], [0], [1], [0, 0, 1, 1], [], []>} : vector<64x8xbf16>, vector<8x8xbf16>, vector<64x8xf32> -> vector<64x8xf32>
    %332 = arith.addf %325, %331 : vector<64x8xf32>
    %c0_287 = arith.constant 0 : index
    %c2_288 = arith.constant 2 : index
    %c0_289 = arith.constant 0 : index
    %333 = vector.load %arg19[%c0_287, %c2_288, %c0_289] : memref<10x10x8xf32, #tpu.memory_space<vmem>>, vector<8x8x8xf32>
    %334 = vector.shape_cast %333 : vector<8x8x8xf32> to vector<64x8xf32>
    %335 = arith.truncf %334 : vector<64x8xf32> to vector<64x8xbf16>
    %c2_290 = arith.constant 2 : index
    %c0_291 = arith.constant 0 : index
    %c0_292 = arith.constant 0 : index
    %336 = vector.load %arg12[%c2_290, %c0_291, %c0_292] : memref<9x8x8xbf16, #tpu.memory_space<vmem>>, vector<1x8x8xbf16>
    %337 = vector.shape_cast %336 : vector<1x8x8xbf16> to vector<8x8xbf16>
    %cst_293 = arith.constant dense<0.000000e+00> : vector<64x8xf32>
    %338 = tpu.matmul %335, %337, %cst_293 {dimension_numbers = #tpu.dot_dimension_numbers<[1], [0], [0], [1], [0, 0, 1, 1], [], []>} : vector<64x8xbf16>, vector<8x8xbf16>, vector<64x8xf32> -> vector<64x8xf32>
    %339 = arith.addf %332, %338 : vector<64x8xf32>
    %c1_294 = arith.constant 1 : index
    %c0_295 = arith.constant 0 : index
    %c0_296 = arith.constant 0 : index
    %340 = vector.load %arg19[%c1_294, %c0_295, %c0_296] : memref<10x10x8xf32, #tpu.memory_space<vmem>>, vector<8x8x8xf32>
    %341 = vector.shape_cast %340 : vector<8x8x8xf32> to vector<64x8xf32>
    %342 = arith.truncf %341 : vector<64x8xf32> to vector<64x8xbf16>
    %c3_297 = arith.constant 3 : index
    %c0_298 = arith.constant 0 : index
    %c0_299 = arith.constant 0 : index
    %343 = vector.load %arg12[%c3_297, %c0_298, %c0_299] : memref<9x8x8xbf16, #tpu.memory_space<vmem>>, vector<1x8x8xbf16>
    %344 = vector.shape_cast %343 : vector<1x8x8xbf16> to vector<8x8xbf16>
    %cst_300 = arith.constant dense<0.000000e+00> : vector<64x8xf32>
    %345 = tpu.matmul %342, %344, %cst_300 {dimension_numbers = #tpu.dot_dimension_numbers<[1], [0], [0], [1], [0, 0, 1, 1], [], []>} : vector<64x8xbf16>, vector<8x8xbf16>, vector<64x8xf32> -> vector<64x8xf32>
    %346 = arith.addf %339, %345 : vector<64x8xf32>
    %c1_301 = arith.constant 1 : index
    %c1_302 = arith.constant 1 : index
    %c0_303 = arith.constant 0 : index
    %347 = vector.load %arg19[%c1_301, %c1_302, %c0_303] : memref<10x10x8xf32, #tpu.memory_space<vmem>>, vector<8x8x8xf32>
    %348 = vector.shape_cast %347 : vector<8x8x8xf32> to vector<64x8xf32>
    %349 = arith.truncf %348 : vector<64x8xf32> to vector<64x8xbf16>
    %c4_304 = arith.constant 4 : index
    %c0_305 = arith.constant 0 : index
    %c0_306 = arith.constant 0 : index
    %350 = vector.load %arg12[%c4_304, %c0_305, %c0_306] : memref<9x8x8xbf16, #tpu.memory_space<vmem>>, vector<1x8x8xbf16>
    %351 = vector.shape_cast %350 : vector<1x8x8xbf16> to vector<8x8xbf16>
    %cst_307 = arith.constant dense<0.000000e+00> : vector<64x8xf32>
    %352 = tpu.matmul %349, %351, %cst_307 {dimension_numbers = #tpu.dot_dimension_numbers<[1], [0], [0], [1], [0, 0, 1, 1], [], []>} : vector<64x8xbf16>, vector<8x8xbf16>, vector<64x8xf32> -> vector<64x8xf32>
    %353 = arith.addf %346, %352 : vector<64x8xf32>
    %c1_308 = arith.constant 1 : index
    %c2_309 = arith.constant 2 : index
    %c0_310 = arith.constant 0 : index
    %354 = vector.load %arg19[%c1_308, %c2_309, %c0_310] : memref<10x10x8xf32, #tpu.memory_space<vmem>>, vector<8x8x8xf32>
    %355 = vector.shape_cast %354 : vector<8x8x8xf32> to vector<64x8xf32>
    %356 = arith.truncf %355 : vector<64x8xf32> to vector<64x8xbf16>
    %c5_311 = arith.constant 5 : index
    %c0_312 = arith.constant 0 : index
    %c0_313 = arith.constant 0 : index
    %357 = vector.load %arg12[%c5_311, %c0_312, %c0_313] : memref<9x8x8xbf16, #tpu.memory_space<vmem>>, vector<1x8x8xbf16>
    %358 = vector.shape_cast %357 : vector<1x8x8xbf16> to vector<8x8xbf16>
    %cst_314 = arith.constant dense<0.000000e+00> : vector<64x8xf32>
    %359 = tpu.matmul %356, %358, %cst_314 {dimension_numbers = #tpu.dot_dimension_numbers<[1], [0], [0], [1], [0, 0, 1, 1], [], []>} : vector<64x8xbf16>, vector<8x8xbf16>, vector<64x8xf32> -> vector<64x8xf32>
    %360 = arith.addf %353, %359 : vector<64x8xf32>
    %c2_315 = arith.constant 2 : index
    %c0_316 = arith.constant 0 : index
    %c0_317 = arith.constant 0 : index
    %361 = vector.load %arg19[%c2_315, %c0_316, %c0_317] : memref<10x10x8xf32, #tpu.memory_space<vmem>>, vector<8x8x8xf32>
    %362 = vector.shape_cast %361 : vector<8x8x8xf32> to vector<64x8xf32>
    %363 = arith.truncf %362 : vector<64x8xf32> to vector<64x8xbf16>
    %c6_318 = arith.constant 6 : index
    %c0_319 = arith.constant 0 : index
    %c0_320 = arith.constant 0 : index
    %364 = vector.load %arg12[%c6_318, %c0_319, %c0_320] : memref<9x8x8xbf16, #tpu.memory_space<vmem>>, vector<1x8x8xbf16>
    %365 = vector.shape_cast %364 : vector<1x8x8xbf16> to vector<8x8xbf16>
    %cst_321 = arith.constant dense<0.000000e+00> : vector<64x8xf32>
    %366 = tpu.matmul %363, %365, %cst_321 {dimension_numbers = #tpu.dot_dimension_numbers<[1], [0], [0], [1], [0, 0, 1, 1], [], []>} : vector<64x8xbf16>, vector<8x8xbf16>, vector<64x8xf32> -> vector<64x8xf32>
    %367 = arith.addf %360, %366 : vector<64x8xf32>
    %c2_322 = arith.constant 2 : index
    %c1_323 = arith.constant 1 : index
    %c0_324 = arith.constant 0 : index
    %368 = vector.load %arg19[%c2_322, %c1_323, %c0_324] : memref<10x10x8xf32, #tpu.memory_space<vmem>>, vector<8x8x8xf32>
    %369 = vector.shape_cast %368 : vector<8x8x8xf32> to vector<64x8xf32>
    %370 = arith.truncf %369 : vector<64x8xf32> to vector<64x8xbf16>
    %c7_325 = arith.constant 7 : index
    %c0_326 = arith.constant 0 : index
    %c0_327 = arith.constant 0 : index
    %371 = vector.load %arg12[%c7_325, %c0_326, %c0_327] : memref<9x8x8xbf16, #tpu.memory_space<vmem>>, vector<1x8x8xbf16>
    %372 = vector.shape_cast %371 : vector<1x8x8xbf16> to vector<8x8xbf16>
    %cst_328 = arith.constant dense<0.000000e+00> : vector<64x8xf32>
    %373 = tpu.matmul %370, %372, %cst_328 {dimension_numbers = #tpu.dot_dimension_numbers<[1], [0], [0], [1], [0, 0, 1, 1], [], []>} : vector<64x8xbf16>, vector<8x8xbf16>, vector<64x8xf32> -> vector<64x8xf32>
    %374 = arith.addf %367, %373 : vector<64x8xf32>
    %c2_329 = arith.constant 2 : index
    %c2_330 = arith.constant 2 : index
    %c0_331 = arith.constant 0 : index
    %375 = vector.load %arg19[%c2_329, %c2_330, %c0_331] : memref<10x10x8xf32, #tpu.memory_space<vmem>>, vector<8x8x8xf32>
    %376 = vector.shape_cast %375 : vector<8x8x8xf32> to vector<64x8xf32>
    %377 = arith.truncf %376 : vector<64x8xf32> to vector<64x8xbf16>
    %c8_332 = arith.constant 8 : index
    %c0_333 = arith.constant 0 : index
    %c0_334 = arith.constant 0 : index
    %378 = vector.load %arg12[%c8_332, %c0_333, %c0_334] : memref<9x8x8xbf16, #tpu.memory_space<vmem>>, vector<1x8x8xbf16>
    %379 = vector.shape_cast %378 : vector<1x8x8xbf16> to vector<8x8xbf16>
    %cst_335 = arith.constant dense<0.000000e+00> : vector<64x8xf32>
    %380 = tpu.matmul %377, %379, %cst_335 {dimension_numbers = #tpu.dot_dimension_numbers<[1], [0], [0], [1], [0, 0, 1, 1], [], []>} : vector<64x8xbf16>, vector<8x8xbf16>, vector<64x8xf32> -> vector<64x8xf32>
    %381 = arith.addf %374, %380 : vector<64x8xf32>
    %382 = vector.shape_cast %381 : vector<64x8xf32> to vector<1x64x8xf32>
    %cst_336 = arith.constant dense<0.000000e+00> : vector<1xf32>
    %383 = vector.multi_reduction <add>, %382, %cst_336 [1, 2] : vector<1x64x8xf32> to vector<1xf32>
    %384 = vector.shape_cast %383 : vector<1xf32> to vector<1x1x1xf32>
    %385 = vector.extract %384[0, 0, 0] : f32 from vector<1x1x1xf32>
    %cst_337 = arith.constant 5.120000e+02 : f32
    %386 = arith.divf %385, %cst_337 : f32
    %387 = arith.mulf %381, %381 : vector<64x8xf32>
    %388 = vector.shape_cast %387 : vector<64x8xf32> to vector<1x64x8xf32>
    %cst_338 = arith.constant dense<0.000000e+00> : vector<1xf32>
    %389 = vector.multi_reduction <add>, %388, %cst_338 [1, 2] : vector<1x64x8xf32> to vector<1xf32>
    %390 = vector.shape_cast %389 : vector<1xf32> to vector<1x1x1xf32>
    %391 = vector.extract %390[0, 0, 0] : f32 from vector<1x1x1xf32>
    %cst_339 = arith.constant 5.120000e+02 : f32
    %392 = arith.divf %391, %cst_339 : f32
    %393 = arith.mulf %386, %386 : f32
    %394 = arith.subf %392, %393 : f32
    %cst_340 = arith.constant 0.000000e+00 : f32
    %395 = arith.maximumf %394, %cst_340 : f32
    %396 = vector.broadcast %386 : f32 to vector<64x8xf32>
    %397 = arith.subf %381, %396 : vector<64x8xf32>
    %cst_341 = arith.constant 9.99999974E-6 : f32
    %398 = arith.addf %395, %cst_341 : f32
    %399 = math.rsqrt %398 : f32
    %400 = vector.broadcast %399 : f32 to vector<64x8xf32>
    %401 = arith.mulf %397, %400 : vector<64x8xf32>
    %c0_342 = arith.constant 0 : index
    %c0_343 = arith.constant 0 : index
    %402 = vector.load %arg13[%c0_342, %c0_343] : memref<1x8xf32, #tpu.memory_space<vmem>>, vector<1x8xf32>
    %403 = vector.broadcast %402 : vector<1x8xf32> to vector<64x8xf32>
    %404 = arith.mulf %401, %403 : vector<64x8xf32>
    %c0_344 = arith.constant 0 : index
    %c0_345 = arith.constant 0 : index
    %405 = vector.load %arg14[%c0_344, %c0_345] : memref<1x8xf32, #tpu.memory_space<vmem>>, vector<1x8xf32>
    %406 = vector.broadcast %405 : vector<1x8xf32> to vector<64x8xf32>
    %407 = arith.addf %404, %406 : vector<64x8xf32>
    %c0_346 = arith.constant 0 : index
    %c0_347 = arith.constant 0 : index
    %c0_348 = arith.constant 0 : index
    %408 = vector.load %arg2[%c0_346, %c0_347, %c0_348] : memref<1x1x32xf32, #tpu.memory_space<vmem>>, vector<1x1x32xf32>
    %409 = vector.shape_cast %408 : vector<1x1x32xf32> to vector<1x32xf32>
    %410 = arith.negf %409 : vector<1x32xf32>
    %411 = math.exp %410 : vector<1x32xf32>
    %cst_349 = arith.constant 1.000000e+00 : f32
    %412 = vector.broadcast %cst_349 : f32 to vector<1x32xf32>
    %413 = arith.addf %412, %411 : vector<1x32xf32>
    %414 = arith.divf %412, %413 : vector<1x32xf32>
    %415 = arith.mulf %409, %414 : vector<1x32xf32>
    %416 = arith.truncf %415 : vector<1x32xf32> to vector<1x32xbf16>
    %c0_350 = arith.constant 0 : index
    %c0_351 = arith.constant 0 : index
    %417 = vector.load %arg15[%c0_350, %c0_351] : memref<32x8xbf16, #tpu.memory_space<vmem>>, vector<32x8xbf16>
    %cst_352 = arith.constant dense<0.000000e+00> : vector<1x8xf32>
    %418 = tpu.matmul %416, %417, %cst_352 {dimension_numbers = #tpu.dot_dimension_numbers<[1], [0], [0], [1], [0, 0, 1, 1], [], []>} : vector<1x32xbf16>, vector<32x8xbf16>, vector<1x8xf32> -> vector<1x8xf32>
    %c0_353 = arith.constant 0 : index
    %c0_354 = arith.constant 0 : index
    %419 = vector.load %arg16[%c0_353, %c0_354] : memref<1x8xf32, #tpu.memory_space<vmem>>, vector<1x8xf32>
    %420 = arith.addf %418, %419 : vector<1x8xf32>
    %421 = vector.broadcast %420 : vector<1x8xf32> to vector<64x8xf32>
    %422 = arith.addf %407, %421 : vector<64x8xf32>
    %c0_355 = arith.constant 0 : index
    %c0_356 = arith.constant 0 : index
    %c0_357 = arith.constant 0 : index
    %423 = vector.load %arg17[%c0_355, %c0_356, %c0_357] : memref<1x64x8xf32, #tpu.memory_space<vmem>>, vector<1x64x8xf32>
    %424 = vector.shape_cast %423 : vector<1x64x8xf32> to vector<64x8xf32>
    %425 = vector.shape_cast %422 : vector<64x8xf32> to vector<1x64x8xf32>
    tpu.vector_store %arg17[%c0_355, %c0_356, %c0_357], %425 {strides = array<i32>} : memref<1x64x8xf32, #tpu.memory_space<vmem>>, vector<1x64x8xf32>,
    return
  }
  func.func @transform_0(%arg0: i32) -> (i32, i32, i32, i32) {
    %c0_i32 = arith.constant 0 : i32
    %c0_i32_0 = arith.constant 0 : i32
    %c0_i32_1 = arith.constant 0 : i32
    %c0_i32_2 = arith.constant 0 : i32
    return %arg0, %c0_i32, %c0_i32_0, %c0_i32_1 : i32, i32, i32, i32
  }
  func.func @transform_1(%arg0: i32) -> (i32, i32, i32) {
    %c0_i32 = arith.constant 0 : i32
    %c0_i32_0 = arith.constant 0 : i32
    %c0_i32_1 = arith.constant 0 : i32
    return %arg0, %c0_i32, %c0_i32_0 : i32, i32, i32
  }
  func.func @transform_2(%arg0: i32) -> (i32, i32, i32) {
    %c0_i32 = arith.constant 0 : i32
    %c0_i32_0 = arith.constant 0 : i32
    %c0_i32_1 = arith.constant 0 : i32
    %c0_i32_2 = arith.constant 0 : i32
    return %c0_i32, %c0_i32_0, %c0_i32_1 : i32, i32, i32
  }
  func.func @transform_3(%arg0: i32) -> (i32, i32) {
    %c0_i32 = arith.constant 0 : i32
    %c0_i32_0 = arith.constant 0 : i32
    %c0_i32_1 = arith.constant 0 : i32
    return %c0_i32, %c0_i32_0 : i32, i32
  }
  func.func @transform_4(%arg0: i32) -> (i32, i32) {
    %c0_i32 = arith.constant 0 : i32
    %c0_i32_0 = arith.constant 0 : i32
    %c0_i32_1 = arith.constant 0 : i32
    return %c0_i32, %c0_i32_0 : i32, i32
  }
  func.func @transform_5(%arg0: i32) -> (i32, i32, i32) {
    %c0_i32 = arith.constant 0 : i32
    %c0_i32_0 = arith.constant 0 : i32
    %c0_i32_1 = arith.constant 0 : i32
    %c0_i32_2 = arith.constant 0 : i32
    return %c0_i32, %c0_i32_0, %c0_i32_1 : i32, i32, i32
  }
  func.func @transform_6(%arg0: i32) -> (i32, i32) {
    %c0_i32 = arith.constant 0 : i32
    %c0_i32_0 = arith.constant 0 : i32
    %c0_i32_1 = arith.constant 0 : i32
    return %c0_i32, %c0_i32_0 : i32, i32
  }
  func.func @transform_7(%arg0: i32) -> (i32, i32) {
    %c0_i32 = arith.constant 0 : i32
    %c0_i32_0 = arith.constant 0 : i32
    %c0_i32_1 = arith.constant 0 : i32
    return %c0_i32, %c0_i32_0 : i32, i32
  }
  func.func @transform_8(%arg0: i32) -> (i32, i32, i32) {
    %c0_i32 = arith.constant 0 : i32
    %c0_i32_0 = arith.constant 0 : i32
    %c0_i32_1 = arith.constant 0 : i32
    %c0_i32_2 = arith.constant 0 : i32
    return %c0_i32, %c0_i32_0, %c0_i32_1 : i32, i32, i32
  }
  func.func @transform_9(%arg0: i32) -> (i32, i32) {
    %c0_i32 = arith.constant 0 : i32
    %c0_i32_0 = arith.constant 0 : i32
    %c0_i32_1 = arith.constant 0 : i32
    return %c0_i32, %c0_i32_0 : i32, i32
  }
  func.func @transform_10(%arg0: i32) -> (i32, i32) {
    %c0_i32 = arith.constant 0 : i32
    %c0_i32_0 = arith.constant 0 : i32
    %c0_i32_1 = arith.constant 0 : i32
    return %c0_i32, %c0_i32_0 : i32, i32
  }
  func.func @transform_11(%arg0: i32) -> (i32, i32, i32) {
    %c0_i32 = arith.constant 0 : i32
    %c0_i32_0 = arith.constant 0 : i32
    %c0_i32_1 = arith.constant 0 : i32
    %c0_i32_2 = arith.constant 0 : i32
    return %c0_i32, %c0_i32_0, %c0_i32_1 : i32, i32, i32
  }
  func.func @transform_12(%arg0: i32) -> (i32, i32) {
    %c0_i32 = arith.constant 0 : i32
    %c0_i32_0 = arith.constant 0 : i32
    %c0_i32_1 = arith.constant 0 : i32
    return %c0_i32, %c0_i32_0 : i32, i32
  }
  func.func @transform_13(%arg0: i32) -> (i32, i32) {
    %c0_i32 = arith.constant 0 : i32
    %c0_i32_0 = arith.constant 0 : i32
    %c0_i32_1 = arith.constant 0 : i32
    return %c0_i32, %c0_i32_0 : i32, i32
  }
  func.func @transform_14(%arg0: i32) -> (i32, i32) {
    %c0_i32 = arith.constant 0 : i32
    %c0_i32_0 = arith.constant 0 : i32
    %c0_i32_1 = arith.constant 0 : i32
    return %c0_i32, %c0_i32_0 : i32, i32
  }
  func.func @transform_15(%arg0: i32) -> (i32, i32) {
    %c0_i32 = arith.constant 0 : i32
    %c0_i32_0 = arith.constant 0 : i32
    %c0_i32_1 = arith.constant 0 : i32
    return %c0_i32, %c0_i32_0 : i32, i32
  }
  func.func @transform_16(%arg0: i32) -> (i32, i32, i32) {
    %c0_i32 = arith.constant 0 : i32
    %c0_i32_0 = arith.constant 0 : i32
    %c0_i32_1 = arith.constant 0 : i32
    return %arg0, %c0_i32, %c0_i32_0 : i32, i32, i32
  }
}

</mosaic_0001>

<llo_original>
// kernel: down_pallas.1
$region0: #{down_pallas.1}
  #allocation0 [shape = 'u32[]', space=smem, size = 0x4, offset = 0x4, fixed_abs, tag = 'smem constant byte address 0x4 - core index']
  #allocation1 [shape = 'u32[144,128]{1,0:T(1,128)}', space=vmem, size = 0x12000, scoped, tag = 'internal scratch']
  #allocation2 [shape = 'f32[10,10,4]{2,1,0:T(8,128)}', space=vmem, size = 0x14000, scoped, tag = 'scratch operand']
  #allocation3 [shape = 'f32[10,10,8]{2,1,0:T(8,128)}', space=vmem, size = 0x14000, scoped, tag = 'scratch operand']
  %s0 = inlined_call_operand.vmem [shape: f32[2,4,64,4], index: 0, kind: input, shape index: {}]
  %s1 = inlined_call_operand.vmem [shape: f32[2,1,32], index: 1, kind: input, shape index: {}]
  %s2 = inlined_call_operand.vmem [shape: bf16[9,4,4], index: 2, kind: input, shape index: {}]
  %s3 = inlined_call_operand.vmem [shape: f32[1,4], index: 3, kind: input, shape index: {}]
  %s4 = inlined_call_operand.vmem [shape: f32[1,4], index: 4, kind: input, shape index: {}]
  %s5 = inlined_call_operand.vmem [shape: bf16[9,4,4], index: 5, kind: input, shape index: {}]
  %s6 = inlined_call_operand.vmem [shape: f32[1,4], index: 6, kind: input, shape index: {}]
  %s7 = inlined_call_operand.vmem [shape: f32[1,4], index: 7, kind: input, shape index: {}]
  %s8 = inlined_call_operand.vmem [shape: bf16[9,4,8], index: 8, kind: input, shape index: {}]
  %s9 = inlined_call_operand.vmem [shape: f32[1,8], index: 9, kind: input, shape index: {}]
  %s10 = inlined_call_operand.vmem [shape: f32[1,8], index: 10, kind: input, shape index: {}]
  %s11 = inlined_call_operand.vmem [shape: bf16[9,8,8], index: 11, kind: input, shape index: {}]
  %s12 = inlined_call_operand.vmem [shape: f32[1,8], index: 12, kind: input, shape index: {}]
  %s13 = inlined_call_operand.vmem [shape: f32[1,8], index: 13, kind: input, shape index: {}]
  %s14 = inlined_call_operand.vmem [shape: bf16[32,8], index: 14, kind: input, shape index: {}]
  %s15 = inlined_call_operand.vmem [shape: f32[1,8], index: 15, kind: input, shape index: {}]
  %s16 = inlined_call_operand.vmem [shape: f32[2,64,8], index: 16, kind: output, shape index: {}]
  %s17 = sld [smem:[#allocation0]]
  $region97: #{down_pallas.1} parent=0
    _
  %s19 = ssub.s32 1, %s17
  %s20 = scalar_select 0, %s19, %s17
  loop: start=0, step=1, limit=4
  $region2: #{down_pallas.1} parent=0 // loop_pre_header
    _
  $region3: #{down_pallas.1} parent=0 // loop_header
    %s22 = sphi 0, %s26
    %p23 = scmp.ge.s32.totalorder %s22, 4
    %s32 = sphi 0, %s34
    %s35 = sphi 0, %s32
    %s36 = sphi 0, %s35
    %s52 = sphi 0, %s36
    %s58 = sphi 0, %s60
    %s61 = sphi 0, %s58
    %s62 = sphi 0, %s61
    %s78 = sphi 0, %s62
    %s82 = sphi 0, %s82
    %s84 = sphi 0, %s82
    %s85 = sphi 0, %s84
    %s99 = sphi 0, %s85
    %s103 = sphi 0, %s103
    %s105 = sphi 0, %s103
    %s106 = sphi 0, %s105
    %s120 = sphi 0, %s106
    %s124 = sphi 0, %s124
    %s126 = sphi 0, %s124
    %s127 = sphi 0, %s126
    %s141 = sphi 0, %s127
    %s145 = sphi 0, %s145
    %s147 = sphi 0, %s145
    %s148 = sphi 0, %s147
    %s162 = sphi 0, %s148
    %s166 = sphi 0, %s166
    %s168 = sphi 0, %s166
    %s169 = sphi 0, %s168
    %s183 = sphi 0, %s169
    %s187 = sphi 0, %s187
    %s189 = sphi 0, %s187
    %s190 = sphi 0, %s189
    %s204 = sphi 0, %s190
    %s208 = sphi 0, %s208
    %s210 = sphi 0, %s208
    %s211 = sphi 0, %s210
    %s225 = sphi 0, %s211
    %s229 = sphi 0, %s229
    %s231 = sphi 0, %s229
    %s232 = sphi 0, %s231
    %s246 = sphi 0, %s232
    %s250 = sphi 0, %s250
    %s252 = sphi 0, %s250
    %s253 = sphi 0, %s252
    %s267 = sphi 0, %s253
    %s271 = sphi 0, %s271
    %s273 = sphi 0, %s271
    %s274 = sphi 0, %s273
    %s288 = sphi 0, %s274
    %s292 = sphi 0, %s292
    %s294 = sphi 0, %s292
    %s295 = sphi 0, %s294
    %s309 = sphi 0, %s295
    %s313 = sphi 0, %s313
    %s315 = sphi 0, %s313
    %s316 = sphi 0, %s315
    %s330 = sphi 0, %s316
    %s334 = sphi 0, %s334
    %s336 = sphi 0, %s334
    %s337 = sphi 0, %s336
    %s351 = sphi 0, %s337
    %s355 = sphi 0, %s355
    %s357 = sphi 0, %s355
    %s358 = sphi 0, %s357
    %s372 = sphi 0, %s358
    %s378 = sphi 0, %s380
    %s381 = sphi 0, %s378
    %s382 = sphi 0, %s381
    %s398 = sphi 0, %s382
  $region4: #{down_pallas.1} parent=0 // loop_header_branch
    %25 = sbr.rel (%p23) target = $region8
  $region5: #{down_pallas.1} parent=0 // loop_body
    %s27 = ssub.s32 %s22, 1
    %s28 = ssub.s32 %s22, 2
    %s29 = sadd.s32 %s22, 1
    %s30 = ssub.s32 %s22, %s29
    %p31 = scmp.eq.s32.totalorder %s30, 0
    %s33 = sadd.s32 %s32, 1
    %s34 = scalar_select %p31, %s32, %s33
    %p37 = pneg %p31
    %p38 = scmp.eq.s32.totalorder %s22, 1
    %p39 = por %p37, %p38
    %p40 = scmp.ne.s32.totalorder %s32, %s35
    %p41 = scmp.eq.s32.totalorder %s22, 0
    %p42 = por %p40, %p41
    %p43 = scmp.ne.s32.totalorder %s32, %s35
    %p44 = scmp.eq.s32.totalorder %s27, 1
    %p45 = por %p43, %p44
    %p46 = scmp.ne.s32.totalorder %s35, %s36
    %p47 = scmp.eq.s32.totalorder %s27, 0
    %p48 = por %p46, %p47
    %p49 = scmp.ne.s32.totalorder %s35, %s36
    %p50 = scmp.eq.s32.totalorder %s28, 1
    %p51 = por %p49, %p50
    %p53 = scmp.ne.s32.totalorder %s36, %s52
    %p54 = scmp.eq.s32.totalorder %s28, 0
    %p55 = por %p53, %p54
    %s56 = ssub.s32 %s22, %s29
    %p57 = scmp.eq.s32.totalorder %s56, 0
    %s59 = sadd.s32 %s58, 1
    %s60 = scalar_select %p57, %s58, %s59
    %p63 = pneg %p57
    %p64 = scmp.eq.s32.totalorder %s22, 1
    %p65 = por %p63, %p64
    %p66 = scmp.ne.s32.totalorder %s58, %s61
    %p67 = scmp.eq.s32.totalorder %s22, 0
    %p68 = por %p66, %p67
    %p69 = scmp.ne.s32.totalorder %s58, %s61
    %p70 = scmp.eq.s32.totalorder %s27, 1
    %p71 = por %p69, %p70
    %p72 = scmp.ne.s32.totalorder %s61, %s62
    %p73 = scmp.eq.s32.totalorder %s27, 0
    %p74 = por %p72, %p73
    %p75 = scmp.ne.s32.totalorder %s61, %s62
    %p76 = scmp.eq.s32.totalorder %s28, 1
    %p77 = por %p75, %p76
    %p79 = scmp.ne.s32.totalorder %s62, %s78
    %p80 = scmp.eq.s32.totalorder %s28, 0
    %p81 = por %p79, %p80
    %s83 = sadd.s32 %s82, 1
    %p86 = scmp.eq.s32.totalorder %s22, 1
    %p87 = scmp.ne.s32.totalorder %s82, %s84
    %p88 = scmp.eq.s32.totalorder %s22, 0
    %p89 = por %p87, %p88
    %p90 = scmp.ne.s32.totalorder %s82, %s84
    %p91 = scmp.eq.s32.totalorder %s27, 1
    %p92 = por %p90, %p91
    %p93 = scmp.ne.s32.totalorder %s84, %s85
    %p94 = scmp.eq.s32.totalorder %s27, 0
    %p95 = por %p93, %p94
    %p96 = scmp.ne.s32.totalorder %s84, %s85
    %p97 = scmp.eq.s32.totalorder %s28, 1
    %p98 = por %p96, %p97
    %p100 = scmp.ne.s32.totalorder %s85, %s99
    %p101 = scmp.eq.s32.totalorder %s28, 0
    %p102 = por %p100, %p101
    %s104 = sadd.s32 %s103, 1
    %p107 = scmp.eq.s32.totalorder %s22, 1
    %p108 = scmp.ne.s32.totalorder %s103, %s105
    %p109 = scmp.eq.s32.totalorder %s22, 0
    %p110 = por %p108, %p109
    %p111 = scmp.ne.s32.totalorder %s103, %s105
    %p112 = scmp.eq.s32.totalorder %s27, 1
    %p113 = por %p111, %p112
    %p114 = scmp.ne.s32.totalorder %s105, %s106
    %p115 = scmp.eq.s32.totalorder %s27, 0
    %p116 = por %p114, %p115
    %p117 = scmp.ne.s32.totalorder %s105, %s106
    %p118 = scmp.eq.s32.totalorder %s28, 1
    %p119 = por %p117, %p118
    %p121 = scmp.ne.s32.totalorder %s106, %s120
    %p122 = scmp.eq.s32.totalorder %s28, 0
    %p123 = por %p121, %p122
    %s125 = sadd.s32 %s124, 1
    %p128 = scmp.eq.s32.totalorder %s22, 1
    %p129 = scmp.ne.s32.totalorder %s124, %s126
    %p130 = scmp.eq.s32.totalorder %s22, 0
    %p131 = por %p129, %p130
    %p132 = scmp.ne.s32.totalorder %s124, %s126
    %p133 = scmp.eq.s32.totalorder %s27, 1
    %p134 = por %p132, %p133
    %p135 = scmp.ne.s32.totalorder %s126, %s127
    %p136 = scmp.eq.s32.totalorder %s27, 0
    %p137 = por %p135, %p136
    %p138 = scmp.ne.s32.totalorder %s126, %s127
    %p139 = scmp.eq.s32.totalorder %s28, 1
    %p140 = por %p138, %p139
    %p142 = scmp.ne.s32.totalorder %s127, %s141
    %p143 = scmp.eq.s32.totalorder %s28, 0
    %p144 = por %p142, %p143
    %s146 = sadd.s32 %s145, 1
    %p149 = scmp.eq.s32.totalorder %s22, 1
    %p150 = scmp.ne.s32.totalorder %s145, %s147
    %p151 = scmp.eq.s32.totalorder %s22, 0
    %p152 = por %p150, %p151
    %p153 = scmp.ne.s32.totalorder %s145, %s147
    %p154 = scmp.eq.s32.totalorder %s27, 1
    %p155 = por %p153, %p154
    %p156 = scmp.ne.s32.totalorder %s147, %s148
    %p157 = scmp.eq.s32.totalorder %s27, 0
    %p158 = por %p156, %p157
    %p159 = scmp.ne.s32.totalorder %s147, %s148
    %p160 = scmp.eq.s32.totalorder %s28, 1
    %p161 = por %p159, %p160
    %p163 = scmp.ne.s32.totalorder %s148, %s162
    %p164 = scmp.eq.s32.totalorder %s28, 0
    %p165 = por %p163, %p164
    %s167 = sadd.s32 %s166, 1
    %p170 = scmp.eq.s32.totalorder %s22, 1
    %p171 = scmp.ne.s32.totalorder %s166, %s168
    %p172 = scmp.eq.s32.totalorder %s22, 0
    %p173 = por %p171, %p172
    %p174 = scmp.ne.s32.totalorder %s166, %s168
    %p175 = scmp.eq.s32.totalorder %s27, 1
    %p176 = por %p174, %p175
    %p177 = scmp.ne.s32.totalorder %s168, %s169
    %p178 = scmp.eq.s32.totalorder %s27, 0
    %p179 = por %p177, %p178
    %p180 = scmp.ne.s32.totalorder %s168, %s169
    %p181 = scmp.eq.s32.totalorder %s28, 1
    %p182 = por %p180, %p181
    %p184 = scmp.ne.s32.totalorder %s169, %s183
    %p185 = scmp.eq.s32.totalorder %s28, 0
    %p186 = por %p184, %p185
    %s188 = sadd.s32 %s187, 1
    %p191 = scmp.eq.s32.totalorder %s22, 1
    %p192 = scmp.ne.s32.totalorder %s187, %s189
    %p193 = scmp.eq.s32.totalorder %s22, 0
    %p194 = por %p192, %p193
    %p195 = scmp.ne.s32.totalorder %s187, %s189
    %p196 = scmp.eq.s32.totalorder %s27, 1
    %p197 = por %p195, %p196
    %p198 = scmp.ne.s32.totalorder %s189, %s190
    %p199 = scmp.eq.s32.totalorder %s27, 0
    %p200 = por %p198, %p199
    %p201 = scmp.ne.s32.totalorder %s189, %s190
    %p202 = scmp.eq.s32.totalorder %s28, 1
    %p203 = por %p201, %p202
    %p205 = scmp.ne.s32.totalorder %s190, %s204
    %p206 = scmp.eq.s32.totalorder %s28, 0
    %p207 = por %p205, %p206
    %s209 = sadd.s32 %s208, 1
    %p212 = scmp.eq.s32.totalorder %s22, 1
    %p213 = scmp.ne.s32.totalorder %s208, %s210
    %p214 = scmp.eq.s32.totalorder %s22, 0
    %p215 = por %p213, %p214
    %p216 = scmp.ne.s32.totalorder %s208, %s210
    %p217 = scmp.eq.s32.totalorder %s27, 1
    %p218 = por %p216, %p217
    %p219 = scmp.ne.s32.totalorder %s210, %s211
    %p220 = scmp.eq.s32.totalorder %s27, 0
    %p221 = por %p219, %p220
    %p222 = scmp.ne.s32.totalorder %s210, %s211
    %p223 = scmp.eq.s32.totalorder %s28, 1
    %p224 = por %p222, %p223
    %p226 = scmp.ne.s32.totalorder %s211, %s225
    %p227 = scmp.eq.s32.totalorder %s28, 0
    %p228 = por %p226, %p227
    %s230 = sadd.s32 %s229, 1
    %p233 = scmp.eq.s32.totalorder %s22, 1
    %p234 = scmp.ne.s32.totalorder %s229, %s231
    %p235 = scmp.eq.s32.totalorder %s22, 0
    %p236 = por %p234, %p235
    %p237 = scmp.ne.s32.totalorder %s229, %s231
    %p238 = scmp.eq.s32.totalorder %s27, 1
    %p239 = por %p237, %p238
    %p240 = scmp.ne.s32.totalorder %s231, %s232
    %p241 = scmp.eq.s32.totalorder %s27, 0
    %p242 = por %p240, %p241
    %p243 = scmp.ne.s32.totalorder %s231, %s232
    %p244 = scmp.eq.s32.totalorder %s28, 1
    %p245 = por %p243, %p244
    %p247 = scmp.ne.s32.totalorder %s232, %s246
    %p248 = scmp.eq.s32.totalorder %s28, 0
    %p249 = por %p247, %p248
    %s251 = sadd.s32 %s250, 1
    %p254 = scmp.eq.s32.totalorder %s22, 1
    %p255 = scmp.ne.s32.totalorder %s250, %s252
    %p256 = scmp.eq.s32.totalorder %s22, 0
    %p257 = por %p255, %p256
    %p258 = scmp.ne.s32.totalorder %s250, %s252
    %p259 = scmp.eq.s32.totalorder %s27, 1
    %p260 = por %p258, %p259
    %p261 = scmp.ne.s32.totalorder %s252, %s253
    %p262 = scmp.eq.s32.totalorder %s27, 0
    %p263 = por %p261, %p262
    %p264 = scmp.ne.s32.totalorder %s252, %s253
    %p265 = scmp.eq.s32.totalorder %s28, 1
    %p266 = por %p264, %p265
    %p268 = scmp.ne.s32.totalorder %s253, %s267
    %p269 = scmp.eq.s32.totalorder %s28, 0
    %p270 = por %p268, %p269
    %s272 = sadd.s32 %s271, 1
    %p275 = scmp.eq.s32.totalorder %s22, 1
    %p276 = scmp.ne.s32.totalorder %s271, %s273
    %p277 = scmp.eq.s32.totalorder %s22, 0
    %p278 = por %p276, %p277
    %p279 = scmp.ne.s32.totalorder %s271, %s273
    %p280 = scmp.eq.s32.totalorder %s27, 1
    %p281 = por %p279, %p280
    %p282 = scmp.ne.s32.totalorder %s273, %s274
    %p283 = scmp.eq.s32.totalorder %s27, 0
    %p284 = por %p282, %p283
    %p285 = scmp.ne.s32.totalorder %s273, %s274
    %p286 = scmp.eq.s32.totalorder %s28, 1
    %p287 = por %p285, %p286
    %p289 = scmp.ne.s32.totalorder %s274, %s288
    %p290 = scmp.eq.s32.totalorder %s28, 0
    %p291 = por %p289, %p290
    %s293 = sadd.s32 %s292, 1
    %p296 = scmp.eq.s32.totalorder %s22, 1
    %p297 = scmp.ne.s32.totalorder %s292, %s294
    %p298 = scmp.eq.s32.totalorder %s22, 0
    %p299 = por %p297, %p298
    %p300 = scmp.ne.s32.totalorder %s292, %s294
    %p301 = scmp.eq.s32.totalorder %s27, 1
    %p302 = por %p300, %p301
    %p303 = scmp.ne.s32.totalorder %s294, %s295
    %p304 = scmp.eq.s32.totalorder %s27, 0
    %p305 = por %p303, %p304
    %p306 = scmp.ne.s32.totalorder %s294, %s295
    %p307 = scmp.eq.s32.totalorder %s28, 1
    %p308 = por %p306, %p307
    %p310 = scmp.ne.s32.totalorder %s295, %s309
    %p311 = scmp.eq.s32.totalorder %s28, 0
    %p312 = por %p310, %p311
    %s314 = sadd.s32 %s313, 1
    %p317 = scmp.eq.s32.totalorder %s22, 1
    %p318 = scmp.ne.s32.totalorder %s313, %s315
    %p319 = scmp.eq.s32.totalorder %s22, 0
    %p320 = por %p318, %p319
    %p321 = scmp.ne.s32.totalorder %s313, %s315
    %p322 = scmp.eq.s32.totalorder %s27, 1
    %p323 = por %p321, %p322
    %p324 = scmp.ne.s32.totalorder %s315, %s316
    %p325 = scmp.eq.s32.totalorder %s27, 0
    %p326 = por %p324, %p325
    %p327 = scmp.ne.s32.totalorder %s315, %s316
    %p328 = scmp.eq.s32.totalorder %s28, 1
    %p329 = por %p327, %p328
    %p331 = scmp.ne.s32.totalorder %s316, %s330
    %p332 = scmp.eq.s32.totalorder %s28, 0
    %p333 = por %p331, %p332
    %s335 = sadd.s32 %s334, 1
    %p338 = scmp.eq.s32.totalorder %s22, 1
    %p339 = scmp.ne.s32.totalorder %s334, %s336
    %p340 = scmp.eq.s32.totalorder %s22, 0
    %p341 = por %p339, %p340
    %p342 = scmp.ne.s32.totalorder %s334, %s336
    %p343 = scmp.eq.s32.totalorder %s27, 1
    %p344 = por %p342, %p343
    %p345 = scmp.ne.s32.totalorder %s336, %s337
    %p346 = scmp.eq.s32.totalorder %s27, 0
    %p347 = por %p345, %p346
    %p348 = scmp.ne.s32.totalorder %s336, %s337
    %p349 = scmp.eq.s32.totalorder %s28, 1
    %p350 = por %p348, %p349
    %p352 = scmp.ne.s32.totalorder %s337, %s351
    %p353 = scmp.eq.s32.totalorder %s28, 0
    %p354 = por %p352, %p353
    %s356 = sadd.s32 %s355, 1
    %p359 = scmp.eq.s32.totalorder %s22, 1
    %p360 = scmp.ne.s32.totalorder %s355, %s357
    %p361 = scmp.eq.s32.totalorder %s22, 0
    %p362 = por %p360, %p361
    %p363 = scmp.ne.s32.totalorder %s355, %s357
    %p364 = scmp.eq.s32.totalorder %s27, 1
    %p365 = por %p363, %p364
    %p366 = scmp.ne.s32.totalorder %s357, %s358
    %p367 = scmp.eq.s32.totalorder %s27, 0
    %p368 = por %p366, %p367
    %p369 = scmp.ne.s32.totalorder %s357, %s358
    %p370 = scmp.eq.s32.totalorder %s28, 1
    %p371 = por %p369, %p370
    %p373 = scmp.ne.s32.totalorder %s358, %s372
    %p374 = scmp.eq.s32.totalorder %s28, 0
    %p375 = por %p373, %p374
    %s376 = ssub.s32 %s22, %s29
    %p377 = scmp.eq.s32.totalorder %s376, 0
    %s379 = sadd.s32 %s378, 1
    %s380 = scalar_select %p377, %s378, %s379
    %p383 = pneg %p377
    %p384 = scmp.eq.s32.totalorder %s22, 1
    %p385 = por %p383, %p384
    %p386 = scmp.ne.s32.totalorder %s378, %s381
    %p387 = scmp.eq.s32.totalorder %s22, 0
    %p388 = por %p386, %p387
    %p389 = scmp.ne.s32.totalorder %s378, %s381
    %p390 = scmp.eq.s32.totalorder %s27, 1
    %p391 = por %p389, %p390
    %p392 = scmp.ne.s32.totalorder %s381, %s382
    %p393 = scmp.eq.s32.totalorder %s27, 0
    %p394 = por %p392, %p393
    %p395 = scmp.ne.s32.totalorder %s381, %s382
    %p396 = scmp.eq.s32.totalorder %s28, 1
    %p397 = por %p395, %p396
    %p399 = scmp.ne.s32.totalorder %s382, %s398
    %p400 = scmp.eq.s32.totalorder %s28, 0
    %p401 = por %p399, %p400
    %p402 = scmp.le.s32.totalorder 1, %s22
    %p403 = scmp.lt.s32.totalorder %s22, 3
    %p404 = pnand %p402, %p403
    %p405 = pneg %p404
    // Predicated region
    $region9: #{down_pallas.1} parent=5 // pred_check
      _
    $region10: #{down_pallas.1} parent=5 // pred_check_branch
      %407 = sbr.rel (%p404) target = $region12
    $region11: #{down_pallas.1} parent=5 // pred_region
      %s408 = ssub.s32 %s22, 1
      // Predicated region
      $region13: #{down_pallas.1} parent=11 // pred_check
        %p409 = pneg %p95
      $region14: #{down_pallas.1} parent=11 // pred_check_branch
        %411 = sbr.rel (%p409) target = $region16
      $region15: #{down_pallas.1} parent=11 // pred_region
        _
      $region16: #{down_pallas.1} parent=11 // pred_fallthru
        _
      // Predicated region
      $region17: #{down_pallas.1} parent=11 // pred_check
        %p412 = pneg %p116
      $region18: #{down_pallas.1} parent=11 // pred_check_branch
        %414 = sbr.rel (%p412) target = $region20
      $region19: #{down_pallas.1} parent=11 // pred_region
        _
      $region20: #{down_pallas.1} parent=11 // pred_fallthru
        _
      // Predicated region
      $region21: #{down_pallas.1} parent=11 // pred_check
        %p415 = pneg %p137
      $region22: #{down_pallas.1} parent=11 // pred_check_branch
        %417 = sbr.rel (%p415) target = $region24
      $region23: #{down_pallas.1} parent=11 // pred_region
        _
      $region24: #{down_pallas.1} parent=11 // pred_fallthru
        _
      // Predicated region
      $region25: #{down_pallas.1} parent=11 // pred_check
        %p418 = pneg %p158
      $region26: #{down_pallas.1} parent=11 // pred_check_branch
        %420 = sbr.rel (%p418) target = $region28
      $region27: #{down_pallas.1} parent=11 // pred_region
        _
      $region28: #{down_pallas.1} parent=11 // pred_fallthru
        _
      // Predicated region
      $region29: #{down_pallas.1} parent=11 // pred_check
        %p421 = pneg %p179
      $region30: #{down_pallas.1} parent=11 // pred_check_branch
        %423 = sbr.rel (%p421) target = $region32
      $region31: #{down_pallas.1} parent=11 // pred_region
        _
      $region32: #{down_pallas.1} parent=11 // pred_fallthru
        _
      // Predicated region
      $region33: #{down_pallas.1} parent=11 // pred_check
        %p424 = pneg %p200
      $region34: #{down_pallas.1} parent=11 // pred_check_branch
        %426 = sbr.rel (%p424) target = $region36
      $region35: #{down_pallas.1} parent=11 // pred_region
        _
      $region36: #{down_pallas.1} parent=11 // pred_fallthru
        _
      // Predicated region
      $region37: #{down_pallas.1} parent=11 // pred_check
        %p427 = pneg %p221
      $region38: #{down_pallas.1} parent=11 // pred_check_branch
        %429 = sbr.rel (%p427) target = $region40
      $region39: #{down_pallas.1} parent=11 // pred_region
        _
      $region40: #{down_pallas.1} parent=11 // pred_fallthru
        _
      // Predicated region
      $region41: #{down_pallas.1} parent=11 // pred_check
        %p430 = pneg %p242
      $region42: #{down_pallas.1} parent=11 // pred_check_branch
        %432 = sbr.rel (%p430) target = $region44
      $region43: #{down_pallas.1} parent=11 // pred_region
        _
      $region44: #{down_pallas.1} parent=11 // pred_fallthru
        _
      // Predicated region
      $region45: #{down_pallas.1} parent=11 // pred_check
        %p433 = pneg %p263
      $region46: #{down_pallas.1} parent=11 // pred_check_branch
        %435 = sbr.rel (%p433) target = $region48
      $region47: #{down_pallas.1} parent=11 // pred_region
        _
      $region48: #{down_pallas.1} parent=11 // pred_fallthru
        _
      // Predicated region
      $region49: #{down_pallas.1} parent=11 // pred_check
        %p436 = pneg %p284
      $region50: #{down_pallas.1} parent=11 // pred_check_branch
        %438 = sbr.rel (%p436) target = $region52
      $region51: #{down_pallas.1} parent=11 // pred_region
        _
      $region52: #{down_pallas.1} parent=11 // pred_fallthru
        _
      // Predicated region
      $region53: #{down_pallas.1} parent=11 // pred_check
        %p439 = pneg %p305
      $region54: #{down_pallas.1} parent=11 // pred_check_branch
        %441 = sbr.rel (%p439) target = $region56
      $region55: #{down_pallas.1} parent=11 // pred_region
        _
      $region56: #{down_pallas.1} parent=11 // pred_fallthru
        _
      // Predicated region
      $region57: #{down_pallas.1} parent=11 // pred_check
        %p442 = pneg %p326
      $region58: #{down_pallas.1} parent=11 // pred_check_branch
        %444 = sbr.rel (%p442) target = $region60
      $region59: #{down_pallas.1} parent=11 // pred_region
        _
      $region60: #{down_pallas.1} parent=11 // pred_fallthru
        _
      // Predicated region
      $region61: #{down_pallas.1} parent=11 // pred_check
        %p445 = pneg %p347
      $region62: #{down_pallas.1} parent=11 // pred_check_branch
        %447 = sbr.rel (%p445) target = $region64
      $region63: #{down_pallas.1} parent=11 // pred_region
        _
      $region64: #{down_pallas.1} parent=11 // pred_fallthru
        _
      // Predicated region
      $region65: #{down_pallas.1} parent=11 // pred_check
        %p448 = pneg %p368
      $region66: #{down_pallas.1} parent=11 // pred_check_branch
        %450 = sbr.rel (%p448) target = $region68
      $region67: #{down_pallas.1} parent=11 // pred_region
        _
      $region68: #{down_pallas.1} parent=11 // pred_fallthru
        _
    $region12: #{down_pallas.1} parent=5 // pred_fallthru
      _
    %p451 = scmp.lt.s32.totalorder %s22, 2
    // Predicated region
    $region69: #{down_pallas.1} parent=5 // pred_check
      %p452 = pneg %p451
    $region70: #{down_pallas.1} parent=5 // pred_check_branch
      %454 = sbr.rel (%p452) target = $region72
    $region71: #{down_pallas.1} parent=5 // pred_region
      // Predicated region
      $region73: #{down_pallas.1} parent=71 // pred_check
        %p455 = pneg %p42
      $region74: #{down_pallas.1} parent=71 // pred_check_branch
        %457 = sbr.rel (%p455) target = $region76
      $region75: #{down_pallas.1} parent=71 // pred_region
        %p458 = scmp.lt.s32.totalorder %s22, 1
        %s459 = scalar_select %p458, %s22, 1
        %s460 = smul.addr %s459, 32
        %s461 = smul.addr %s460, 8
        %s462 = scalar_lea.vmem %s0, %s461
      $region76: #{down_pallas.1} parent=71 // pred_fallthru
        _
      // Predicated region
      $region77: #{down_pallas.1} parent=71 // pred_check
        %p463 = pneg %p68
      $region78: #{down_pallas.1} parent=71 // pred_check_branch
        %465 = sbr.rel (%p463) target = $region80
      $region79: #{down_pallas.1} parent=71 // pred_region
        %p466 = scmp.lt.s32.totalorder %s22, 1
        %s467 = scalar_select %p466, %s22, 1
        %s468 = scalar_lea.vmem %s1, %s467
      $region80: #{down_pallas.1} parent=71 // pred_fallthru
        _
    $region72: #{down_pallas.1} parent=5 // pred_fallthru
      _
    %p469 = scmp.le.s32.totalorder 1, %s22
    %p470 = scmp.lt.s32.totalorder %s22, 3
    %p471 = pnand %p469, %p470
    %p472 = pneg %p471
    // Predicated region
    $region81: #{down_pallas.1} parent=5 // pred_check
      _
    $region82: #{down_pallas.1} parent=5 // pred_check_branch
      %474 = sbr.rel (%p471) target = $region84
    $region83: #{down_pallas.1} parent=5 // pred_region
      %s475 = ssub.s32 %s22, 1
      %p476 = scmp.lt.s32.totalorder %s27, 1
      %s477 = scalar_select %p476, %s27, 1
      %s478 = smul.addr %s477, 32
      %s479 = smul.addr %s478, 8
      %s480 = scalar_lea.vmem %s0, %s479
      %p481 = pneg %p48
      %p482 = pneg %p45
      %p483 = scmp.lt.s32.totalorder %s27, 1
      %s484 = scalar_select %p483, %s27, 1
      %s485 = scalar_lea.vmem %s1, %s484
      %p486 = pneg %p74
      %p487 = pneg %p71
      %p488 = pneg %p95
      %p489 = pneg %p92
      %p490 = pneg %p116
      %p491 = pneg %p113
      %p492 = pneg %p137
      %p493 = pneg %p134
      %p494 = pneg %p158
      %p495 = pneg %p155
      %p496 = pneg %p179
      %p497 = pneg %p176
      %p498 = pneg %p200
      %p499 = pneg %p197
      %p500 = pneg %p221
      %p501 = pneg %p218
      %p502 = pneg %p242
      %p503 = pneg %p239
      %p504 = pneg %p263
      %p505 = pneg %p260
      %p506 = pneg %p284
      %p507 = pneg %p281
      %p508 = pneg %p305
      %p509 = pneg %p302
      %p510 = pneg %p326
      %p511 = pneg %p323
      %p512 = pneg %p347
      %p513 = pneg %p344
      %p514 = pneg %p368
      %p515 = pneg %p365
      %p516 = pneg %p394
      %p517 = pneg %p391
      %p518 = scmp.lt.s32.totalorder %s27, 1
      %s519 = scalar_select %p518, %s27, 1
      %s520 = smul.addr %s519, 8
      %s521 = smul.addr %s520, 8
      %s522 = scalar_lea.vmem %s16, %s521
      %p523 = scmp.lt.s32.totalorder %s27, 1
      %s524 = scalar_select %p523, %s27, 1
      %s525 = smul.addr %s524, 32
      %s526 = smul.addr %s525, 8
      %s527 = scalar_lea.vmem %s0, %s526
      %p528 = scmp.lt.s32.totalorder %s27, 1
      %s529 = scalar_select %p528, %s27, 1
      %s530 = scalar_lea.vmem %s1, %s529
      %p531 = scmp.lt.s32.totalorder %s27, 1
      %s532 = scalar_select %p531, %s27, 1
      %s533 = smul.addr %s532, 8
      %s534 = smul.addr %s533, 8
      %s535 = scalar_lea.vmem %s16, %s534
      %vm537 = vcmask 31744
      %538 = vst.msk [vmem:[#allocation2] sm:$0xff] %vm537, 0.0
      %vm539 = vcmask 25600
      %540 = vst.msk [vmem:[#allocation2 + $0x8] sm:$0x3] %vm539, 0.0
      %s541 = scalar_lea.vmem [#allocation2], 144
      %542 = vst.msk [vmem:[%s541] sm:$0xff] %vm537, 0.0
      %543 = vst.msk [vmem:[%s541 + $0x8] sm:$0x3] %vm539, 0.0
      %vm544 = vcmask 24576
      %545 = vst.msk [vmem:[#allocation2] sm:$0x1] %vm544, 0.0
      %546 = vst.msk [vmem:[#allocation2 + $0x10] sm:$0x1] %vm544, 0.0
      %547 = vst.msk [vmem:[#allocation2 + $0x20] sm:$0x1] %vm544, 0.0
      %548 = vst.msk [vmem:[#allocation2 + $0x30] sm:$0x1] %vm544, 0.0
      %549 = vst.msk [vmem:[#allocation2 + $0x40] sm:$0x1] %vm544, 0.0
      %550 = vst.msk [vmem:[#allocation2 + $0x50] sm:$0x1] %vm544, 0.0
      %551 = vst.msk [vmem:[#allocation2 + $0x60] sm:$0x1] %vm544, 0.0
      %552 = vst.msk [vmem:[#allocation2 + $0x70] sm:$0x1] %vm544, 0.0
      %553 = vst.msk [vmem:[#allocation2 + $0x80] sm:$0x1] %vm544, 0.0
      %554 = vst.msk [vmem:[#allocation2 + $0x90] sm:$0x1] %vm544, 0.0
      %555 = vst.msk [vmem:[#allocation2 + $0x9] sm:$0x1] %vm544, 0.0
      %556 = vst.msk [vmem:[#allocation2 + $0x19] sm:$0x1] %vm544, 0.0
      %557 = vst.msk [vmem:[#allocation2 + $0x29] sm:$0x1] %vm544, 0.0
      %558 = vst.msk [vmem:[#allocation2 + $0x39] sm:$0x1] %vm544, 0.0
      %559 = vst.msk [vmem:[#allocation2 + $0x49] sm:$0x1] %vm544, 0.0
      %560 = vst.msk [vmem:[#allocation2 + $0x59] sm:$0x1] %vm544, 0.0
      %561 = vst.msk [vmem:[#allocation2 + $0x69] sm:$0x1] %vm544, 0.0
      %562 = vst.msk [vmem:[#allocation2 + $0x79] sm:$0x1] %vm544, 0.0
      %563 = vst.msk [vmem:[#allocation2 + $0x89] sm:$0x1] %vm544, 0.0
      %564 = vst.msk [vmem:[#allocation2 + $0x99] sm:$0x1] %vm544, 0.0
      %vm565 = vcmask 64512
      %566 = vst.msk [vmem:[#allocation3] sm:$0xff] %vm565, 0.0
      %vm567 = vcmask 58368
      %568 = vst.msk [vmem:[#allocation3 + $0x8] sm:$0x3] %vm567, 0.0
      %s569 = scalar_lea.vmem [#allocation3], 144
      %570 = vst.msk [vmem:[%s569] sm:$0xff] %vm565, 0.0
      %571 = vst.msk [vmem:[%s569 + $0x8] sm:$0x3] %vm567, 0.0
      %vm572 = vcmask 57344
      %573 = vst.msk [vmem:[#allocation3] sm:$0x1] %vm572, 0.0
      %574 = vst.msk [vmem:[#allocation3 + $0x10] sm:$0x1] %vm572, 0.0
      %575 = vst.msk [vmem:[#allocation3 + $0x20] sm:$0x1] %vm572, 0.0
      %576 = vst.msk [vmem:[#allocation3 + $0x30] sm:$0x1] %vm572, 0.0
      %577 = vst.msk [vmem:[#allocation3 + $0x40] sm:$0x1] %vm572, 0.0
      %578 = vst.msk [vmem:[#allocation3 + $0x50] sm:$0x1] %vm572, 0.0
      %579 = vst.msk [vmem:[#allocation3 + $0x60] sm:$0x1] %vm572, 0.0
      %580 = vst.msk [vmem:[#allocation3 + $0x70] sm:$0x1] %vm572, 0.0
      %581 = vst.msk [vmem:[#allocation3 + $0x80] sm:$0x1] %vm572, 0.0
      %582 = vst.msk [vmem:[#allocation3 + $0x90] sm:$0x1] %vm572, 0.0
      %583 = vst.msk [vmem:[#allocation3 + $0x9] sm:$0x1] %vm572, 0.0
      %584 = vst.msk [vmem:[#allocation3 + $0x19] sm:$0x1] %vm572, 0.0
      %585 = vst.msk [vmem:[#allocation3 + $0x29] sm:$0x1] %vm572, 0.0
      %586 = vst.msk [vmem:[#allocation3 + $0x39] sm:$0x1] %vm572, 0.0
      %587 = vst.msk [vmem:[#allocation3 + $0x49] sm:$0x1] %vm572, 0.0
      %588 = vst.msk [vmem:[#allocation3 + $0x59] sm:$0x1] %vm572, 0.0
      %589 = vst.msk [vmem:[#allocation3 + $0x69] sm:$0x1] %vm572, 0.0
      %590 = vst.msk [vmem:[#allocation3 + $0x79] sm:$0x1] %vm572, 0.0
      %591 = vst.msk [vmem:[#allocation3 + $0x89] sm:$0x1] %vm572, 0.0
      %592 = vst.msk [vmem:[#allocation3 + $0x99] sm:$0x1] %vm572, 0.0
      %v593 = vld [vmem:[%s527] sm:$0xff]
      %v594 = vld [vmem:[%s527 + $0x8] sm:$0xff]
      %v595 = vld [vmem:[%s527 + $0x10] sm:$0xff]
      %v596 = vld [vmem:[%s527 + $0x18] sm:$0xff]
      %v597 = vld [vmem:[%s527 + $0x20] sm:$0xff]
      %v598 = vld [vmem:[%s527 + $0x28] sm:$0xff]
      %v599 = vld [vmem:[%s527 + $0x30] sm:$0xff]
      %v600 = vld [vmem:[%s527 + $0x38] sm:$0xff]
      %s601 = scalar_lea.vmem %s527, 64
      %v602 = vld [vmem:[%s601] sm:$0xff]
      %v603 = vld [vmem:[%s601 + $0x8] sm:$0xff]
      %v604 = vld [vmem:[%s601 + $0x10] sm:$0xff]
      %v605 = vld [vmem:[%s601 + $0x18] sm:$0xff]
      %v606 = vld [vmem:[%s601 + $0x20] sm:$0xff]
      %v607 = vld [vmem:[%s601 + $0x28] sm:$0xff]
      %v608 = vld [vmem:[%s601 + $0x30] sm:$0xff]
      %v609 = vld [vmem:[%s601 + $0x38] sm:$0xff]
      %v610 = vmax.f32 %v593, %v602
      %v611 = vmax.f32 %v594, %v603
      %v612 = vmax.f32 %v595, %v604
      %v613 = vmax.f32 %v596, %v605
      %v614 = vmax.f32 %v597, %v606
      %v615 = vmax.f32 %v598, %v607
      %v616 = vmax.f32 %v599, %v608
      %v617 = vmax.f32 %v600, %v609
      %s618 = scalar_lea.vmem %s527, 128
      %v619 = vld [vmem:[%s618] sm:$0xff]
      %v620 = vld [vmem:[%s618 + $0x8] sm:$0xff]
      %v621 = vld [vmem:[%s618 + $0x10] sm:$0xff]
      %v622 = vld [vmem:[%s618 + $0x18] sm:$0xff]
      %v623 = vld [vmem:[%s618 + $0x20] sm:$0xff]
      %v624 = vld [vmem:[%s618 + $0x28] sm:$0xff]
      %v625 = vld [vmem:[%s618 + $0x30] sm:$0xff]
      %v626 = vld [vmem:[%s618 + $0x38] sm:$0xff]
      %s627 = scalar_lea.vmem %s527, 192
      %v628 = vld [vmem:[%s627] sm:$0xff]
      %v629 = vld [vmem:[%s627 + $0x8] sm:$0xff]
      %v630 = vld [vmem:[%s627 + $0x10] sm:$0xff]
      %v631 = vld [vmem:[%s627 + $0x18] sm:$0xff]
      %v632 = vld [vmem:[%s627 + $0x20] sm:$0xff]
      %v633 = vld [vmem:[%s627 + $0x28] sm:$0xff]
      %v634 = vld [vmem:[%s627 + $0x30] sm:$0xff]
      %v635 = vld [vmem:[%s627 + $0x38] sm:$0xff]
      %v636 = vmax.f32 %v619, %v628
      %v637 = vmax.f32 %v620, %v629
      %v638 = vmax.f32 %v621, %v630
      %v639 = vmax.f32 %v622, %v631
      %v640 = vmax.f32 %v623, %v632
      %v641 = vmax.f32 %v624, %v633
      %v642 = vmax.f32 %v625, %v634
      %v643 = vmax.f32 %v626, %v635
      %v644 = vmax.f32 %v610, %v636
      %v645 = vmax.f32 %v611, %v637
      %v646 = vmax.f32 %v612, %v638
      %v647 = vmax.f32 %v613, %v639
      %v648 = vmax.f32 %v614, %v640
      %v649 = vmax.f32 %v615, %v641
      %v650 = vmax.f32 %v616, %v642
      %v651 = vmax.f32 %v617, %v643
      %s652 = scalar_lea.vmem [#allocation2], 16
      %653 = vst.msk [vmem:[%s652 + $0x1] sm:$0xff] %vm537, %v644
      %654 = vst.msk [vmem:[%s652 + $0x11] sm:$0xff] %vm537, %v645
      %655 = vst.msk [vmem:[%s652 + $0x21] sm:$0xff] %vm537, %v646
      %656 = vst.msk [vmem:[%s652 + $0x31] sm:$0xff] %vm537, %v647
      %657 = vst.msk [vmem:[%s652 + $0x41] sm:$0xff] %vm537, %v648
      %658 = vst.msk [vmem:[%s652 + $0x51] sm:$0xff] %vm537, %v649
      %659 = vst.msk [vmem:[%s652 + $0x61] sm:$0xff] %vm537, %v650
      %660 = vst.msk [vmem:[%s652 + $0x71] sm:$0xff] %vm537, %v651
      %v661 = vld [vmem:[#allocation2] sm:$0xff]
      %v662 = vld [vmem:[#allocation2 + $0x10] sm:$0xff]
      %v663 = vld [vmem:[#allocation2 + $0x20] sm:$0xff]
      %v664 = vld [vmem:[#allocation2 + $0x30] sm:$0xff]
      %v665 = vld [vmem:[#allocation2 + $0x40] sm:$0xff]
      %v666 = vld [vmem:[#allocation2 + $0x50] sm:$0xff]
      %v667 = vld [vmem:[#allocation2 + $0x60] sm:$0xff]
      %v668 = vld [vmem:[#allocation2 + $0x70] sm:$0xff]
      %v669 = vpack.c.bf16 %v662, %v661
      %v670 = vpack.c.bf16 %v664, %v663
      %v671 = vpack.c.bf16 %v666, %v665
      %v672 = vpack.c.bf16 %v668, %v667
      %v673 = vld [vmem:[%s2] sm:$0x3]
      %v674 = vld [vmem:[#allocation2 + $0x1] sm:$0xff]
      %v675 = vld [vmem:[#allocation2 + $0x11] sm:$0xff]
      %v676 = vld [vmem:[#allocation2 + $0x21] sm:$0xff]
      %v677 = vld [vmem:[#allocation2 + $0x31] sm:$0xff]
      %v678 = vld [vmem:[#allocation2 + $0x41] sm:$0xff]
      %v679 = vld [vmem:[#allocation2 + $0x51] sm:$0xff]
      %v680 = vld [vmem:[#allocation2 + $0x61] sm:$0xff]
      %v681 = vld [vmem:[#allocation2 + $0x71] sm:$0xff]
      %v682 = vpack.c.bf16 %v675, %v674
      %v683 = vpack.c.bf16 %v677, %v676
      %v684 = vpack.c.bf16 %v679, %v678
      %v685 = vpack.c.bf16 %v681, %v680
      %s686 = scalar_lea.vmem %s2, 2
      %v687 = vld [vmem:[%s686] sm:$0x3]
      %v689 = vsel %vm537, %v682, 0
      %v692 = vsel %vm537, %v683, 0
      %v695 = vsel %vm537, %v684, 0
      %v698 = vsel %vm537, %v685, 0
      %vm700 = vcmask 1041408
      %v702 = vsel %vm700, %v687, 0
      %704 = vmatprep.subr.bf16.mxu0 0
      %705 = vmatpush1.bf16.msra.mxu0 %v702
      %706 = vmatprep.subr.bf16.mxu0 0
      %707 = vmatpush1.bf16.msra.mxu0 0
      %708 = vmatprep.subr.bf16.mxu0 0
      %709 = vmatpush1.bf16.msra.mxu0 0
      %710 = vmatprep.subr.bf16.mxu0 0
      %711 = vmatpush1.bf16.msra.mxu0 0
      %712 = vmatprep.subr.bf16.mxu0 0
      %713 = vmatpush1.bf16.msra.mxu0 0
      %714 = vmatprep.subr.bf16.mxu0 0
      %715 = vmatpush1.bf16.msra.mxu0 0
      %716 = vmatprep.subr.bf16.mxu0 0
      %717 = vmatpush1.bf16.msra.mxu0 0
      %718 = vmatprep.subr.bf16.mxu0 0
      %719 = vmatpush1.bf16.msra.mxu0 0
      %720 = vmatprep.subr.bf16.mxu0 0
      %721 = vmatpush1.bf16.msra.mxu0 0
      %722 = vmatprep.subr.bf16.mxu0 0
      %723 = vmatpush1.bf16.msra.mxu0 0
      %724 = vmatprep.subr.bf16.mxu0 0
      %725 = vmatpush1.bf16.msra.mxu0 0
      %726 = vmatprep.subr.bf16.mxu0 0
      %727 = vmatpush1.bf16.msra.mxu0 0
      %728 = vmatprep.subr.bf16.mxu0 0
      %729 = vmatpush1.bf16.msra.mxu0 0
      %730 = vmatprep.subr.bf16.mxu0 0
      %731 = vmatpush1.bf16.msra.mxu0 0
      %732 = vmatprep.subr.bf16.mxu0 0
      %733 = vmatpush1.bf16.msra.mxu0 0
      %734 = vmatprep.subr.bf16.mxu0 0
      %735 = vmatpush1.bf16.msra.mxu0 0
      %736 = vmatprep.mubr.bf16.mxu0 0
      %737 = vmatmul.mubr.bf16.gmra.mrb[0].mxu0 %v689
      %v738 = vpop.f32.mrb[0].mxu0
      %v739 = vadd.f32 0.0, %v738
      %v740 = vpop.f32.mrb[0].mxu0
      %v741 = vpop.f32.mrb[0].mxu0
      %v742 = vadd.f32 0.0, %v741
      %v743 = vpop.f32.mrb[0].mxu0
      %744 = vmatprep.mubr.bf16.mxu0 0
      %745 = vmatmul.mubr.bf16.gmra.mrb[0].mxu0 %v692
      %v746 = vpop.f32.mrb[0].mxu0
      %v747 = vadd.f32 0.0, %v746
      %v748 = vpop.f32.mrb[0].mxu0
      %v749 = vpop.f32.mrb[0].mxu0
      %v750 = vadd.f32 0.0, %v749
      %v751 = vpop.f32.mrb[0].mxu0
      %752 = vmatprep.mubr.bf16.mxu0 0
      %753 = vmatmul.mubr.bf16.gmra.mrb[0].mxu0 %v695
      %v754 = vpop.f32.mrb[0].mxu0
      %v755 = vadd.f32 0.0, %v754
      %v756 = vpop.f32.mrb[0].mxu0
      %v757 = vpop.f32.mrb[0].mxu0
      %v758 = vadd.f32 0.0, %v757
      %v759 = vpop.f32.mrb[0].mxu0
      %760 = vmatprep.mubr.bf16.mxu0 0
      %761 = vmatmul.mubr.bf16.gmra.mrb[0].mxu0 %v698
      %v762 = vpop.f32.mrb[0].mxu0
      %v763 = vadd.f32 0.0, %v762
      %v764 = vpop.f32.mrb[0].mxu0
      %v765 = vpop.f32.mrb[0].mxu0
      %v766 = vadd.f32 0.0, %v765
      %v767 = vpop.f32.mrb[0].mxu0
      %768 = vdwg.mxu0
      %v770 = vsel %vm537, %v669, 0
      %v773 = vsel %vm537, %v670, 0
      %v776 = vsel %vm537, %v671, 0
      %v779 = vsel %vm537, %v672, 0
      %v782 = vsel %vm700, %v673, 0
      %784 = vmatprep.subr.bf16.mxu0 0
      %785 = vmatpush1.bf16.msra.mxu0 %v782
      %786 = vmatprep.subr.bf16.mxu0 0
      %787 = vmatpush1.bf16.msra.mxu0 0
      %788 = vmatprep.subr.bf16.mxu0 0
      %789 = vmatpush1.bf16.msra.mxu0 0
      %790 = vmatprep.subr.bf16.mxu0 0
      %791 = vmatpush1.bf16.msra.mxu0 0
      %792 = vmatprep.subr.bf16.mxu0 0
      %793 = vmatpush1.bf16.msra.mxu0 0
      %794 = vmatprep.subr.bf16.mxu0 0
      %795 = vmatpush1.bf16.msra.mxu0 0
      %796 = vmatprep.subr.bf16.mxu0 0
      %797 = vmatpush1.bf16.msra.mxu0 0
      %798 = vmatprep.subr.bf16.mxu0 0
      %799 = vmatpush1.bf16.msra.mxu0 0
      %800 = vmatprep.subr.bf16.mxu0 0
      %801 = vmatpush1.bf16.msra.mxu0 0
      %802 = vmatprep.subr.bf16.mxu0 0
      %803 = vmatpush1.bf16.msra.mxu0 0
      %804 = vmatprep.subr.bf16.mxu0 0
      %805 = vmatpush1.bf16.msra.mxu0 0
      %806 = vmatprep.subr.bf16.mxu0 0
      %807 = vmatpush1.bf16.msra.mxu0 0
      %808 = vmatprep.subr.bf16.mxu0 0
      %809 = vmatpush1.bf16.msra.mxu0 0
      %810 = vmatprep.subr.bf16.mxu0 0
      %811 = vmatpush1.bf16.msra.mxu0 0
      %812 = vmatprep.subr.bf16.mxu0 0
      %813 = vmatpush1.bf16.msra.mxu0 0
      %814 = vmatprep.subr.bf16.mxu0 0
      %815 = vmatpush1.bf16.msra.mxu0 0
      %816 = vmatprep.mubr.bf16.mxu0 0
      %817 = vmatmul.mubr.bf16.gmra.mrb[0].mxu0 %v770
      %v818 = vpop.f32.mrb[0].mxu0
      %v819 = vadd.f32 %v739, %v818
      %v820 = vpop.f32.mrb[0].mxu0
      %v821 = vpop.f32.mrb[0].mxu0
      %v822 = vadd.f32 %v742, %v821
      %v823 = vpop.f32.mrb[0].mxu0
      %824 = vmatprep.mubr.bf16.mxu0 0
      %825 = vmatmul.mubr.bf16.gmra.mrb[0].mxu0 %v773
      %v826 = vpop.f32.mrb[0].mxu0
      %v827 = vadd.f32 %v747, %v826
      %v828 = vpop.f32.mrb[0].mxu0
      %v829 = vpop.f32.mrb[0].mxu0
      %v830 = vadd.f32 %v750, %v829
      %v831 = vpop.f32.mrb[0].mxu0
      %832 = vmatprep.mubr.bf16.mxu0 0
      %833 = vmatmul.mubr.bf16.gmra.mrb[0].mxu0 %v776
      %v834 = vpop.f32.mrb[0].mxu0
      %v835 = vadd.f32 %v755, %v834
      %v836 = vpop.f32.mrb[0].mxu0
      %v837 = vpop.f32.mrb[0].mxu0
      %v838 = vadd.f32 %v758, %v837
      %v839 = vpop.f32.mrb[0].mxu0
      %840 = vmatprep.mubr.bf16.mxu0 0
      %841 = vmatmul.mubr.bf16.gmra.mrb[0].mxu0 %v779
      %v842 = vpop.f32.mrb[0].mxu0
      %v843 = vadd.f32 %v763, %v842
      %v844 = vpop.f32.mrb[0].mxu0
      %v845 = vpop.f32.mrb[0].mxu0
      %v846 = vadd.f32 %v766, %v845
      %v847 = vpop.f32.mrb[0].mxu0
      %848 = vdwg.mxu0
      %v849 = vld [vmem:[#allocation2 + $0x2] sm:$0xff]
      %v850 = vld [vmem:[#allocation2 + $0x12] sm:$0xff]
      %v851 = vld [vmem:[#allocation2 + $0x22] sm:$0xff]
      %v852 = vld [vmem:[#allocation2 + $0x32] sm:$0xff]
      %v853 = vld [vmem:[#allocation2 + $0x42] sm:$0xff]
      %v854 = vld [vmem:[#allocation2 + $0x52] sm:$0xff]
      %v855 = vld [vmem:[#allocation2 + $0x62] sm:$0xff]
      %v856 = vld [vmem:[#allocation2 + $0x72] sm:$0xff]
      %v857 = vpack.c.bf16 %v850, %v849
      %v858 = vpack.c.bf16 %v852, %v851
      %v859 = vpack.c.bf16 %v854, %v853
      %v860 = vpack.c.bf16 %v856, %v855
      %s861 = scalar_lea.vmem %s2, 4
      %v862 = vld [vmem:[%s861] sm:$0x3]
      %v864 = vsel %vm537, %v857, 0
      %v867 = vsel %vm537, %v858, 0
      %v870 = vsel %vm537, %v859, 0
      %v873 = vsel %vm537, %v860, 0
      %v876 = vsel %vm700, %v862, 0
      %878 = vmatprep.subr.bf16.mxu0 0
      %879 = vmatpush1.bf16.msra.mxu0 %v876
      %880 = vmatprep.subr.bf16.mxu0 0
      %881 = vmatpush1.bf16.msra.mxu0 0
      %882 = vmatprep.subr.bf16.mxu0 0
      %883 = vmatpush1.bf16.msra.mxu0 0
      %884 = vmatprep.subr.bf16.mxu0 0
      %885 = vmatpush1.bf16.msra.mxu0 0
      %886 = vmatprep.subr.bf16.mxu0 0
      %887 = vmatpush1.bf16.msra.mxu0 0
      %888 = vmatprep.subr.bf16.mxu0 0
      %889 = vmatpush1.bf16.msra.mxu0 0
      %890 = vmatprep.subr.bf16.mxu0 0
      %891 = vmatpush1.bf16.msra.mxu0 0
      %892 = vmatprep.subr.bf16.mxu0 0
      %893 = vmatpush1.bf16.msra.mxu0 0
      %894 = vmatprep.subr.bf16.mxu0 0
      %895 = vmatpush1.bf16.msra.mxu0 0
      %896 = vmatprep.subr.bf16.mxu0 0
      %897 = vmatpush1.bf16.msra.mxu0 0
      %898 = vmatprep.subr.bf16.mxu0 0
      %899 = vmatpush1.bf16.msra.mxu0 0
      %900 = vmatprep.subr.bf16.mxu0 0
      %901 = vmatpush1.bf16.msra.mxu0 0
      %902 = vmatprep.subr.bf16.mxu0 0
      %903 = vmatpush1.bf16.msra.mxu0 0
      %904 = vmatprep.subr.bf16.mxu0 0
      %905 = vmatpush1.bf16.msra.mxu0 0
      %906 = vmatprep.subr.bf16.mxu0 0
      %907 = vmatpush1.bf16.msra.mxu0 0
      %908 = vmatprep.subr.bf16.mxu0 0
      %909 = vmatpush1.bf16.msra.mxu0 0
      %910 = vmatprep.mubr.bf16.mxu0 0
      %911 = vmatmul.mubr.bf16.gmra.mrb[0].mxu0 %v864
      %v912 = vpop.f32.mrb[0].mxu0
      %v913 = vadd.f32 0.0, %v912
      %v914 = vpop.f32.mrb[0].mxu0
      %v915 = vpop.f32.mrb[0].mxu0
      %v916 = vadd.f32 0.0, %v915
      %v917 = vpop.f32.mrb[0].mxu0
      %918 = vmatprep.mubr.bf16.mxu0 0
      %919 = vmatmul.mubr.bf16.gmra.mrb[0].mxu0 %v867
      %v920 = vpop.f32.mrb[0].mxu0
      %v921 = vadd.f32 0.0, %v920
      %v922 = vpop.f32.mrb[0].mxu0
      %v923 = vpop.f32.mrb[0].mxu0
      %v924 = vadd.f32 0.0, %v923
      %v925 = vpop.f32.mrb[0].mxu0
      %926 = vmatprep.mubr.bf16.mxu0 0
      %927 = vmatmul.mubr.bf16.gmra.mrb[0].mxu0 %v870
      %v928 = vpop.f32.mrb[0].mxu0
      %v929 = vadd.f32 0.0, %v928
      %v930 = vpop.f32.mrb[0].mxu0
      %v931 = vpop.f32.mrb[0].mxu0
      %v932 = vadd.f32 0.0, %v931
      %v933 = vpop.f32.mrb[0].mxu0
      %934 = vmatprep.mubr.bf16.mxu0 0
      %935 = vmatmul.mubr.bf16.gmra.mrb[0].mxu0 %v873
      %v936 = vpop.f32.mrb[0].mxu0
      %v937 = vadd.f32 0.0, %v936
      %v938 = vpop.f32.mrb[0].mxu0
      %v939 = vpop.f32.mrb[0].mxu0
      %v940 = vadd.f32 0.0, %v939
      %v941 = vpop.f32.mrb[0].mxu0
      %942 = vdwg.mxu0
      %v943 = vadd.f32 %v819, %v913
      %v944 = vadd.f32 %v822, %v916
      %v945 = vadd.f32 %v827, %v921
      %v946 = vadd.f32 %v830, %v924
      %v947 = vadd.f32 %v835, %v929
      %v948 = vadd.f32 %v838, %v932
      %v949 = vadd.f32 %v843, %v937
      %v950 = vadd.f32 %v846, %v940
      %v951 = vld [vmem:[%s652] sm:$0xff]
      %v952 = vld [vmem:[%s652 + $0x10] sm:$0xff]
      %v953 = vld [vmem:[%s652 + $0x20] sm:$0xff]
      %v954 = vld [vmem:[%s652 + $0x30] sm:$0xff]
      %v955 = vld [vmem:[%s652 + $0x40] sm:$0xff]
      %v956 = vld [vmem:[%s652 + $0x50] sm:$0xff]
      %v957 = vld [vmem:[%s652 + $0x60] sm:$0xff]
      %v958 = vld [vmem:[%s652 + $0x70] sm:$0xff]
      %v959 = vpack.c.bf16 %v952, %v951
      %v960 = vpack.c.bf16 %v954, %v953
      %v961 = vpack.c.bf16 %v956, %v955
      %v962 = vpack.c.bf16 %v958, %v957
      %s963 = scalar_lea.vmem %s2, 6
      %v964 = vld [vmem:[%s963] sm:$0x3]
      %v966 = vsel %vm537, %v959, 0
      %v969 = vsel %vm537, %v960, 0
      %v972 = vsel %vm537, %v961, 0
      %v975 = vsel %vm537, %v962, 0
      %v978 = vsel %vm700, %v964, 0
      %980 = vmatprep.subr.bf16.mxu0 0
      %981 = vmatpush1.bf16.msra.mxu0 %v978
      %982 = vmatprep.subr.bf16.mxu0 0
      %983 = vmatpush1.bf16.msra.mxu0 0
      %984 = vmatprep.subr.bf16.mxu0 0
      %985 = vmatpush1.bf16.msra.mxu0 0
      %986 = vmatprep.subr.bf16.mxu0 0
      %987 = vmatpush1.bf16.msra.mxu0 0
      %988 = vmatprep.subr.bf16.mxu0 0
      %989 = vmatpush1.bf16.msra.mxu0 0
      %990 = vmatprep.subr.bf16.mxu0 0
      %991 = vmatpush1.bf16.msra.mxu0 0
      %992 = vmatprep.subr.bf16.mxu0 0
      %993 = vmatpush1.bf16.msra.mxu0 0
      %994 = vmatprep.subr.bf16.mxu0 0
      %995 = vmatpush1.bf16.msra.mxu0 0
      %996 = vmatprep.subr.bf16.mxu0 0
      %997 = vmatpush1.bf16.msra.mxu0 0
      %998 = vmatprep.subr.bf16.mxu0 0
      %999 = vmatpush1.bf16.msra.mxu0 0
      %1000 = vmatprep.subr.bf16.mxu0 0
      %1001 = vmatpush1.bf16.msra.mxu0 0
      %1002 = vmatprep.subr.bf16.mxu0 0
      %1003 = vmatpush1.bf16.msra.mxu0 0
      %1004 = vmatprep.subr.bf16.mxu0 0
      %1005 = vmatpush1.bf16.msra.mxu0 0
      %1006 = vmatprep.subr.bf16.mxu0 0
      %1007 = vmatpush1.bf16.msra.mxu0 0
      %1008 = vmatprep.subr.bf16.mxu0 0
      %1009 = vmatpush1.bf16.msra.mxu0 0
      %1010 = vmatprep.subr.bf16.mxu0 0
      %1011 = vmatpush1.bf16.msra.mxu0 0
      %1012 = vmatprep.mubr.bf16.mxu0 0
      %1013 = vmatmul.mubr.bf16.gmra.mrb[0].mxu0 %v966
      %v1014 = vpop.f32.mrb[0].mxu0
      %v1015 = vadd.f32 0.0, %v1014
      %v1016 = vpop.f32.mrb[0].mxu0
      %v1017 = vpop.f32.mrb[0].mxu0
      %v1018 = vadd.f32 0.0, %v1017
      %v1019 = vpop.f32.mrb[0].mxu0
      %1020 = vmatprep.mubr.bf16.mxu0 0
      %1021 = vmatmul.mubr.bf16.gmra.mrb[0].mxu0 %v969
      %v1022 = vpop.f32.mrb[0].mxu0
      %v1023 = vadd.f32 0.0, %v1022
      %v1024 = vpop.f32.mrb[0].mxu0
      %v1025 = vpop.f32.mrb[0].mxu0
      %v1026 = vadd.f32 0.0, %v1025
      %v1027 = vpop.f32.mrb[0].mxu0
      %1028 = vmatprep.mubr.bf16.mxu0 0
      %1029 = vmatmul.mubr.bf16.gmra.mrb[0].mxu0 %v972
      %v1030 = vpop.f32.mrb[0].mxu0
      %v1031 = vadd.f32 0.0, %v1030
      %v1032 = vpop.f32.mrb[0].mxu0
      %v1033 = vpop.f32.mrb[0].mxu0
      %v1034 = vadd.f32 0.0, %v1033
      %v1035 = vpop.f32.mrb[0].mxu0
      %1036 = vmatprep.mubr.bf16.mxu0 0
      %1037 = vmatmul.mubr.bf16.gmra.mrb[0].mxu0 %v975
      %v1038 = vpop.f32.mrb[0].mxu0
      %v1039 = vadd.f32 0.0, %v1038
      %v1040 = vpop.f32.mrb[0].mxu0
      %v1041 = vpop.f32.mrb[0].mxu0
      %v1042 = vadd.f32 0.0, %v1041
      %v1043 = vpop.f32.mrb[0].mxu0
      %1044 = vdwg.mxu0
      %v1045 = vadd.f32 %v943, %v1015
      %v1046 = vadd.f32 %v944, %v1018
      %v1047 = vadd.f32 %v945, %v1023
      %v1048 = vadd.f32 %v946, %v1026
      %v1049 = vadd.f32 %v947, %v1031
      %v1050 = vadd.f32 %v948, %v1034
      %v1051 = vadd.f32 %v949, %v1039
      %v1052 = vadd.f32 %v950, %v1042
      %v1053 = vld [vmem:[%s652 + $0x1] sm:$0xff]
      %v1054 = vld [vmem:[%s652 + $0x11] sm:$0xff]
      %v1055 = vld [vmem:[%s652 + $0x21] sm:$0xff]
      %v1056 = vld [vmem:[%s652 + $0x31] sm:$0xff]
      %v1057 = vld [vmem:[%s652 + $0x41] sm:$0xff]
      %v1058 = vld [vmem:[%s652 + $0x51] sm:$0xff]
      %v1059 = vld [vmem:[%s652 + $0x61] sm:$0xff]
      %v1060 = vld [vmem:[%s652 + $0x71] sm:$0xff]
      %v1061 = vpack.c.bf16 %v1054, %v1053
      %v1062 = vpack.c.bf16 %v1056, %v1055
      %v1063 = vpack.c.bf16 %v1058, %v1057
      %v1064 = vpack.c.bf16 %v1060, %v1059
      %s1065 = scalar_lea.vmem %s2, 8
      %v1066 = vld [vmem:[%s1065] sm:$0x3]
      %v1068 = vsel %vm537, %v1061, 0
      %v1071 = vsel %vm537, %v1062, 0
      %v1074 = vsel %vm537, %v1063, 0
      %v1077 = vsel %vm537, %v1064, 0
      %v1080 = vsel %vm700, %v1066, 0
      %1082 = vmatprep.subr.bf16.mxu0 0
      %1083 = vmatpush1.bf16.msra.mxu0 %v1080
      %1084 = vmatprep.subr.bf16.mxu0 0
      %1085 = vmatpush1.bf16.msra.mxu0 0
      %1086 = vmatprep.subr.bf16.mxu0 0
      %1087 = vmatpush1.bf16.msra.mxu0 0
      %1088 = vmatprep.subr.bf16.mxu0 0
      %1089 = vmatpush1.bf16.msra.mxu0 0
      %1090 = vmatprep.subr.bf16.mxu0 0
      %1091 = vmatpush1.bf16.msra.mxu0 0
      %1092 = vmatprep.subr.bf16.mxu0 0
      %1093 = vmatpush1.bf16.msra.mxu0 0
      %1094 = vmatprep.subr.bf16.mxu0 0
      %1095 = vmatpush1.bf16.msra.mxu0 0
      %1096 = vmatprep.subr.bf16.mxu0 0
      %1097 = vmatpush1.bf16.msra.mxu0 0
      %1098 = vmatprep.subr.bf16.mxu0 0
      %1099 = vmatpush1.bf16.msra.mxu0 0
      %1100 = vmatprep.subr.bf16.mxu0 0
      %1101 = vmatpush1.bf16.msra.mxu0 0
      %1102 = vmatprep.subr.bf16.mxu0 0
      %1103 = vmatpush1.bf16.msra.mxu0 0
      %1104 = vmatprep.subr.bf16.mxu0 0
      %1105 = vmatpush1.bf16.msra.mxu0 0
      %1106 = vmatprep.subr.bf16.mxu0 0
      %1107 = vmatpush1.bf16.msra.mxu0 0
      %1108 = vmatprep.subr.bf16.mxu0 0
      %1109 = vmatpush1.bf16.msra.mxu0 0
      %1110 = vmatprep.subr.bf16.mxu0 0
      %1111 = vmatpush1.bf16.msra.mxu0 0
      %1112 = vmatprep.subr.bf16.mxu0 0
      %1113 = vmatpush1.bf16.msra.mxu0 0
      %1114 = vmatprep.mubr.bf16.mxu0 0
      %1115 = vmatmul.mubr.bf16.gmra.mrb[0].mxu0 %v1068
      %v1116 = vpop.f32.mrb[0].mxu0
      %v1117 = vadd.f32 0.0, %v1116
      %v1118 = vpop.f32.mrb[0].mxu0
      %v1119 = vpop.f32.mrb[0].mxu0
      %v1120 = vadd.f32 0.0, %v1119
      %v1121 = vpop.f32.mrb[0].mxu0
      %1122 = vmatprep.mubr.bf16.mxu0 0
      %1123 = vmatmul.mubr.bf16.gmra.mrb[0].mxu0 %v1071
      %v1124 = vpop.f32.mrb[0].mxu0
      %v1125 = vadd.f32 0.0, %v1124
      %v1126 = vpop.f32.mrb[0].mxu0
      %v1127 = vpop.f32.mrb[0].mxu0
      %v1128 = vadd.f32 0.0, %v1127
      %v1129 = vpop.f32.mrb[0].mxu0
      %1130 = vmatprep.mubr.bf16.mxu0 0
      %1131 = vmatmul.mubr.bf16.gmra.mrb[0].mxu0 %v1074
      %v1132 = vpop.f32.mrb[0].mxu0
      %v1133 = vadd.f32 0.0, %v1132
      %v1134 = vpop.f32.mrb[0].mxu0
      %v1135 = vpop.f32.mrb[0].mxu0
      %v1136 = vadd.f32 0.0, %v1135
      %v1137 = vpop.f32.mrb[0].mxu0
      %1138 = vmatprep.mubr.bf16.mxu0 0
      %1139 = vmatmul.mubr.bf16.gmra.mrb[0].mxu0 %v1077
      %v1140 = vpop.f32.mrb[0].mxu0
      %v1141 = vadd.f32 0.0, %v1140
      %v1142 = vpop.f32.mrb[0].mxu0
      %v1143 = vpop.f32.mrb[0].mxu0
      %v1144 = vadd.f32 0.0, %v1143
      %v1145 = vpop.f32.mrb[0].mxu0
      %1146 = vdwg.mxu0
      %v1147 = vadd.f32 %v1045, %v1117
      %v1148 = vadd.f32 %v1046, %v1120
      %v1149 = vadd.f32 %v1047, %v1125
      %v1150 = vadd.f32 %v1048, %v1128
      %v1151 = vadd.f32 %v1049, %v1133
      %v1152 = vadd.f32 %v1050, %v1136
      %v1153 = vadd.f32 %v1051, %v1141
      %v1154 = vadd.f32 %v1052, %v1144
      %v1155 = vld [vmem:[%s652 + $0x2] sm:$0xff]
      %v1156 = vld [vmem:[%s652 + $0x12] sm:$0xff]
      %v1157 = vld [vmem:[%s652 + $0x22] sm:$0xff]
      %v1158 = vld [vmem:[%s652 + $0x32] sm:$0xff]
      %v1159 = vld [vmem:[%s652 + $0x42] sm:$0xff]
      %v1160 = vld [vmem:[%s652 + $0x52] sm:$0xff]
      %v1161 = vld [vmem:[%s652 + $0x62] sm:$0xff]
      %v1162 = vld [vmem:[%s652 + $0x72] sm:$0xff]
      %v1163 = vpack.c.bf16 %v1156, %v1155
      %v1164 = vpack.c.bf16 %v1158, %v1157
      %v1165 = vpack.c.bf16 %v1160, %v1159
      %v1166 = vpack.c.bf16 %v1162, %v1161
      %s1167 = scalar_lea.vmem %s2, 10
      %v1168 = vld [vmem:[%s1167] sm:$0x3]
      %v1170 = vsel %vm537, %v1163, 0
      %v1173 = vsel %vm537, %v1164, 0
      %v1176 = vsel %vm537, %v1165, 0
      %v1179 = vsel %vm537, %v1166, 0
      %v1182 = vsel %vm700, %v1168, 0
      %1184 = vmatprep.subr.bf16.mxu0 0
      %1185 = vmatpush1.bf16.msra.mxu0 %v1182
      %1186 = vmatprep.subr.bf16.mxu0 0
      %1187 = vmatpush1.bf16.msra.mxu0 0
      %1188 = vmatprep.subr.bf16.mxu0 0
      %1189 = vmatpush1.bf16.msra.mxu0 0
      %1190 = vmatprep.subr.bf16.mxu0 0
      %1191 = vmatpush1.bf16.msra.mxu0 0
      %1192 = vmatprep.subr.bf16.mxu0 0
      %1193 = vmatpush1.bf16.msra.mxu0 0
      %1194 = vmatprep.subr.bf16.mxu0 0
      %1195 = vmatpush1.bf16.msra.mxu0 0
      %1196 = vmatprep.subr.bf16.mxu0 0
      %1197 = vmatpush1.bf16.msra.mxu0 0
      %1198 = vmatprep.subr.bf16.mxu0 0
      %1199 = vmatpush1.bf16.msra.mxu0 0
      %1200 = vmatprep.subr.bf16.mxu0 0
      %1201 = vmatpush1.bf16.msra.mxu0 0
      %1202 = vmatprep.subr.bf16.mxu0 0
      %1203 = vmatpush1.bf16.msra.mxu0 0
      %1204 = vmatprep.subr.bf16.mxu0 0
      %1205 = vmatpush1.bf16.msra.mxu0 0
      %1206 = vmatprep.subr.bf16.mxu0 0
      %1207 = vmatpush1.bf16.msra.mxu0 0
      %1208 = vmatprep.subr.bf16.mxu0 0
      %1209 = vmatpush1.bf16.msra.mxu0 0
      %1210 = vmatprep.subr.bf16.mxu0 0
      %1211 = vmatpush1.bf16.msra.mxu0 0
      %1212 = vmatprep.subr.bf16.mxu0 0
      %1213 = vmatpush1.bf16.msra.mxu0 0
      %1214 = vmatprep.subr.bf16.mxu0 0
      %1215 = vmatpush1.bf16.msra.mxu0 0
      %1216 = vmatprep.mubr.bf16.mxu0 0
      %1217 = vmatmul.mubr.bf16.gmra.mrb[0].mxu0 %v1170
      %v1218 = vpop.f32.mrb[0].mxu0
      %v1219 = vadd.f32 0.0, %v1218
      %v1220 = vpop.f32.mrb[0].mxu0
      %v1221 = vpop.f32.mrb[0].mxu0
      %v1222 = vadd.f32 0.0, %v1221
      %v1223 = vpop.f32.mrb[0].mxu0
      %1224 = vmatprep.mubr.bf16.mxu0 0
      %1225 = vmatmul.mubr.bf16.gmra.mrb[0].mxu0 %v1173
      %v1226 = vpop.f32.mrb[0].mxu0
      %v1227 = vadd.f32 0.0, %v1226
      %v1228 = vpop.f32.mrb[0].mxu0
      %v1229 = vpop.f32.mrb[0].mxu0
      %v1230 = vadd.f32 0.0, %v1229
      %v1231 = vpop.f32.mrb[0].mxu0
      %1232 = vmatprep.mubr.bf16.mxu0 0
      %1233 = vmatmul.mubr.bf16.gmra.mrb[0].mxu0 %v1176
      %v1234 = vpop.f32.mrb[0].mxu0
      %v1235 = vadd.f32 0.0, %v1234
      %v1236 = vpop.f32.mrb[0].mxu0
      %v1237 = vpop.f32.mrb[0].mxu0
      %v1238 = vadd.f32 0.0, %v1237
      %v1239 = vpop.f32.mrb[0].mxu0
      %1240 = vmatprep.mubr.bf16.mxu0 0
      %1241 = vmatmul.mubr.bf16.gmra.mrb[0].mxu0 %v1179
      %v1242 = vpop.f32.mrb[0].mxu0
      %v1243 = vadd.f32 0.0, %v1242
      %v1244 = vpop.f32.mrb[0].mxu0
      %v1245 = vpop.f32.mrb[0].mxu0
      %v1246 = vadd.f32 0.0, %v1245
      %v1247 = vpop.f32.mrb[0].mxu0
      %1248 = vdwg.mxu0
      %v1249 = vadd.f32 %v1147, %v1219
      %v1250 = vadd.f32 %v1148, %v1222
      %v1251 = vadd.f32 %v1149, %v1227
      %v1252 = vadd.f32 %v1150, %v1230
      %v1253 = vadd.f32 %v1151, %v1235
      %v1254 = vadd.f32 %v1152, %v1238
      %v1255 = vadd.f32 %v1153, %v1243
      %v1256 = vadd.f32 %v1154, %v1246
      %s1257 = scalar_lea.vmem [#allocation2], 32
      %v1258 = vld [vmem:[%s1257] sm:$0xff]
      %v1259 = vld [vmem:[%s1257 + $0x10] sm:$0xff]
      %v1260 = vld [vmem:[%s1257 + $0x20] sm:$0xff]
      %v1261 = vld [vmem:[%s1257 + $0x30] sm:$0xff]
      %v1262 = vld [vmem:[%s1257 + $0x40] sm:$0xff]
      %v1263 = vld [vmem:[%s1257 + $0x50] sm:$0xff]
      %v1264 = vld [vmem:[%s1257 + $0x60] sm:$0xff]
      %v1265 = vld [vmem:[%s1257 + $0x70] sm:$0xff]
      %v1266 = vpack.c.bf16 %v1259, %v1258
      %v1267 = vpack.c.bf16 %v1261, %v1260
      %v1268 = vpack.c.bf16 %v1263, %v1262
      %v1269 = vpack.c.bf16 %v1265, %v1264
      %s1270 = scalar_lea.vmem %s2, 12
      %v1271 = vld [vmem:[%s1270] sm:$0x3]
      %v1273 = vsel %vm537, %v1266, 0
      %v1276 = vsel %vm537, %v1267, 0
      %v1279 = vsel %vm537, %v1268, 0
      %v1282 = vsel %vm537, %v1269, 0
      %v1285 = vsel %vm700, %v1271, 0
      %1287 = vmatprep.subr.bf16.mxu0 0
      %1288 = vmatpush1.bf16.msra.mxu0 %v1285
      %1289 = vmatprep.subr.bf16.mxu0 0
      %1290 = vmatpush1.bf16.msra.mxu0 0
      %1291 = vmatprep.subr.bf16.mxu0 0
      %1292 = vmatpush1.bf16.msra.mxu0 0
      %1293 = vmatprep.subr.bf16.mxu0 0
      %1294 = vmatpush1.bf16.msra.mxu0 0
      %1295 = vmatprep.subr.bf16.mxu0 0
      %1296 = vmatpush1.bf16.msra.mxu0 0
      %1297 = vmatprep.subr.bf16.mxu0 0
      %1298 = vmatpush1.bf16.msra.mxu0 0
      %1299 = vmatprep.subr.bf16.mxu0 0
      %1300 = vmatpush1.bf16.msra.mxu0 0
      %1301 = vmatprep.subr.bf16.mxu0 0
      %1302 = vmatpush1.bf16.msra.mxu0 0
      %1303 = vmatprep.subr.bf16.mxu0 0
      %1304 = vmatpush1.bf16.msra.mxu0 0
      %1305 = vmatprep.subr.bf16.mxu0 0
      %1306 = vmatpush1.bf16.msra.mxu0 0
      %1307 = vmatprep.subr.bf16.mxu0 0
      %1308 = vmatpush1.bf16.msra.mxu0 0
      %1309 = vmatprep.subr.bf16.mxu0 0
      %1310 = vmatpush1.bf16.msra.mxu0 0
      %1311 = vmatprep.subr.bf16.mxu0 0
      %1312 = vmatpush1.bf16.msra.mxu0 0
      %1313 = vmatprep.subr.bf16.mxu0 0
      %1314 = vmatpush1.bf16.msra.mxu0 0
      %1315 = vmatprep.subr.bf16.mxu0 0
      %1316 = vmatpush1.bf16.msra.mxu0 0
      %1317 = vmatprep.subr.bf16.mxu0 0
      %1318 = vmatpush1.bf16.msra.mxu0 0
      %1319 = vmatprep.mubr.bf16.mxu0 0
      %1320 = vmatmul.mubr.bf16.gmra.mrb[0].mxu0 %v1273
      %v1321 = vpop.f32.mrb[0].mxu0
      %v1322 = vadd.f32 0.0, %v1321
      %v1323 = vpop.f32.mrb[0].mxu0
      %v1324 = vpop.f32.mrb[0].mxu0
      %v1325 = vadd.f32 0.0, %v1324
      %v1326 = vpop.f32.mrb[0].mxu0
      %1327 = vmatprep.mubr.bf16.mxu0 0
      %1328 = vmatmul.mubr.bf16.gmra.mrb[0].mxu0 %v1276
      %v1329 = vpop.f32.mrb[0].mxu0
      %v1330 = vadd.f32 0.0, %v1329
      %v1331 = vpop.f32.mrb[0].mxu0
      %v1332 = vpop.f32.mrb[0].mxu0
      %v1333 = vadd.f32 0.0, %v1332
      %v1334 = vpop.f32.mrb[0].mxu0
      %1335 = vmatprep.mubr.bf16.mxu0 0
      %1336 = vmatmul.mubr.bf16.gmra.mrb[0].mxu0 %v1279
      %v1337 = vpop.f32.mrb[0].mxu0
      %v1338 = vadd.f32 0.0, %v1337
      %v1339 = vpop.f32.mrb[0].mxu0
      %v1340 = vpop.f32.mrb[0].mxu0
      %v1341 = vadd.f32 0.0, %v1340
      %v1342 = vpop.f32.mrb[0].mxu0
      %1343 = vmatprep.mubr.bf16.mxu0 0
      %1344 = vmatmul.mubr.bf16.gmra.mrb[0].mxu0 %v1282
      %v1345 = vpop.f32.mrb[0].mxu0
      %v1346 = vadd.f32 0.0, %v1345
      %v1347 = vpop.f32.mrb[0].mxu0
      %v1348 = vpop.f32.mrb[0].mxu0
      %v1349 = vadd.f32 0.0, %v1348
      %v1350 = vpop.f32.mrb[0].mxu0
      %1351 = vdwg.mxu0
      %v1352 = vadd.f32 %v1249, %v1322
      %v1353 = vadd.f32 %v1250, %v1325
      %v1354 = vadd.f32 %v1251, %v1330
      %v1355 = vadd.f32 %v1252, %v1333
      %v1356 = vadd.f32 %v1253, %v1338
      %v1357 = vadd.f32 %v1254, %v1341
      %v1358 = vadd.f32 %v1255, %v1346
      %v1359 = vadd.f32 %v1256, %v1349
      %v1360 = vld [vmem:[%s1257 + $0x1] sm:$0xff]
      %v1361 = vld [vmem:[%s1257 + $0x11] sm:$0xff]
      %v1362 = vld [vmem:[%s1257 + $0x21] sm:$0xff]
      %v1363 = vld [vmem:[%s1257 + $0x31] sm:$0xff]
      %v1364 = vld [vmem:[%s1257 + $0x41] sm:$0xff]
      %v1365 = vld [vmem:[%s1257 + $0x51] sm:$0xff]
      %v1366 = vld [vmem:[%s1257 + $0x61] sm:$0xff]
      %v1367 = vld [vmem:[%s1257 + $0x71] sm:$0xff]
      %v1368 = vpack.c.bf16 %v1361, %v1360
      %v1369 = vpack.c.bf16 %v1363, %v1362
      %v1370 = vpack.c.bf16 %v1365, %v1364
      %v1371 = vpack.c.bf16 %v1367, %v1366
      %s1372 = scalar_lea.vmem %s2, 14
      %v1373 = vld [vmem:[%s1372] sm:$0x3]
      %v1375 = vsel %vm537, %v1368, 0
      %v1378 = vsel %vm537, %v1369, 0
      %v1381 = vsel %vm537, %v1370, 0
      %v1384 = vsel %vm537, %v1371, 0
      %v1387 = vsel %vm700, %v1373, 0
      %1389 = vmatprep.subr.bf16.mxu0 0
      %1390 = vmatpush1.bf16.msra.mxu0 %v1387
      %1391 = vmatprep.subr.bf16.mxu0 0
      %1392 = vmatpush1.bf16.msra.mxu0 0
      %1393 = vmatprep.subr.bf16.mxu0 0
      %1394 = vmatpush1.bf16.msra.mxu0 0
      %1395 = vmatprep.subr.bf16.mxu0 0
      %1396 = vmatpush1.bf16.msra.mxu0 0
      %1397 = vmatprep.subr.bf16.mxu0 0
      %1398 = vmatpush1.bf16.msra.mxu0 0
      %1399 = vmatprep.subr.bf16.mxu0 0
      %1400 = vmatpush1.bf16.msra.mxu0 0
      %1401 = vmatprep.subr.bf16.mxu0 0
      %1402 = vmatpush1.bf16.msra.mxu0 0
      %1403 = vmatprep.subr.bf16.mxu0 0
      %1404 = vmatpush1.bf16.msra.mxu0 0
      %1405 = vmatprep.subr.bf16.mxu0 0
      %1406 = vmatpush1.bf16.msra.mxu0 0
      %1407 = vmatprep.subr.bf16.mxu0 0
      %1408 = vmatpush1.bf16.msra.mxu0 0
      %1409 = vmatprep.subr.bf16.mxu0 0
      %1410 = vmatpush1.bf16.msra.mxu0 0
      %1411 = vmatprep.subr.bf16.mxu0 0
      %1412 = vmatpush1.bf16.msra.mxu0 0
      %1413 = vmatprep.subr.bf16.mxu0 0
      %1414 = vmatpush1.bf16.msra.mxu0 0
      %1415 = vmatprep.subr.bf16.mxu0 0
      %1416 = vmatpush1.bf16.msra.mxu0 0
      %1417 = vmatprep.subr.bf16.mxu0 0
      %1418 = vmatpush1.bf16.msra.mxu0 0
      %1419 = vmatprep.subr.bf16.mxu0 0
      %1420 = vmatpush1.bf16.msra.mxu0 0
      %1421 = vmatprep.mubr.bf16.mxu0 0
      %1422 = vmatmul.mubr.bf16.gmra.mrb[0].mxu0 %v1375
      %v1423 = vpop.f32.mrb[0].mxu0
      %v1424 = vadd.f32 0.0, %v1423
      %v1425 = vpop.f32.mrb[0].mxu0
      %v1426 = vpop.f32.mrb[0].mxu0
      %v1427 = vadd.f32 0.0, %v1426
      %v1428 = vpop.f32.mrb[0].mxu0
      %1429 = vmatprep.mubr.bf16.mxu0 0
      %1430 = vmatmul.mubr.bf16.gmra.mrb[0].mxu0 %v1378
      %v1431 = vpop.f32.mrb[0].mxu0
      %v1432 = vadd.f32 0.0, %v1431
      %v1433 = vpop.f32.mrb[0].mxu0
      %v1434 = vpop.f32.mrb[0].mxu0
      %v1435 = vadd.f32 0.0, %v1434
      %v1436 = vpop.f32.mrb[0].mxu0
      %1437 = vmatprep.mubr.bf16.mxu0 0
      %1438 = vmatmul.mubr.bf16.gmra.mrb[0].mxu0 %v1381
      %v1439 = vpop.f32.mrb[0].mxu0
      %v1440 = vadd.f32 0.0, %v1439
      %v1441 = vpop.f32.mrb[0].mxu0
      %v1442 = vpop.f32.mrb[0].mxu0
      %v1443 = vadd.f32 0.0, %v1442
      %v1444 = vpop.f32.mrb[0].mxu0
      %1445 = vmatprep.mubr.bf16.mxu0 0
      %1446 = vmatmul.mubr.bf16.gmra.mrb[0].mxu0 %v1384
      %v1447 = vpop.f32.mrb[0].mxu0
      %v1448 = vadd.f32 0.0, %v1447
      %v1449 = vpop.f32.mrb[0].mxu0
      %v1450 = vpop.f32.mrb[0].mxu0
      %v1451 = vadd.f32 0.0, %v1450
      %v1452 = vpop.f32.mrb[0].mxu0
      %1453 = vdwg.mxu0
      %v1454 = vadd.f32 %v1352, %v1424
      %v1455 = vadd.f32 %v1353, %v1427
      %v1456 = vadd.f32 %v1354, %v1432
      %v1457 = vadd.f32 %v1355, %v1435
      %v1458 = vadd.f32 %v1356, %v1440
      %v1459 = vadd.f32 %v1357, %v1443
      %v1460 = vadd.f32 %v1358, %v1448
      %v1461 = vadd.f32 %v1359, %v1451
      %v1462 = vld [vmem:[%s1257 + $0x2] sm:$0xff]
      %v1463 = vld [vmem:[%s1257 + $0x12] sm:$0xff]
      %v1464 = vld [vmem:[%s1257 + $0x22] sm:$0xff]
      %v1465 = vld [vmem:[%s1257 + $0x32] sm:$0xff]
      %v1466 = vld [vmem:[%s1257 + $0x42] sm:$0xff]
      %v1467 = vld [vmem:[%s1257 + $0x52] sm:$0xff]
      %v1468 = vld [vmem:[%s1257 + $0x62] sm:$0xff]
      %v1469 = vld [vmem:[%s1257 + $0x72] sm:$0xff]
      %v1470 = vpack.c.bf16 %v1463, %v1462
      %v1471 = vpack.c.bf16 %v1465, %v1464
      %v1472 = vpack.c.bf16 %v1467, %v1466
      %v1473 = vpack.c.bf16 %v1469, %v1468
      %s1474 = scalar_lea.vmem %s2, 16
      %v1475 = vld [vmem:[%s1474] sm:$0x3]
      %v1477 = vsel %vm537, %v1470, 0
      %v1480 = vsel %vm537, %v1471, 0
      %v1483 = vsel %vm537, %v1472, 0
      %v1486 = vsel %vm537, %v1473, 0
      %v1489 = vsel %vm700, %v1475, 0
      %1491 = vmatprep.subr.bf16.mxu0 0
      %1492 = vmatpush1.bf16.msra.mxu0 %v1489
      %1493 = vmatprep.subr.bf16.mxu0 0
      %1494 = vmatpush1.bf16.msra.mxu0 0
      %1495 = vmatprep.subr.bf16.mxu0 0
      %1496 = vmatpush1.bf16.msra.mxu0 0
      %1497 = vmatprep.subr.bf16.mxu0 0
      %1498 = vmatpush1.bf16.msra.mxu0 0
      %1499 = vmatprep.subr.bf16.mxu0 0
      %1500 = vmatpush1.bf16.msra.mxu0 0
      %1501 = vmatprep.subr.bf16.mxu0 0
      %1502 = vmatpush1.bf16.msra.mxu0 0
      %1503 = vmatprep.subr.bf16.mxu0 0
      %1504 = vmatpush1.bf16.msra.mxu0 0
      %1505 = vmatprep.subr.bf16.mxu0 0
      %1506 = vmatpush1.bf16.msra.mxu0 0
      %1507 = vmatprep.subr.bf16.mxu0 0
      %1508 = vmatpush1.bf16.msra.mxu0 0
      %1509 = vmatprep.subr.bf16.mxu0 0
      %1510 = vmatpush1.bf16.msra.mxu0 0
      %1511 = vmatprep.subr.bf16.mxu0 0
      %1512 = vmatpush1.bf16.msra.mxu0 0
      %1513 = vmatprep.subr.bf16.mxu0 0
      %1514 = vmatpush1.bf16.msra.mxu0 0
      %1515 = vmatprep.subr.bf16.mxu0 0
      %1516 = vmatpush1.bf16.msra.mxu0 0
      %1517 = vmatprep.subr.bf16.mxu0 0
      %1518 = vmatpush1.bf16.msra.mxu0 0
      %1519 = vmatprep.subr.bf16.mxu0 0
      %1520 = vmatpush1.bf16.msra.mxu0 0
      %1521 = vmatprep.subr.bf16.mxu0 0
      %1522 = vmatpush1.bf16.msra.mxu0 0
      %1523 = vmatprep.mubr.bf16.mxu0 0
      %1524 = vmatmul.mubr.bf16.gmra.mrb[0].mxu0 %v1477
      %v1525 = vpop.f32.mrb[0].mxu0
      %v1526 = vadd.f32 0.0, %v1525
      %v1527 = vpop.f32.mrb[0].mxu0
      %v1528 = vpop.f32.mrb[0].mxu0
      %v1529 = vadd.f32 0.0, %v1528
      %v1530 = vpop.f32.mrb[0].mxu0
      %1531 = vmatprep.mubr.bf16.mxu0 0
      %1532 = vmatmul.mubr.bf16.gmra.mrb[0].mxu0 %v1480
      %v1533 = vpop.f32.mrb[0].mxu0
      %v1534 = vadd.f32 0.0, %v1533
      %v1535 = vpop.f32.mrb[0].mxu0
      %v1536 = vpop.f32.mrb[0].mxu0
      %v1537 = vadd.f32 0.0, %v1536
      %v1538 = vpop.f32.mrb[0].mxu0
      %1539 = vmatprep.mubr.bf16.mxu0 0
      %1540 = vmatmul.mubr.bf16.gmra.mrb[0].mxu0 %v1483
      %v1541 = vpop.f32.mrb[0].mxu0
      %v1542 = vadd.f32 0.0, %v1541
      %v1543 = vpop.f32.mrb[0].mxu0
      %v1544 = vpop.f32.mrb[0].mxu0
      %v1545 = vadd.f32 0.0, %v1544
      %v1546 = vpop.f32.mrb[0].mxu0
      %1547 = vmatprep.mubr.bf16.mxu0 0
      %1548 = vmatmul.mubr.bf16.gmra.mrb[0].mxu0 %v1486
      %v1549 = vpop.f32.mrb[0].mxu0
      %v1550 = vadd.f32 0.0, %v1549
      %v1551 = vpop.f32.mrb[0].mxu0
      %v1552 = vpop.f32.mrb[0].mxu0
      %v1553 = vadd.f32 0.0, %v1552
      %v1554 = vpop.f32.mrb[0].mxu0
      %1555 = vdwg.mxu0
      %v1556 = vadd.f32 %v1454, %v1526
      %v1557 = vadd.f32 %v1455, %v1529
      %v1558 = vadd.f32 %v1456, %v1534
      %v1559 = vadd.f32 %v1457, %v1537
      %v1560 = vadd.f32 %v1458, %v1542
      %v1561 = vadd.f32 %v1459, %v1545
      %v1562 = vadd.f32 %v1460, %v1550
      %v1563 = vadd.f32 %v1461, %v1553
      %v1564 = vsel %vm537, %v1556, 0.0
      %v1565 = vsel %vm537, %v1557, 0.0
      %v1566 = vadd.f32 %v1564, %v1565
      %v1567 = vsel %vm537, %v1558, 0.0
      %v1568 = vadd.f32 %v1566, %v1567
      %v1569 = vsel %vm537, %v1559, 0.0
      %v1570 = vadd.f32 %v1568, %v1569
      %v1571 = vsel %vm537, %v1560, 0.0
      %v1572 = vadd.f32 %v1570, %v1571
      %v1573 = vsel %vm537, %v1561, 0.0
      %v1574 = vadd.f32 %v1572, %v1573
      %v1575 = vsel %vm537, %v1562, 0.0
      %v1576 = vadd.f32 %v1574, %v1575
      %v1577 = vsel %vm537, %v1563, 0.0
      %v1578 = vadd.f32 %v1576, %v1577
      %1579 = vadd.xlane.f32.xlu0 %v1578
      %v1580 = vpop.xlane.xlu0 %1579
      %v1581 = vrot.slane %v1580, 4
      %v1582 = vadd.f32 %v1580, %v1581
      %v1583 = vrot.slane %v1582, 2
      %v1584 = vadd.f32 %v1582, %v1583
      %v1585 = vrot.slane %v1584, 1
      %v1586 = vadd.f32 %v1584, %v1585
      %s1587 = vtos %v1586
      %v1588 = vrcp.pop 256.0
      %s1589 = vtos %v1588
      %s1590 = smul.f32 %s1587, %s1589
      %v1591 = vmul.f32 %v1556, %v1556
      %v1592 = vmul.f32 %v1557, %v1557
      %v1593 = vmul.f32 %v1558, %v1558
      %v1594 = vmul.f32 %v1559, %v1559
      %v1595 = vmul.f32 %v1560, %v1560
      %v1596 = vmul.f32 %v1561, %v1561
      %v1597 = vmul.f32 %v1562, %v1562
      %v1598 = vmul.f32 %v1563, %v1563
      %v1599 = vsel %vm537, %v1591, 0.0
      %v1600 = vsel %vm537, %v1592, 0.0
      %v1601 = vadd.f32 %v1599, %v1600
      %v1602 = vsel %vm537, %v1593, 0.0
      %v1603 = vadd.f32 %v1601, %v1602
      %v1604 = vsel %vm537, %v1594, 0.0
      %v1605 = vadd.f32 %v1603, %v1604
      %v1606 = vsel %vm537, %v1595, 0.0
      %v1607 = vadd.f32 %v1605, %v1606
      %v1608 = vsel %vm537, %v1596, 0.0
      %v1609 = vadd.f32 %v1607, %v1608
      %v1610 = vsel %vm537, %v1597, 0.0
      %v1611 = vadd.f32 %v1609, %v1610
      %v1612 = vsel %vm537, %v1598, 0.0
      %v1613 = vadd.f32 %v1611, %v1612
      %1614 = vadd.xlane.f32.xlu0 %v1613
      %v1615 = vpop.xlane.xlu0 %1614
      %v1616 = vrot.slane %v1615, 4
      %v1617 = vadd.f32 %v1615, %v1616
      %v1618 = vrot.slane %v1617, 2
      %v1619 = vadd.f32 %v1617, %v1618
      %v1620 = vrot.slane %v1619, 1
      %v1621 = vadd.f32 %v1619, %v1620
      %s1622 = vtos %v1621
      %v1623 = vrcp.pop 256.0
      %s1624 = vtos %v1623
      %s1625 = smul.f32 %s1622, %s1624
      %s1626 = smul.f32 %s1590, %s1590
      %s1627 = ssub.f32 %s1625, %s1626
      %s1628 = smax.f32 %s1627, 0.0
      %v1629 = vstv %s1590
      %v1630 = vsub.f32 %v1556, %v1629
      %v1631 = vsub.f32 %v1557, %v1629
      %v1632 = vsub.f32 %v1558, %v1629
      %v1633 = vsub.f32 %v1559, %v1629
      %v1634 = vsub.f32 %v1560, %v1629
      %v1635 = vsub.f32 %v1561, %v1629
      %v1636 = vsub.f32 %v1562, %v1629
      %v1637 = vsub.f32 %v1563, %v1629
      %s1638 = sadd.f32 %s1628, 1e-05
      %v1639 = vstv %s1638
      %v1640 = vrsqrt.pop %v1639
      %s1641 = vtos %v1640
      %v1642 = vstv %s1641
      %v1643 = vmul.f32 %v1630, %v1642
      %v1644 = vmul.f32 %v1631, %v1642
      %v1645 = vmul.f32 %v1632, %v1642
      %v1646 = vmul.f32 %v1633, %v1642
      %v1647 = vmul.f32 %v1634, %v1642
      %v1648 = vmul.f32 %v1635, %v1642
      %v1649 = vmul.f32 %v1636, %v1642
      %v1650 = vmul.f32 %v1637, %v1642
      %v1651 = vld [vmem:[%s3] sm:$0x1]
      %v1653 = vlaneseq
      %v1654 = vshrl.u32 %v1653, 7
      %v1655 = vsub.s32 0, %v1654
      %v1656 = vrot.slane %v1651, %v1655
      %v1658 = vmul.f32 %v1643, %v1656
      %v1659 = vmul.f32 %v1644, %v1656
      %v1660 = vmul.f32 %v1645, %v1656
      %v1661 = vmul.f32 %v1646, %v1656
      %v1662 = vmul.f32 %v1647, %v1656
      %v1663 = vmul.f32 %v1648, %v1656
      %v1664 = vmul.f32 %v1649, %v1656
      %v1665 = vmul.f32 %v1650, %v1656
      %v1666 = vld [vmem:[%s4] sm:$0x1]
      %v1668 = vlaneseq
      %v1669 = vshrl.u32 %v1668, 7
      %v1670 = vsub.s32 0, %v1669
      %v1671 = vrot.slane %v1666, %v1670
      %v1673 = vadd.f32 %v1658, %v1671
      %v1674 = vadd.f32 %v1659, %v1671
      %v1675 = vadd.f32 %v1660, %v1671
      %v1676 = vadd.f32 %v1661, %v1671
      %v1677 = vadd.f32 %v1662, %v1671
      %v1678 = vadd.f32 %v1663, %v1671
      %v1679 = vadd.f32 %v1664, %v1671
      %v1680 = vadd.f32 %v1665, %v1671
      %v1681 = vmul.f32 %v1673, 0.5
      %v1682 = vmul.f32 %v1674, 0.5
      %v1683 = vmul.f32 %v1675, 0.5
      %v1684 = vmul.f32 %v1676, 0.5
      %v1685 = vmul.f32 %v1677, 0.5
      %v1686 = vmul.f32 %v1678, 0.5
      %v1687 = vmul.f32 %v1679, 0.5
      %v1688 = vmul.f32 %v1680, 0.5
      %v1689 = vmul.f32 %v1673, 0.70710677
      %v1690 = vmul.f32 %v1674, 0.70710677
      %v1691 = vmul.f32 %v1675, 0.70710677
      %v1692 = vmul.f32 %v1676, 0.70710677
      %v1693 = vmul.f32 %v1677, 0.70710677
      %v1694 = vmul.f32 %v1678, 0.70710677
      %v1695 = vmul.f32 %v1679, 0.70710677
      %v1696 = vmul.f32 %v1680, 0.70710677
      %v1697 = verf.f32.pop %v1689
      %v1698 = verf.f32.pop %v1690
      %v1699 = verf.f32.pop %v1691
      %v1700 = verf.f32.pop %v1692
      %v1701 = verf.f32.pop %v1693
      %v1702 = verf.f32.pop %v1694
      %v1703 = verf.f32.pop %v1695
      %v1704 = verf.f32.pop %v1696
      %v1705 = vadd.f32 %v1697, 1.0
      %v1706 = vadd.f32 %v1698, 1.0
      %v1707 = vadd.f32 %v1699, 1.0
      %v1708 = vadd.f32 %v1700, 1.0
      %v1709 = vadd.f32 %v1701, 1.0
      %v1710 = vadd.f32 %v1702, 1.0
      %v1711 = vadd.f32 %v1703, 1.0
      %v1712 = vadd.f32 %v1704, 1.0
      %v1713 = vmul.f32 %v1681, %v1705
      %v1714 = vmul.f32 %v1682, %v1706
      %v1715 = vmul.f32 %v1683, %v1707
      %v1716 = vmul.f32 %v1684, %v1708
      %v1717 = vmul.f32 %v1685, %v1709
      %v1718 = vmul.f32 %v1686, %v1710
      %v1719 = vmul.f32 %v1687, %v1711
      %v1720 = vmul.f32 %v1688, %v1712
      %1721 = vst.msk [vmem:[%s652 + $0x1] sm:$0xff] %vm537, %v1713
      %1722 = vst.msk [vmem:[%s652 + $0x11] sm:$0xff] %vm537, %v1714
      %1723 = vst.msk [vmem:[%s652 + $0x21] sm:$0xff] %vm537, %v1715
      %1724 = vst.msk [vmem:[%s652 + $0x31] sm:$0xff] %vm537, %v1716
      %1725 = vst.msk [vmem:[%s652 + $0x41] sm:$0xff] %vm537, %v1717
      %1726 = vst.msk [vmem:[%s652 + $0x51] sm:$0xff] %vm537, %v1718
      %1727 = vst.msk [vmem:[%s652 + $0x61] sm:$0xff] %vm537, %v1719
      %1728 = vst.msk [vmem:[%s652 + $0x71] sm:$0xff] %vm537, %v1720
      %v1729 = vld [vmem:[#allocation2] sm:$0xff]
      %v1730 = vld [vmem:[#allocation2 + $0x10] sm:$0xff]
      %v1731 = vld [vmem:[#allocation2 + $0x20] sm:$0xff]
      %v1732 = vld [vmem:[#allocation2 + $0x30] sm:$0xff]
      %v1733 = vld [vmem:[#allocation2 + $0x40] sm:$0xff]
      %v1734 = vld [vmem:[#allocation2 + $0x50] sm:$0xff]
      %v1735 = vld [vmem:[#allocation2 + $0x60] sm:$0xff]
      %v1736 = vld [vmem:[#allocation2 + $0x70] sm:$0xff]
      %v1737 = vpack.c.bf16 %v1730, %v1729
      %v1738 = vpack.c.bf16 %v1732, %v1731
      %v1739 = vpack.c.bf16 %v1734, %v1733
      %v1740 = vpack.c.bf16 %v1736, %v1735
      %v1741 = vld [vmem:[%s5] sm:$0x3]
      %v1742 = vld [vmem:[#allocation2 + $0x1] sm:$0xff]
      %v1743 = vld [vmem:[#allocation2 + $0x11] sm:$0xff]
      %v1744 = vld [vmem:[#allocation2 + $0x21] sm:$0xff]
      %v1745 = vld [vmem:[#allocation2 + $0x31] sm:$0xff]
      %v1746 = vld [vmem:[#allocation2 + $0x41] sm:$0xff]
      %v1747 = vld [vmem:[#allocation2 + $0x51] sm:$0xff]
      %v1748 = vld [vmem:[#allocation2 + $0x61] sm:$0xff]
      %v1749 = vld [vmem:[#allocation2 + $0x71] sm:$0xff]
      %v1750 = vpack.c.bf16 %v1743, %v1742
      %v1751 = vpack.c.bf16 %v1745, %v1744
      %v1752 = vpack.c.bf16 %v1747, %v1746
      %v1753 = vpack.c.bf16 %v1749, %v1748
      %s1754 = scalar_lea.vmem %s5, 2
      %v1755 = vld [vmem:[%s1754] sm:$0x3]
      %v1757 = vsel %vm537, %v1750, 0
      %v1760 = vsel %vm537, %v1751, 0
      %v1763 = vsel %vm537, %v1752, 0
      %v1766 = vsel %vm537, %v1753, 0
      %v1769 = vsel %vm700, %v1755, 0
      %1771 = vmatprep.subr.bf16.mxu0 0
      %1772 = vmatpush1.bf16.msra.mxu0 %v1769
      %1773 = vmatprep.subr.bf16.mxu0 0
      %1774 = vmatpush1.bf16.msra.mxu0 0
      %1775 = vmatprep.subr.bf16.mxu0 0
      %1776 = vmatpush1.bf16.msra.mxu0 0
      %1777 = vmatprep.subr.bf16.mxu0 0
      %1778 = vmatpush1.bf16.msra.mxu0 0
      %1779 = vmatprep.subr.bf16.mxu0 0
      %1780 = vmatpush1.bf16.msra.mxu0 0
      %1781 = vmatprep.subr.bf16.mxu0 0
      %1782 = vmatpush1.bf16.msra.mxu0 0
      %1783 = vmatprep.subr.bf16.mxu0 0
      %1784 = vmatpush1.bf16.msra.mxu0 0
      %1785 = vmatprep.subr.bf16.mxu0 0
      %1786 = vmatpush1.bf16.msra.mxu0 0
      %1787 = vmatprep.subr.bf16.mxu0 0
      %1788 = vmatpush1.bf16.msra.mxu0 0
      %1789 = vmatprep.subr.bf16.mxu0 0
      %1790 = vmatpush1.bf16.msra.mxu0 0
      %1791 = vmatprep.subr.bf16.mxu0 0
      %1792 = vmatpush1.bf16.msra.mxu0 0
      %1793 = vmatprep.subr.bf16.mxu0 0
      %1794 = vmatpush1.bf16.msra.mxu0 0
      %1795 = vmatprep.subr.bf16.mxu0 0
      %1796 = vmatpush1.bf16.msra.mxu0 0
      %1797 = vmatprep.subr.bf16.mxu0 0
      %1798 = vmatpush1.bf16.msra.mxu0 0
      %1799 = vmatprep.subr.bf16.mxu0 0
      %1800 = vmatpush1.bf16.msra.mxu0 0
      %1801 = vmatprep.subr.bf16.mxu0 0
      %1802 = vmatpush1.bf16.msra.mxu0 0
      %1803 = vmatprep.mubr.bf16.mxu0 0
      %1804 = vmatmul.mubr.bf16.gmra.mrb[0].mxu0 %v1757
      %v1805 = vpop.f32.mrb[0].mxu0
      %v1806 = vadd.f32 0.0, %v1805
      %v1807 = vpop.f32.mrb[0].mxu0
      %v1808 = vpop.f32.mrb[0].mxu0
      %v1809 = vadd.f32 0.0, %v1808
      %v1810 = vpop.f32.mrb[0].mxu0
      %1811 = vmatprep.mubr.bf16.mxu0 0
      %1812 = vmatmul.mubr.bf16.gmra.mrb[0].mxu0 %v1760
      %v1813 = vpop.f32.mrb[0].mxu0
      %v1814 = vadd.f32 0.0, %v1813
      %v1815 = vpop.f32.mrb[0].mxu0
      %v1816 = vpop.f32.mrb[0].mxu0
      %v1817 = vadd.f32 0.0, %v1816
      %v1818 = vpop.f32.mrb[0].mxu0
      %1819 = vmatprep.mubr.bf16.mxu0 0
      %1820 = vmatmul.mubr.bf16.gmra.mrb[0].mxu0 %v1763
      %v1821 = vpop.f32.mrb[0].mxu0
      %v1822 = vadd.f32 0.0, %v1821
      %v1823 = vpop.f32.mrb[0].mxu0
      %v1824 = vpop.f32.mrb[0].mxu0
      %v1825 = vadd.f32 0.0, %v1824
      %v1826 = vpop.f32.mrb[0].mxu0
      %1827 = vmatprep.mubr.bf16.mxu0 0
      %1828 = vmatmul.mubr.bf16.gmra.mrb[0].mxu0 %v1766
      %v1829 = vpop.f32.mrb[0].mxu0
      %v1830 = vadd.f32 0.0, %v1829
      %v1831 = vpop.f32.mrb[0].mxu0
      %v1832 = vpop.f32.mrb[0].mxu0
      %v1833 = vadd.f32 0.0, %v1832
      %v1834 = vpop.f32.mrb[0].mxu0
      %1835 = vdwg.mxu0
      %v1837 = vsel %vm537, %v1737, 0
      %v1840 = vsel %vm537, %v1738, 0
      %v1843 = vsel %vm537, %v1739, 0
      %v1846 = vsel %vm537, %v1740, 0
      %v1849 = vsel %vm700, %v1741, 0
      %1851 = vmatprep.subr.bf16.mxu0 0
      %1852 = vmatpush1.bf16.msra.mxu0 %v1849
      %1853 = vmatprep.subr.bf16.mxu0 0
      %1854 = vmatpush1.bf16.msra.mxu0 0
      %1855 = vmatprep.subr.bf16.mxu0 0
      %1856 = vmatpush1.bf16.msra.mxu0 0
      %1857 = vmatprep.subr.bf16.mxu0 0
      %1858 = vmatpush1.bf16.msra.mxu0 0
      %1859 = vmatprep.subr.bf16.mxu0 0
      %1860 = vmatpush1.bf16.msra.mxu0 0
      %1861 = vmatprep.subr.bf16.mxu0 0
      %1862 = vmatpush1.bf16.msra.mxu0 0
      %1863 = vmatprep.subr.bf16.mxu0 0
      %1864 = vmatpush1.bf16.msra.mxu0 0
      %1865 = vmatprep.subr.bf16.mxu0 0
      %1866 = vmatpush1.bf16.msra.mxu0 0
      %1867 = vmatprep.subr.bf16.mxu0 0
      %1868 = vmatpush1.bf16.msra.mxu0 0
      %1869 = vmatprep.subr.bf16.mxu0 0
      %1870 = vmatpush1.bf16.msra.mxu0 0
      %1871 = vmatprep.subr.bf16.mxu0 0
      %1872 = vmatpush1.bf16.msra.mxu0 0
      %1873 = vmatprep.subr.bf16.mxu0 0
      %1874 = vmatpush1.bf16.msra.mxu0 0
      %1875 = vmatprep.subr.bf16.mxu0 0
      %1876 = vmatpush1.bf16.msra.mxu0 0
      %1877 = vmatprep.subr.bf16.mxu0 0
      %1878 = vmatpush1.bf16.msra.mxu0 0
      %1879 = vmatprep.subr.bf16.mxu0 0
      %1880 = vmatpush1.bf16.msra.mxu0 0
      %1881 = vmatprep.subr.bf16.mxu0 0
      %1882 = vmatpush1.bf16.msra.mxu0 0
      %1883 = vmatprep.mubr.bf16.mxu0 0
      %1884 = vmatmul.mubr.bf16.gmra.mrb[0].mxu0 %v1837
      %v1885 = vpop.f32.mrb[0].mxu0
      %v1886 = vadd.f32 %v1806, %v1885
      %v1887 = vpop.f32.mrb[0].mxu0
      %v1888 = vpop.f32.mrb[0].mxu0
      %v1889 = vadd.f32 %v1809, %v1888
      %v1890 = vpop.f32.mrb[0].mxu0
      %1891 = vmatprep.mubr.bf16.mxu0 0
      %1892 = vmatmul.mubr.bf16.gmra.mrb[0].mxu0 %v1840
      %v1893 = vpop.f32.mrb[0].mxu0
      %v1894 = vadd.f32 %v1814, %v1893
      %v1895 = vpop.f32.mrb[0].mxu0
      %v1896 = vpop.f32.mrb[0].mxu0
      %v1897 = vadd.f32 %v1817, %v1896
      %v1898 = vpop.f32.mrb[0].mxu0
      %1899 = vmatprep.mubr.bf16.mxu0 0
      %1900 = vmatmul.mubr.bf16.gmra.mrb[0].mxu0 %v1843
      %v1901 = vpop.f32.mrb[0].mxu0
      %v1902 = vadd.f32 %v1822, %v1901
      %v1903 = vpop.f32.mrb[0].mxu0
      %v1904 = vpop.f32.mrb[0].mxu0
      %v1905 = vadd.f32 %v1825, %v1904
      %v1906 = vpop.f32.mrb[0].mxu0
      %1907 = vmatprep.mubr.bf16.mxu0 0
      %1908 = vmatmul.mubr.bf16.gmra.mrb[0].mxu0 %v1846
      %v1909 = vpop.f32.mrb[0].mxu0
      %v1910 = vadd.f32 %v1830, %v1909
      %v1911 = vpop.f32.mrb[0].mxu0
      %v1912 = vpop.f32.mrb[0].mxu0
      %v1913 = vadd.f32 %v1833, %v1912
      %v1914 = vpop.f32.mrb[0].mxu0
      %1915 = vdwg.mxu0
      %v1916 = vld [vmem:[#allocation2 + $0x2] sm:$0xff]
      %v1917 = vld [vmem:[#allocation2 + $0x12] sm:$0xff]
      %v1918 = vld [vmem:[#allocation2 + $0x22] sm:$0xff]
      %v1919 = vld [vmem:[#allocation2 + $0x32] sm:$0xff]
      %v1920 = vld [vmem:[#allocation2 + $0x42] sm:$0xff]
      %v1921 = vld [vmem:[#allocation2 + $0x52] sm:$0xff]
      %v1922 = vld [vmem:[#allocation2 + $0x62] sm:$0xff]
      %v1923 = vld [vmem:[#allocation2 + $0x72] sm:$0xff]
      %v1924 = vpack.c.bf16 %v1917, %v1916
      %v1925 = vpack.c.bf16 %v1919, %v1918
      %v1926 = vpack.c.bf16 %v1921, %v1920
      %v1927 = vpack.c.bf16 %v1923, %v1922
      %s1928 = scalar_lea.vmem %s5, 4
      %v1929 = vld [vmem:[%s1928] sm:$0x3]
      %v1931 = vsel %vm537, %v1924, 0
      %v1934 = vsel %vm537, %v1925, 0
      %v1937 = vsel %vm537, %v1926, 0
      %v1940 = vsel %vm537, %v1927, 0
      %v1943 = vsel %vm700, %v1929, 0
      %1945 = vmatprep.subr.bf16.mxu0 0
      %1946 = vmatpush1.bf16.msra.mxu0 %v1943
      %1947 = vmatprep.subr.bf16.mxu0 0
      %1948 = vmatpush1.bf16.msra.mxu0 0
      %1949 = vmatprep.subr.bf16.mxu0 0
      %1950 = vmatpush1.bf16.msra.mxu0 0
      %1951 = vmatprep.subr.bf16.mxu0 0
      %1952 = vmatpush1.bf16.msra.mxu0 0
      %1953 = vmatprep.subr.bf16.mxu0 0
      %1954 = vmatpush1.bf16.msra.mxu0 0
      %1955 = vmatprep.subr.bf16.mxu0 0
      %1956 = vmatpush1.bf16.msra.mxu0 0
      %1957 = vmatprep.subr.bf16.mxu0 0
      %1958 = vmatpush1.bf16.msra.mxu0 0
      %1959 = vmatprep.subr.bf16.mxu0 0
      %1960 = vmatpush1.bf16.msra.mxu0 0
      %1961 = vmatprep.subr.bf16.mxu0 0
      %1962 = vmatpush1.bf16.msra.mxu0 0
      %1963 = vmatprep.subr.bf16.mxu0 0
      %1964 = vmatpush1.bf16.msra.mxu0 0
      %1965 = vmatprep.subr.bf16.mxu0 0
      %1966 = vmatpush1.bf16.msra.mxu0 0
      %1967 = vmatprep.subr.bf16.mxu0 0
      %1968 = vmatpush1.bf16.msra.mxu0 0
      %1969 = vmatprep.subr.bf16.mxu0 0
      %1970 = vmatpush1.bf16.msra.mxu0 0
      %1971 = vmatprep.subr.bf16.mxu0 0
      %1972 = vmatpush1.bf16.msra.mxu0 0
      %1973 = vmatprep.subr.bf16.mxu0 0
      %1974 = vmatpush1.bf16.msra.mxu0 0
      %1975 = vmatprep.subr.bf16.mxu0 0
      %1976 = vmatpush1.bf16.msra.mxu0 0
      %1977 = vmatprep.mubr.bf16.mxu0 0
      %1978 = vmatmul.mubr.bf16.gmra.mrb[0].mxu0 %v1931
      %v1979 = vpop.f32.mrb[0].mxu0
      %v1980 = vadd.f32 0.0, %v1979
      %v1981 = vpop.f32.mrb[0].mxu0
      %v1982 = vpop.f32.mrb[0].mxu0
      %v1983 = vadd.f32 0.0, %v1982
      %v1984 = vpop.f32.mrb[0].mxu0
      %1985 = vmatprep.mubr.bf16.mxu0 0
      %1986 = vmatmul.mubr.bf16.gmra.mrb[0].mxu0 %v1934
      %v1987 = vpop.f32.mrb[0].mxu0
      %v1988 = vadd.f32 0.0, %v1987
      %v1989 = vpop.f32.mrb[0].mxu0
      %v1990 = vpop.f32.mrb[0].mxu0
      %v1991 = vadd.f32 0.0, %v1990
      %v1992 = vpop.f32.mrb[0].mxu0
      %1993 = vmatprep.mubr.bf16.mxu0 0
      %1994 = vmatmul.mubr.bf16.gmra.mrb[0].mxu0 %v1937
      %v1995 = vpop.f32.mrb[0].mxu0
      %v1996 = vadd.f32 0.0, %v1995
      %v1997 = vpop.f32.mrb[0].mxu0
      %v1998 = vpop.f32.mrb[0].mxu0
      %v1999 = vadd.f32 0.0, %v1998
      %v2000 = vpop.f32.mrb[0].mxu0
      %2001 = vmatprep.mubr.bf16.mxu0 0
      %2002 = vmatmul.mubr.bf16.gmra.mrb[0].mxu0 %v1940
      %v2003 = vpop.f32.mrb[0].mxu0
      %v2004 = vadd.f32 0.0, %v2003
      %v2005 = vpop.f32.mrb[0].mxu0
      %v2006 = vpop.f32.mrb[0].mxu0
      %v2007 = vadd.f32 0.0, %v2006
      %v2008 = vpop.f32.mrb[0].mxu0
      %2009 = vdwg.mxu0
      %v2010 = vadd.f32 %v1886, %v1980
      %v2011 = vadd.f32 %v1889, %v1983
      %v2012 = vadd.f32 %v1894, %v1988
      %v2013 = vadd.f32 %v1897, %v1991
      %v2014 = vadd.f32 %v1902, %v1996
      %v2015 = vadd.f32 %v1905, %v1999
      %v2016 = vadd.f32 %v1910, %v2004
      %v2017 = vadd.f32 %v1913, %v2007
      %v2018 = vld [vmem:[%s652] sm:$0xff]
      %v2019 = vld [vmem:[%s652 + $0x10] sm:$0xff]
      %v2020 = vld [vmem:[%s652 + $0x20] sm:$0xff]
      %v2021 = vld [vmem:[%s652 + $0x30] sm:$0xff]
      %v2022 = vld [vmem:[%s652 + $0x40] sm:$0xff]
      %v2023 = vld [vmem:[%s652 + $0x50] sm:$0xff]
      %v2024 = vld [vmem:[%s652 + $0x60] sm:$0xff]
      %v2025 = vld [vmem:[%s652 + $0x70] sm:$0xff]
      %v2026 = vpack.c.bf16 %v2019, %v2018
      %v2027 = vpack.c.bf16 %v2021, %v2020
      %v2028 = vpack.c.bf16 %v2023, %v2022
      %v2029 = vpack.c.bf16 %v2025, %v2024
      %s2030 = scalar_lea.vmem %s5, 6
      %v2031 = vld [vmem:[%s2030] sm:$0x3]
      %v2033 = vsel %vm537, %v2026, 0
      %v2036 = vsel %vm537, %v2027, 0
      %v2039 = vsel %vm537, %v2028, 0
      %v2042 = vsel %vm537, %v2029, 0
      %v2045 = vsel %vm700, %v2031, 0
      %2047 = vmatprep.subr.bf16.mxu0 0
      %2048 = vmatpush1.bf16.msra.mxu0 %v2045
      %2049 = vmatprep.subr.bf16.mxu0 0
      %2050 = vmatpush1.bf16.msra.mxu0 0
      %2051 = vmatprep.subr.bf16.mxu0 0
      %2052 = vmatpush1.bf16.msra.mxu0 0
      %2053 = vmatprep.subr.bf16.mxu0 0
      %2054 = vmatpush1.bf16.msra.mxu0 0
      %2055 = vmatprep.subr.bf16.mxu0 0
      %2056 = vmatpush1.bf16.msra.mxu0 0
      %2057 = vmatprep.subr.bf16.mxu0 0
      %2058 = vmatpush1.bf16.msra.mxu0 0
      %2059 = vmatprep.subr.bf16.mxu0 0
      %2060 = vmatpush1.bf16.msra.mxu0 0
      %2061 = vmatprep.subr.bf16.mxu0 0
      %2062 = vmatpush1.bf16.msra.mxu0 0
      %2063 = vmatprep.subr.bf16.mxu0 0
      %2064 = vmatpush1.bf16.msra.mxu0 0
      %2065 = vmatprep.subr.bf16.mxu0 0
      %2066 = vmatpush1.bf16.msra.mxu0 0
      %2067 = vmatprep.subr.bf16.mxu0 0
      %2068 = vmatpush1.bf16.msra.mxu0 0
      %2069 = vmatprep.subr.bf16.mxu0 0
      %2070 = vmatpush1.bf16.msra.mxu0 0
      %2071 = vmatprep.subr.bf16.mxu0 0
      %2072 = vmatpush1.bf16.msra.mxu0 0
      %2073 = vmatprep.subr.bf16.mxu0 0
      %2074 = vmatpush1.bf16.msra.mxu0 0
      %2075 = vmatprep.subr.bf16.mxu0 0
      %2076 = vmatpush1.bf16.msra.mxu0 0
      %2077 = vmatprep.subr.bf16.mxu0 0
      %2078 = vmatpush1.bf16.msra.mxu0 0
      %2079 = vmatprep.mubr.bf16.mxu0 0
      %2080 = vmatmul.mubr.bf16.gmra.mrb[0].mxu0 %v2033
      %v2081 = vpop.f32.mrb[0].mxu0
      %v2082 = vadd.f32 0.0, %v2081
      %v2083 = vpop.f32.mrb[0].mxu0
      %v2084 = vpop.f32.mrb[0].mxu0
      %v2085 = vadd.f32 0.0, %v2084
      %v2086 = vpop.f32.mrb[0].mxu0
      %2087 = vmatprep.mubr.bf16.mxu0 0
      %2088 = vmatmul.mubr.bf16.gmra.mrb[0].mxu0 %v2036
      %v2089 = vpop.f32.mrb[0].mxu0
      %v2090 = vadd.f32 0.0, %v2089
      %v2091 = vpop.f32.mrb[0].mxu0
      %v2092 = vpop.f32.mrb[0].mxu0
      %v2093 = vadd.f32 0.0, %v2092
      %v2094 = vpop.f32.mrb[0].mxu0
      %2095 = vmatprep.mubr.bf16.mxu0 0
      %2096 = vmatmul.mubr.bf16.gmra.mrb[0].mxu0 %v2039
      %v2097 = vpop.f32.mrb[0].mxu0
      %v2098 = vadd.f32 0.0, %v2097
      %v2099 = vpop.f32.mrb[0].mxu0
      %v2100 = vpop.f32.mrb[0].mxu0
      %v2101 = vadd.f32 0.0, %v2100
      %v2102 = vpop.f32.mrb[0].mxu0
      %2103 = vmatprep.mubr.bf16.mxu0 0
      %2104 = vmatmul.mubr.bf16.gmra.mrb[0].mxu0 %v2042
      %v2105 = vpop.f32.mrb[0].mxu0
      %v2106 = vadd.f32 0.0, %v2105
      %v2107 = vpop.f32.mrb[0].mxu0
      %v2108 = vpop.f32.mrb[0].mxu0
      %v2109 = vadd.f32 0.0, %v2108
      %v2110 = vpop.f32.mrb[0].mxu0
      %2111 = vdwg.mxu0
      %v2112 = vadd.f32 %v2010, %v2082
      %v2113 = vadd.f32 %v2011, %v2085
      %v2114 = vadd.f32 %v2012, %v2090
      %v2115 = vadd.f32 %v2013, %v2093
      %v2116 = vadd.f32 %v2014, %v2098
      %v2117 = vadd.f32 %v2015, %v2101
      %v2118 = vadd.f32 %v2016, %v2106
      %v2119 = vadd.f32 %v2017, %v2109
      %v2120 = vld [vmem:[%s652 + $0x1] sm:$0xff]
      %v2121 = vld [vmem:[%s652 + $0x11] sm:$0xff]
      %v2122 = vld [vmem:[%s652 + $0x21] sm:$0xff]
      %v2123 = vld [vmem:[%s652 + $0x31] sm:$0xff]
      %v2124 = vld [vmem:[%s652 + $0x41] sm:$0xff]
      %v2125 = vld [vmem:[%s652 + $0x51] sm:$0xff]
      %v2126 = vld [vmem:[%s652 + $0x61] sm:$0xff]
      %v2127 = vld [vmem:[%s652 + $0x71] sm:$0xff]
      %v2128 = vpack.c.bf16 %v2121, %v2120
      %v2129 = vpack.c.bf16 %v2123, %v2122
      %v2130 = vpack.c.bf16 %v2125, %v2124
      %v2131 = vpack.c.bf16 %v2127, %v2126
      %s2132 = scalar_lea.vmem %s5, 8
      %v2133 = vld [vmem:[%s2132] sm:$0x3]
      %v2135 = vsel %vm537, %v2128, 0
      %v2138 = vsel %vm537, %v2129, 0
      %v2141 = vsel %vm537, %v2130, 0
      %v2144 = vsel %vm537, %v2131, 0
      %v2147 = vsel %vm700, %v2133, 0
      %2149 = vmatprep.subr.bf16.mxu0 0
      %2150 = vmatpush1.bf16.msra.mxu0 %v2147
      %2151 = vmatprep.subr.bf16.mxu0 0
      %2152 = vmatpush1.bf16.msra.mxu0 0
      %2153 = vmatprep.subr.bf16.mxu0 0
      %2154 = vmatpush1.bf16.msra.mxu0 0
      %2155 = vmatprep.subr.bf16.mxu0 0
      %2156 = vmatpush1.bf16.msra.mxu0 0
      %2157 = vmatprep.subr.bf16.mxu0 0
      %2158 = vmatpush1.bf16.msra.mxu0 0
      %2159 = vmatprep.subr.bf16.mxu0 0
      %2160 = vmatpush1.bf16.msra.mxu0 0
      %2161 = vmatprep.subr.bf16.mxu0 0
      %2162 = vmatpush1.bf16.msra.mxu0 0
      %2163 = vmatprep.subr.bf16.mxu0 0
      %2164 = vmatpush1.bf16.msra.mxu0 0
      %2165 = vmatprep.subr.bf16.mxu0 0
      %2166 = vmatpush1.bf16.msra.mxu0 0
      %2167 = vmatprep.subr.bf16.mxu0 0
      %2168 = vmatpush1.bf16.msra.mxu0 0
      %2169 = vmatprep.subr.bf16.mxu0 0
      %2170 = vmatpush1.bf16.msra.mxu0 0
      %2171 = vmatprep.subr.bf16.mxu0 0
      %2172 = vmatpush1.bf16.msra.mxu0 0
      %2173 = vmatprep.subr.bf16.mxu0 0
      %2174 = vmatpush1.bf16.msra.mxu0 0
      %2175 = vmatprep.subr.bf16.mxu0 0
      %2176 = vmatpush1.bf16.msra.mxu0 0
      %2177 = vmatprep.subr.bf16.mxu0 0
      %2178 = vmatpush1.bf16.msra.mxu0 0
      %2179 = vmatprep.subr.bf16.mxu0 0
      %2180 = vmatpush1.bf16.msra.mxu0 0
      %2181 = vmatprep.mubr.bf16.mxu0 0
      %2182 = vmatmul.mubr.bf16.gmra.mrb[0].mxu0 %v2135
      %v2183 = vpop.f32.mrb[0].mxu0
      %v2184 = vadd.f32 0.0, %v2183
      %v2185 = vpop.f32.mrb[0].mxu0
      %v2186 = vpop.f32.mrb[0].mxu0
      %v2187 = vadd.f32 0.0, %v2186
      %v2188 = vpop.f32.mrb[0].mxu0
      %2189 = vmatprep.mubr.bf16.mxu0 0
      %2190 = vmatmul.mubr.bf16.gmra.mrb[0].mxu0 %v2138
      %v2191 = vpop.f32.mrb[0].mxu0
      %v2192 = vadd.f32 0.0, %v2191
      %v2193 = vpop.f32.mrb[0].mxu0
      %v2194 = vpop.f32.mrb[0].mxu0
      %v2195 = vadd.f32 0.0, %v2194
      %v2196 = vpop.f32.mrb[0].mxu0
      %2197 = vmatprep.mubr.bf16.mxu0 0
      %2198 = vmatmul.mubr.bf16.gmra.mrb[0].mxu0 %v2141
      %v2199 = vpop.f32.mrb[0].mxu0
      %v2200 = vadd.f32 0.0, %v2199
      %v2201 = vpop.f32.mrb[0].mxu0
      %v2202 = vpop.f32.mrb[0].mxu0
      %v2203 = vadd.f32 0.0, %v2202
      %v2204 = vpop.f32.mrb[0].mxu0
      %2205 = vmatprep.mubr.bf16.mxu0 0
      %2206 = vmatmul.mubr.bf16.gmra.mrb[0].mxu0 %v2144
      %v2207 = vpop.f32.mrb[0].mxu0
      %v2208 = vadd.f32 0.0, %v2207
      %v2209 = vpop.f32.mrb[0].mxu0
      %v2210 = vpop.f32.mrb[0].mxu0
      %v2211 = vadd.f32 0.0, %v2210
      %v2212 = vpop.f32.mrb[0].mxu0
      %2213 = vdwg.mxu0
      %v2214 = vadd.f32 %v2112, %v2184
      %v2215 = vadd.f32 %v2113, %v2187
      %v2216 = vadd.f32 %v2114, %v2192
      %v2217 = vadd.f32 %v2115, %v2195
      %v2218 = vadd.f32 %v2116, %v2200
      %v2219 = vadd.f32 %v2117, %v2203
      %v2220 = vadd.f32 %v2118, %v2208
      %v2221 = vadd.f32 %v2119, %v2211
      %v2222 = vld [vmem:[%s652 + $0x2] sm:$0xff]
      %v2223 = vld [vmem:[%s652 + $0x12] sm:$0xff]
      %v2224 = vld [vmem:[%s652 + $0x22] sm:$0xff]
      %v2225 = vld [vmem:[%s652 + $0x32] sm:$0xff]
      %v2226 = vld [vmem:[%s652 + $0x42] sm:$0xff]
      %v2227 = vld [vmem:[%s652 + $0x52] sm:$0xff]
      %v2228 = vld [vmem:[%s652 + $0x62] sm:$0xff]
      %v2229 = vld [vmem:[%s652 + $0x72] sm:$0xff]
      %v2230 = vpack.c.bf16 %v2223, %v2222
      %v2231 = vpack.c.bf16 %v2225, %v2224
      %v2232 = vpack.c.bf16 %v2227, %v2226
      %v2233 = vpack.c.bf16 %v2229, %v2228
      %s2234 = scalar_lea.vmem %s5, 10
      %v2235 = vld [vmem:[%s2234] sm:$0x3]
      %v2237 = vsel %vm537, %v2230, 0
      %v2240 = vsel %vm537, %v2231, 0
      %v2243 = vsel %vm537, %v2232, 0
      %v2246 = vsel %vm537, %v2233, 0
      %v2249 = vsel %vm700, %v2235, 0
      %2251 = vmatprep.subr.bf16.mxu0 0
      %2252 = vmatpush1.bf16.msra.mxu0 %v2249
      %2253 = vmatprep.subr.bf16.mxu0 0
      %2254 = vmatpush1.bf16.msra.mxu0 0
      %2255 = vmatprep.subr.bf16.mxu0 0
      %2256 = vmatpush1.bf16.msra.mxu0 0
      %2257 = vmatprep.subr.bf16.mxu0 0
      %2258 = vmatpush1.bf16.msra.mxu0 0
      %2259 = vmatprep.subr.bf16.mxu0 0
      %2260 = vmatpush1.bf16.msra.mxu0 0
      %2261 = vmatprep.subr.bf16.mxu0 0
      %2262 = vmatpush1.bf16.msra.mxu0 0
      %2263 = vmatprep.subr.bf16.mxu0 0
      %2264 = vmatpush1.bf16.msra.mxu0 0
      %2265 = vmatprep.subr.bf16.mxu0 0
      %2266 = vmatpush1.bf16.msra.mxu0 0
      %2267 = vmatprep.subr.bf16.mxu0 0
      %2268 = vmatpush1.bf16.msra.mxu0 0
      %2269 = vmatprep.subr.bf16.mxu0 0
      %2270 = vmatpush1.bf16.msra.mxu0 0
      %2271 = vmatprep.subr.bf16.mxu0 0
      %2272 = vmatpush1.bf16.msra.mxu0 0
      %2273 = vmatprep.subr.bf16.mxu0 0
      %2274 = vmatpush1.bf16.msra.mxu0 0
      %2275 = vmatprep.subr.bf16.mxu0 0
      %2276 = vmatpush1.bf16.msra.mxu0 0
      %2277 = vmatprep.subr.bf16.mxu0 0
      %2278 = vmatpush1.bf16.msra.mxu0 0
      %2279 = vmatprep.subr.bf16.mxu0 0
      %2280 = vmatpush1.bf16.msra.mxu0 0
      %2281 = vmatprep.subr.bf16.mxu0 0
      %2282 = vmatpush1.bf16.msra.mxu0 0
      %2283 = vmatprep.mubr.bf16.mxu0 0
      %2284 = vmatmul.mubr.bf16.gmra.mrb[0].mxu0 %v2237
      %v2285 = vpop.f32.mrb[0].mxu0
      %v2286 = vadd.f32 0.0, %v2285
      %v2287 = vpop.f32.mrb[0].mxu0
      %v2288 = vpop.f32.mrb[0].mxu0
      %v2289 = vadd.f32 0.0, %v2288
      %v2290 = vpop.f32.mrb[0].mxu0
      %2291 = vmatprep.mubr.bf16.mxu0 0
      %2292 = vmatmul.mubr.bf16.gmra.mrb[0].mxu0 %v2240
      %v2293 = vpop.f32.mrb[0].mxu0
      %v2294 = vadd.f32 0.0, %v2293
      %v2295 = vpop.f32.mrb[0].mxu0
      %v2296 = vpop.f32.mrb[0].mxu0
      %v2297 = vadd.f32 0.0, %v2296
      %v2298 = vpop.f32.mrb[0].mxu0
      %2299 = vmatprep.mubr.bf16.mxu0 0
      %2300 = vmatmul.mubr.bf16.gmra.mrb[0].mxu0 %v2243
      %v2301 = vpop.f32.mrb[0].mxu0
      %v2302 = vadd.f32 0.0, %v2301
      %v2303 = vpop.f32.mrb[0].mxu0
      %v2304 = vpop.f32.mrb[0].mxu0
      %v2305 = vadd.f32 0.0, %v2304
      %v2306 = vpop.f32.mrb[0].mxu0
      %2307 = vmatprep.mubr.bf16.mxu0 0
      %2308 = vmatmul.mubr.bf16.gmra.mrb[0].mxu0 %v2246
      %v2309 = vpop.f32.mrb[0].mxu0
      %v2310 = vadd.f32 0.0, %v2309
      %v2311 = vpop.f32.mrb[0].mxu0
      %v2312 = vpop.f32.mrb[0].mxu0
      %v2313 = vadd.f32 0.0, %v2312
      %v2314 = vpop.f32.mrb[0].mxu0
      %2315 = vdwg.mxu0
      %v2316 = vadd.f32 %v2214, %v2286
      %v2317 = vadd.f32 %v2215, %v2289
      %v2318 = vadd.f32 %v2216, %v2294
      %v2319 = vadd.f32 %v2217, %v2297
      %v2320 = vadd.f32 %v2218, %v2302
      %v2321 = vadd.f32 %v2219, %v2305
      %v2322 = vadd.f32 %v2220, %v2310
      %v2323 = vadd.f32 %v2221, %v2313
      %v2324 = vld [vmem:[%s1257] sm:$0xff]
      %v2325 = vld [vmem:[%s1257 + $0x10] sm:$0xff]
      %v2326 = vld [vmem:[%s1257 + $0x20] sm:$0xff]
      %v2327 = vld [vmem:[%s1257 + $0x30] sm:$0xff]
      %v2328 = vld [vmem:[%s1257 + $0x40] sm:$0xff]
      %v2329 = vld [vmem:[%s1257 + $0x50] sm:$0xff]
      %v2330 = vld [vmem:[%s1257 + $0x60] sm:$0xff]
      %v2331 = vld [vmem:[%s1257 + $0x70] sm:$0xff]
      %v2332 = vpack.c.bf16 %v2325, %v2324
      %v2333 = vpack.c.bf16 %v2327, %v2326
      %v2334 = vpack.c.bf16 %v2329, %v2328
      %v2335 = vpack.c.bf16 %v2331, %v2330
      %s2336 = scalar_lea.vmem %s5, 12
      %v2337 = vld [vmem:[%s2336] sm:$0x3]
      %v2339 = vsel %vm537, %v2332, 0
      %v2342 = vsel %vm537, %v2333, 0
      %v2345 = vsel %vm537, %v2334, 0
      %v2348 = vsel %vm537, %v2335, 0
      %v2351 = vsel %vm700, %v2337, 0
      %2353 = vmatprep.subr.bf16.mxu0 0
      %2354 = vmatpush1.bf16.msra.mxu0 %v2351
      %2355 = vmatprep.subr.bf16.mxu0 0
      %2356 = vmatpush1.bf16.msra.mxu0 0
      %2357 = vmatprep.subr.bf16.mxu0 0
      %2358 = vmatpush1.bf16.msra.mxu0 0
      %2359 = vmatprep.subr.bf16.mxu0 0
      %2360 = vmatpush1.bf16.msra.mxu0 0
      %2361 = vmatprep.subr.bf16.mxu0 0
      %2362 = vmatpush1.bf16.msra.mxu0 0
      %2363 = vmatprep.subr.bf16.mxu0 0
      %2364 = vmatpush1.bf16.msra.mxu0 0
      %2365 = vmatprep.subr.bf16.mxu0 0
      %2366 = vmatpush1.bf16.msra.mxu0 0
      %2367 = vmatprep.subr.bf16.mxu0 0
      %2368 = vmatpush1.bf16.msra.mxu0 0
      %2369 = vmatprep.subr.bf16.mxu0 0
      %2370 = vmatpush1.bf16.msra.mxu0 0
      %2371 = vmatprep.subr.bf16.mxu0 0
      %2372 = vmatpush1.bf16.msra.mxu0 0
      %2373 = vmatprep.subr.bf16.mxu0 0
      %2374 = vmatpush1.bf16.msra.mxu0 0
      %2375 = vmatprep.subr.bf16.mxu0 0
      %2376 = vmatpush1.bf16.msra.mxu0 0
      %2377 = vmatprep.subr.bf16.mxu0 0
      %2378 = vmatpush1.bf16.msra.mxu0 0
      %2379 = vmatprep.subr.bf16.mxu0 0
      %2380 = vmatpush1.bf16.msra.mxu0 0
      %2381 = vmatprep.subr.bf16.mxu0 0
      %2382 = vmatpush1.bf16.msra.mxu0 0
      %2383 = vmatprep.subr.bf16.mxu0 0
      %2384 = vmatpush1.bf16.msra.mxu0 0
      %2385 = vmatprep.mubr.bf16.mxu0 0
      %2386 = vmatmul.mubr.bf16.gmra.mrb[0].mxu0 %v2339
      %v2387 = vpop.f32.mrb[0].mxu0
      %v2388 = vadd.f32 0.0, %v2387
      %v2389 = vpop.f32.mrb[0].mxu0
      %v2390 = vpop.f32.mrb[0].mxu0
      %v2391 = vadd.f32 0.0, %v2390
      %v2392 = vpop.f32.mrb[0].mxu0
      %2393 = vmatprep.mubr.bf16.mxu0 0
      %2394 = vmatmul.mubr.bf16.gmra.mrb[0].mxu0 %v2342
      %v2395 = vpop.f32.mrb[0].mxu0
      %v2396 = vadd.f32 0.0, %v2395
      %v2397 = vpop.f32.mrb[0].mxu0
      %v2398 = vpop.f32.mrb[0].mxu0
      %v2399 = vadd.f32 0.0, %v2398
      %v2400 = vpop.f32.mrb[0].mxu0
      %2401 = vmatprep.mubr.bf16.mxu0 0
      %2402 = vmatmul.mubr.bf16.gmra.mrb[0].mxu0 %v2345
      %v2403 = vpop.f32.mrb[0].mxu0
      %v2404 = vadd.f32 0.0, %v2403
      %v2405 = vpop.f32.mrb[0].mxu0
      %v2406 = vpop.f32.mrb[0].mxu0
      %v2407 = vadd.f32 0.0, %v2406
      %v2408 = vpop.f32.mrb[0].mxu0
      %2409 = vmatprep.mubr.bf16.mxu0 0
      %2410 = vmatmul.mubr.bf16.gmra.mrb[0].mxu0 %v2348
      %v2411 = vpop.f32.mrb[0].mxu0
      %v2412 = vadd.f32 0.0, %v2411
      %v2413 = vpop.f32.mrb[0].mxu0
      %v2414 = vpop.f32.mrb[0].mxu0
      %v2415 = vadd.f32 0.0, %v2414
      %v2416 = vpop.f32.mrb[0].mxu0
      %2417 = vdwg.mxu0
      %v2418 = vadd.f32 %v2316, %v2388
      %v2419 = vadd.f32 %v2317, %v2391
      %v2420 = vadd.f32 %v2318, %v2396
      %v2421 = vadd.f32 %v2319, %v2399
      %v2422 = vadd.f32 %v2320, %v2404
      %v2423 = vadd.f32 %v2321, %v2407
      %v2424 = vadd.f32 %v2322, %v2412
      %v2425 = vadd.f32 %v2323, %v2415
      %v2426 = vld [vmem:[%s1257 + $0x1] sm:$0xff]
      %v2427 = vld [vmem:[%s1257 + $0x11] sm:$0xff]
      %v2428 = vld [vmem:[%s1257 + $0x21] sm:$0xff]
      %v2429 = vld [vmem:[%s1257 + $0x31] sm:$0xff]
      %v2430 = vld [vmem:[%s1257 + $0x41] sm:$0xff]
      %v2431 = vld [vmem:[%s1257 + $0x51] sm:$0xff]
      %v2432 = vld [vmem:[%s1257 + $0x61] sm:$0xff]
      %v2433 = vld [vmem:[%s1257 + $0x71] sm:$0xff]
      %v2434 = vpack.c.bf16 %v2427, %v2426
      %v2435 = vpack.c.bf16 %v2429, %v2428
      %v2436 = vpack.c.bf16 %v2431, %v2430
      %v2437 = vpack.c.bf16 %v2433, %v2432
      %s2438 = scalar_lea.vmem %s5, 14
      %v2439 = vld [vmem:[%s2438] sm:$0x3]
      %v2441 = vsel %vm537, %v2434, 0
      %v2444 = vsel %vm537, %v2435, 0
      %v2447 = vsel %vm537, %v2436, 0
      %v2450 = vsel %vm537, %v2437, 0
      %v2453 = vsel %vm700, %v2439, 0
      %2455 = vmatprep.subr.bf16.mxu0 0
      %2456 = vmatpush1.bf16.msra.mxu0 %v2453
      %2457 = vmatprep.subr.bf16.mxu0 0
      %2458 = vmatpush1.bf16.msra.mxu0 0
      %2459 = vmatprep.subr.bf16.mxu0 0
      %2460 = vmatpush1.bf16.msra.mxu0 0
      %2461 = vmatprep.subr.bf16.mxu0 0
      %2462 = vmatpush1.bf16.msra.mxu0 0
      %2463 = vmatprep.subr.bf16.mxu0 0
      %2464 = vmatpush1.bf16.msra.mxu0 0
      %2465 = vmatprep.subr.bf16.mxu0 0
      %2466 = vmatpush1.bf16.msra.mxu0 0
      %2467 = vmatprep.subr.bf16.mxu0 0
      %2468 = vmatpush1.bf16.msra.mxu0 0
      %2469 = vmatprep.subr.bf16.mxu0 0
      %2470 = vmatpush1.bf16.msra.mxu0 0
      %2471 = vmatprep.subr.bf16.mxu0 0
      %2472 = vmatpush1.bf16.msra.mxu0 0
      %2473 = vmatprep.subr.bf16.mxu0 0
      %2474 = vmatpush1.bf16.msra.mxu0 0
      %2475 = vmatprep.subr.bf16.mxu0 0
      %2476 = vmatpush1.bf16.msra.mxu0 0
      %2477 = vmatprep.subr.bf16.mxu0 0
      %2478 = vmatpush1.bf16.msra.mxu0 0
      %2479 = vmatprep.subr.bf16.mxu0 0
      %2480 = vmatpush1.bf16.msra.mxu0 0
      %2481 = vmatprep.subr.bf16.mxu0 0
      %2482 = vmatpush1.bf16.msra.mxu0 0
      %2483 = vmatprep.subr.bf16.mxu0 0
      %2484 = vmatpush1.bf16.msra.mxu0 0
      %2485 = vmatprep.subr.bf16.mxu0 0
      %2486 = vmatpush1.bf16.msra.mxu0 0
      %2487 = vmatprep.mubr.bf16.mxu0 0
      %2488 = vmatmul.mubr.bf16.gmra.mrb[0].mxu0 %v2441
      %v2489 = vpop.f32.mrb[0].mxu0
      %v2490 = vadd.f32 0.0, %v2489
      %v2491 = vpop.f32.mrb[0].mxu0
      %v2492 = vpop.f32.mrb[0].mxu0
      %v2493 = vadd.f32 0.0, %v2492
      %v2494 = vpop.f32.mrb[0].mxu0
      %2495 = vmatprep.mubr.bf16.mxu0 0
      %2496 = vmatmul.mubr.bf16.gmra.mrb[0].mxu0 %v2444
      %v2497 = vpop.f32.mrb[0].mxu0
      %v2498 = vadd.f32 0.0, %v2497
      %v2499 = vpop.f32.mrb[0].mxu0
      %v2500 = vpop.f32.mrb[0].mxu0
      %v2501 = vadd.f32 0.0, %v2500
      %v2502 = vpop.f32.mrb[0].mxu0
      %2503 = vmatprep.mubr.bf16.mxu0 0
      %2504 = vmatmul.mubr.bf16.gmra.mrb[0].mxu0 %v2447
      %v2505 = vpop.f32.mrb[0].mxu0
      %v2506 = vadd.f32 0.0, %v2505
      %v2507 = vpop.f32.mrb[0].mxu0
      %v2508 = vpop.f32.mrb[0].mxu0
      %v2509 = vadd.f32 0.0, %v2508
      %v2510 = vpop.f32.mrb[0].mxu0
      %2511 = vmatprep.mubr.bf16.mxu0 0
      %2512 = vmatmul.mubr.bf16.gmra.mrb[0].mxu0 %v2450
      %v2513 = vpop.f32.mrb[0].mxu0
      %v2514 = vadd.f32 0.0, %v2513
      %v2515 = vpop.f32.mrb[0].mxu0
      %v2516 = vpop.f32.mrb[0].mxu0
      %v2517 = vadd.f32 0.0, %v2516
      %v2518 = vpop.f32.mrb[0].mxu0
      %2519 = vdwg.mxu0
      %v2520 = vadd.f32 %v2418, %v2490
      %v2521 = vadd.f32 %v2419, %v2493
      %v2522 = vadd.f32 %v2420, %v2498
      %v2523 = vadd.f32 %v2421, %v2501
      %v2524 = vadd.f32 %v2422, %v2506
      %v2525 = vadd.f32 %v2423, %v2509
      %v2526 = vadd.f32 %v2424, %v2514
      %v2527 = vadd.f32 %v2425, %v2517
      %v2528 = vld [vmem:[%s1257 + $0x2] sm:$0xff]
      %v2529 = vld [vmem:[%s1257 + $0x12] sm:$0xff]
      %v2530 = vld [vmem:[%s1257 + $0x22] sm:$0xff]
      %v2531 = vld [vmem:[%s1257 + $0x32] sm:$0xff]
      %v2532 = vld [vmem:[%s1257 + $0x42] sm:$0xff]
      %v2533 = vld [vmem:[%s1257 + $0x52] sm:$0xff]
      %v2534 = vld [vmem:[%s1257 + $0x62] sm:$0xff]
      %v2535 = vld [vmem:[%s1257 + $0x72] sm:$0xff]
      %v2536 = vpack.c.bf16 %v2529, %v2528
      %v2537 = vpack.c.bf16 %v2531, %v2530
      %v2538 = vpack.c.bf16 %v2533, %v2532
      %v2539 = vpack.c.bf16 %v2535, %v2534
      %s2540 = scalar_lea.vmem %s5, 16
      %v2541 = vld [vmem:[%s2540] sm:$0x3]
      %v2543 = vsel %vm537, %v2536, 0
      %v2546 = vsel %vm537, %v2537, 0
      %v2549 = vsel %vm537, %v2538, 0
      %v2552 = vsel %vm537, %v2539, 0
      %v2555 = vsel %vm700, %v2541, 0
      %2557 = vmatprep.subr.bf16.mxu0 0
      %2558 = vmatpush1.bf16.msra.mxu0 %v2555
      %2559 = vmatprep.subr.bf16.mxu0 0
      %2560 = vmatpush1.bf16.msra.mxu0 0
      %2561 = vmatprep.subr.bf16.mxu0 0
      %2562 = vmatpush1.bf16.msra.mxu0 0
      %2563 = vmatprep.subr.bf16.mxu0 0
      %2564 = vmatpush1.bf16.msra.mxu0 0
      %2565 = vmatprep.subr.bf16.mxu0 0
      %2566 = vmatpush1.bf16.msra.mxu0 0
      %2567 = vmatprep.subr.bf16.mxu0 0
      %2568 = vmatpush1.bf16.msra.mxu0 0
      %2569 = vmatprep.subr.bf16.mxu0 0
      %2570 = vmatpush1.bf16.msra.mxu0 0
      %2571 = vmatprep.subr.bf16.mxu0 0
      %2572 = vmatpush1.bf16.msra.mxu0 0
      %2573 = vmatprep.subr.bf16.mxu0 0
      %2574 = vmatpush1.bf16.msra.mxu0 0
      %2575 = vmatprep.subr.bf16.mxu0 0
      %2576 = vmatpush1.bf16.msra.mxu0 0
      %2577 = vmatprep.subr.bf16.mxu0 0
      %2578 = vmatpush1.bf16.msra.mxu0 0
      %2579 = vmatprep.subr.bf16.mxu0 0
      %2580 = vmatpush1.bf16.msra.mxu0 0
      %2581 = vmatprep.subr.bf16.mxu0 0
      %2582 = vmatpush1.bf16.msra.mxu0 0
      %2583 = vmatprep.subr.bf16.mxu0 0
      %2584 = vmatpush1.bf16.msra.mxu0 0
      %2585 = vmatprep.subr.bf16.mxu0 0
      %2586 = vmatpush1.bf16.msra.mxu0 0
      %2587 = vmatprep.subr.bf16.mxu0 0
      %2588 = vmatpush1.bf16.msra.mxu0 0
      %2589 = vmatprep.mubr.bf16.mxu0 0
      %2590 = vmatmul.mubr.bf16.gmra.mrb[0].mxu0 %v2543
      %v2591 = vpop.f32.mrb[0].mxu0
      %v2592 = vadd.f32 0.0, %v2591
      %v2593 = vpop.f32.mrb[0].mxu0
      %v2594 = vpop.f32.mrb[0].mxu0
      %v2595 = vadd.f32 0.0, %v2594
      %v2596 = vpop.f32.mrb[0].mxu0
      %2597 = vmatprep.mubr.bf16.mxu0 0
      %2598 = vmatmul.mubr.bf16.gmra.mrb[0].mxu0 %v2546
      %v2599 = vpop.f32.mrb[0].mxu0
      %v2600 = vadd.f32 0.0, %v2599
      %v2601 = vpop.f32.mrb[0].mxu0
      %v2602 = vpop.f32.mrb[0].mxu0
      %v2603 = vadd.f32 0.0, %v2602
      %v2604 = vpop.f32.mrb[0].mxu0
      %2605 = vmatprep.mubr.bf16.mxu0 0
      %2606 = vmatmul.mubr.bf16.gmra.mrb[0].mxu0 %v2549
      %v2607 = vpop.f32.mrb[0].mxu0
      %v2608 = vadd.f32 0.0, %v2607
      %v2609 = vpop.f32.mrb[0].mxu0
      %v2610 = vpop.f32.mrb[0].mxu0
      %v2611 = vadd.f32 0.0, %v2610
      %v2612 = vpop.f32.mrb[0].mxu0
      %2613 = vmatprep.mubr.bf16.mxu0 0
      %2614 = vmatmul.mubr.bf16.gmra.mrb[0].mxu0 %v2552
      %v2615 = vpop.f32.mrb[0].mxu0
      %v2616 = vadd.f32 0.0, %v2615
      %v2617 = vpop.f32.mrb[0].mxu0
      %v2618 = vpop.f32.mrb[0].mxu0
      %v2619 = vadd.f32 0.0, %v2618
      %v2620 = vpop.f32.mrb[0].mxu0
      %2621 = vdwg.mxu0
      %v2622 = vadd.f32 %v2520, %v2592
      %v2623 = vadd.f32 %v2521, %v2595
      %v2624 = vadd.f32 %v2522, %v2600
      %v2625 = vadd.f32 %v2523, %v2603
      %v2626 = vadd.f32 %v2524, %v2608
      %v2627 = vadd.f32 %v2525, %v2611
      %v2628 = vadd.f32 %v2526, %v2616
      %v2629 = vadd.f32 %v2527, %v2619
      %v2630 = vsel %vm537, %v2622, 0.0
      %v2631 = vsel %vm537, %v2623, 0.0
      %v2632 = vadd.f32 %v2630, %v2631
      %v2633 = vsel %vm537, %v2624, 0.0
      %v2634 = vadd.f32 %v2632, %v2633
      %v2635 = vsel %vm537, %v2625, 0.0
      %v2636 = vadd.f32 %v2634, %v2635
      %v2637 = vsel %vm537, %v2626, 0.0
      %v2638 = vadd.f32 %v2636, %v2637
      %v2639 = vsel %vm537, %v2627, 0.0
      %v2640 = vadd.f32 %v2638, %v2639
      %v2641 = vsel %vm537, %v2628, 0.0
      %v2642 = vadd.f32 %v2640, %v2641
      %v2643 = vsel %vm537, %v2629, 0.0
      %v2644 = vadd.f32 %v2642, %v2643
      %2645 = vadd.xlane.f32.xlu0 %v2644
      %v2646 = vpop.xlane.xlu0 %2645
      %v2647 = vrot.slane %v2646, 4
      %v2648 = vadd.f32 %v2646, %v2647
      %v2649 = vrot.slane %v2648, 2
      %v2650 = vadd.f32 %v2648, %v2649
      %v2651 = vrot.slane %v2650, 1
      %v2652 = vadd.f32 %v2650, %v2651
      %s2653 = vtos %v2652
      %v2654 = vrcp.pop 256.0
      %s2655 = vtos %v2654
      %s2656 = smul.f32 %s2653, %s2655
      %v2657 = vmul.f32 %v2622, %v2622
      %v2658 = vmul.f32 %v2623, %v2623
      %v2659 = vmul.f32 %v2624, %v2624
      %v2660 = vmul.f32 %v2625, %v2625
      %v2661 = vmul.f32 %v2626, %v2626
      %v2662 = vmul.f32 %v2627, %v2627
      %v2663 = vmul.f32 %v2628, %v2628
      %v2664 = vmul.f32 %v2629, %v2629
      %v2665 = vsel %vm537, %v2657, 0.0
      %v2666 = vsel %vm537, %v2658, 0.0
      %v2667 = vadd.f32 %v2665, %v2666
      %v2668 = vsel %vm537, %v2659, 0.0
      %v2669 = vadd.f32 %v2667, %v2668
      %v2670 = vsel %vm537, %v2660, 0.0
      %v2671 = vadd.f32 %v2669, %v2670
      %v2672 = vsel %vm537, %v2661, 0.0
      %v2673 = vadd.f32 %v2671, %v2672
      %v2674 = vsel %vm537, %v2662, 0.0
      %v2675 = vadd.f32 %v2673, %v2674
      %v2676 = vsel %vm537, %v2663, 0.0
      %v2677 = vadd.f32 %v2675, %v2676
      %v2678 = vsel %vm537, %v2664, 0.0
      %v2679 = vadd.f32 %v2677, %v2678
      %2680 = vadd.xlane.f32.xlu0 %v2679
      %v2681 = vpop.xlane.xlu0 %2680
      %v2682 = vrot.slane %v2681, 4
      %v2683 = vadd.f32 %v2681, %v2682
      %v2684 = vrot.slane %v2683, 2
      %v2685 = vadd.f32 %v2683, %v2684
      %v2686 = vrot.slane %v2685, 1
      %v2687 = vadd.f32 %v2685, %v2686
      %s2688 = vtos %v2687
      %v2689 = vrcp.pop 256.0
      %s2690 = vtos %v2689
      %s2691 = smul.f32 %s2688, %s2690
      %s2692 = smul.f32 %s2656, %s2656
      %s2693 = ssub.f32 %s2691, %s2692
      %s2694 = smax.f32 %s2693, 0.0
      %v2695 = vstv %s2656
      %v2696 = vsub.f32 %v2622, %v2695
      %v2697 = vsub.f32 %v2623, %v2695
      %v2698 = vsub.f32 %v2624, %v2695
      %v2699 = vsub.f32 %v2625, %v2695
      %v2700 = vsub.f32 %v2626, %v2695
      %v2701 = vsub.f32 %v2627, %v2695
      %v2702 = vsub.f32 %v2628, %v2695
      %v2703 = vsub.f32 %v2629, %v2695
      %s2704 = sadd.f32 %s2694, 1e-05
      %v2705 = vstv %s2704
      %v2706 = vrsqrt.pop %v2705
      %s2707 = vtos %v2706
      %v2708 = vstv %s2707
      %v2709 = vmul.f32 %v2696, %v2708
      %v2710 = vmul.f32 %v2697, %v2708
      %v2711 = vmul.f32 %v2698, %v2708
      %v2712 = vmul.f32 %v2699, %v2708
      %v2713 = vmul.f32 %v2700, %v2708
      %v2714 = vmul.f32 %v2701, %v2708
      %v2715 = vmul.f32 %v2702, %v2708
      %v2716 = vmul.f32 %v2703, %v2708
      %v2717 = vld [vmem:[%s6] sm:$0x1]
      %v2719 = vlaneseq
      %v2720 = vshrl.u32 %v2719, 7
      %v2721 = vsub.s32 0, %v2720
      %v2722 = vrot.slane %v2717, %v2721
      %v2724 = vmul.f32 %v2709, %v2722
      %v2725 = vmul.f32 %v2710, %v2722
      %v2726 = vmul.f32 %v2711, %v2722
      %v2727 = vmul.f32 %v2712, %v2722
      %v2728 = vmul.f32 %v2713, %v2722
      %v2729 = vmul.f32 %v2714, %v2722
      %v2730 = vmul.f32 %v2715, %v2722
      %v2731 = vmul.f32 %v2716, %v2722
      %v2732 = vld [vmem:[%s7] sm:$0x1]
      %v2734 = vlaneseq
      %v2735 = vshrl.u32 %v2734, 7
      %v2736 = vsub.s32 0, %v2735
      %v2737 = vrot.slane %v2732, %v2736
      %v2739 = vadd.f32 %v2724, %v2737
      %v2740 = vadd.f32 %v2725, %v2737
      %v2741 = vadd.f32 %v2726, %v2737
      %v2742 = vadd.f32 %v2727, %v2737
      %v2743 = vadd.f32 %v2728, %v2737
      %v2744 = vadd.f32 %v2729, %v2737
      %v2745 = vadd.f32 %v2730, %v2737
      %v2746 = vadd.f32 %v2731, %v2737
      %v2747 = vadd.f32 %v644, %v2739
      %v2748 = vadd.f32 %v645, %v2740
      %v2749 = vadd.f32 %v646, %v2741
      %v2750 = vadd.f32 %v647, %v2742
      %v2751 = vadd.f32 %v648, %v2743
      %v2752 = vadd.f32 %v649, %v2744
      %v2753 = vadd.f32 %v650, %v2745
      %v2754 = vadd.f32 %v651, %v2746
      %v2755 = vmul.f32 %v2747, 0.5
      %v2756 = vmul.f32 %v2748, 0.5
      %v2757 = vmul.f32 %v2749, 0.5
      %v2758 = vmul.f32 %v2750, 0.5
      %v2759 = vmul.f32 %v2751, 0.5
      %v2760 = vmul.f32 %v2752, 0.5
      %v2761 = vmul.f32 %v2753, 0.5
      %v2762 = vmul.f32 %v2754, 0.5
      %v2763 = vmul.f32 %v2747, 0.70710677
      %v2764 = vmul.f32 %v2748, 0.70710677
      %v2765 = vmul.f32 %v2749, 0.70710677
      %v2766 = vmul.f32 %v2750, 0.70710677
      %v2767 = vmul.f32 %v2751, 0.70710677
      %v2768 = vmul.f32 %v2752, 0.70710677
      %v2769 = vmul.f32 %v2753, 0.70710677
      %v2770 = vmul.f32 %v2754, 0.70710677
      %v2771 = verf.f32.pop %v2763
      %v2772 = verf.f32.pop %v2764
      %v2773 = verf.f32.pop %v2765
      %v2774 = verf.f32.pop %v2766
      %v2775 = verf.f32.pop %v2767
      %v2776 = verf.f32.pop %v2768
      %v2777 = verf.f32.pop %v2769
      %v2778 = verf.f32.pop %v2770
      %v2779 = vadd.f32 %v2771, 1.0
      %v2780 = vadd.f32 %v2772, 1.0
      %v2781 = vadd.f32 %v2773, 1.0
      %v2782 = vadd.f32 %v2774, 1.0
      %v2783 = vadd.f32 %v2775, 1.0
      %v2784 = vadd.f32 %v2776, 1.0
      %v2785 = vadd.f32 %v2777, 1.0
      %v2786 = vadd.f32 %v2778, 1.0
      %v2787 = vmul.f32 %v2755, %v2779
      %v2788 = vmul.f32 %v2756, %v2780
      %v2789 = vmul.f32 %v2757, %v2781
      %v2790 = vmul.f32 %v2758, %v2782
      %v2791 = vmul.f32 %v2759, %v2783
      %v2792 = vmul.f32 %v2760, %v2784
      %v2793 = vmul.f32 %v2761, %v2785
      %v2794 = vmul.f32 %v2762, %v2786
      %2795 = vst.msk [vmem:[%s652 + $0x1] sm:$0xff] %vm537, %v2787
      %2796 = vst.msk [vmem:[%s652 + $0x11] sm:$0xff] %vm537, %v2788
      %2797 = vst.msk [vmem:[%s652 + $0x21] sm:$0xff] %vm537, %v2789
      %2798 = vst.msk [vmem:[%s652 + $0x31] sm:$0xff] %vm537, %v2790
      %2799 = vst.msk [vmem:[%s652 + $0x41] sm:$0xff] %vm537, %v2791
      %2800 = vst.msk [vmem:[%s652 + $0x51] sm:$0xff] %vm537, %v2792
      %2801 = vst.msk [vmem:[%s652 + $0x61] sm:$0xff] %vm537, %v2793
      %2802 = vst.msk [vmem:[%s652 + $0x71] sm:$0xff] %vm537, %v2794
      %v2803 = vld [vmem:[#allocation2] sm:$0xff]
      %v2804 = vld [vmem:[#allocation2 + $0x10] sm:$0xff]
      %v2805 = vld [vmem:[#allocation2 + $0x20] sm:$0xff]
      %v2806 = vld [vmem:[#allocation2 + $0x30] sm:$0xff]
      %v2807 = vld [vmem:[#allocation2 + $0x40] sm:$0xff]
      %v2808 = vld [vmem:[#allocation2 + $0x50] sm:$0xff]
      %v2809 = vld [vmem:[#allocation2 + $0x60] sm:$0xff]
      %v2810 = vld [vmem:[#allocation2 + $0x70] sm:$0xff]
      %v2811 = vpack.c.bf16 %v2804, %v2803
      %v2812 = vpack.c.bf16 %v2806, %v2805
      %v2813 = vpack.c.bf16 %v2808, %v2807
      %v2814 = vpack.c.bf16 %v2810, %v2809
      %v2815 = vld [vmem:[%s8] sm:$0x3]
      %v2816 = vld [vmem:[#allocation2 + $0x1] sm:$0xff]
      %v2817 = vld [vmem:[#allocation2 + $0x11] sm:$0xff]
      %v2818 = vld [vmem:[#allocation2 + $0x21] sm:$0xff]
      %v2819 = vld [vmem:[#allocation2 + $0x31] sm:$0xff]
      %v2820 = vld [vmem:[#allocation2 + $0x41] sm:$0xff]
      %v2821 = vld [vmem:[#allocation2 + $0x51] sm:$0xff]
      %v2822 = vld [vmem:[#allocation2 + $0x61] sm:$0xff]
      %v2823 = vld [vmem:[#allocation2 + $0x71] sm:$0xff]
      %v2824 = vpack.c.bf16 %v2817, %v2816
      %v2825 = vpack.c.bf16 %v2819, %v2818
      %v2826 = vpack.c.bf16 %v2821, %v2820
      %v2827 = vpack.c.bf16 %v2823, %v2822
      %s2828 = scalar_lea.vmem %s8, 2
      %v2829 = vld [vmem:[%s2828] sm:$0x3]
      %v2831 = vsel %vm537, %v2824, 0
      %v2834 = vsel %vm537, %v2825, 0
      %v2837 = vsel %vm537, %v2826, 0
      %v2840 = vsel %vm537, %v2827, 0
      %v2843 = vsel %vm700, %v2829, 0
      %2845 = vmatprep.subr.bf16.mxu0 0
      %2846 = vmatpush1.bf16.msra.mxu0 %v2843
      %2847 = vmatprep.subr.bf16.mxu0 0
      %2848 = vmatpush1.bf16.msra.mxu0 0
      %2849 = vmatprep.subr.bf16.mxu0 0
      %2850 = vmatpush1.bf16.msra.mxu0 0
      %2851 = vmatprep.subr.bf16.mxu0 0
      %2852 = vmatpush1.bf16.msra.mxu0 0
      %2853 = vmatprep.subr.bf16.mxu0 0
      %2854 = vmatpush1.bf16.msra.mxu0 0
      %2855 = vmatprep.subr.bf16.mxu0 0
      %2856 = vmatpush1.bf16.msra.mxu0 0
      %2857 = vmatprep.subr.bf16.mxu0 0
      %2858 = vmatpush1.bf16.msra.mxu0 0
      %2859 = vmatprep.subr.bf16.mxu0 0
      %2860 = vmatpush1.bf16.msra.mxu0 0
      %2861 = vmatprep.subr.bf16.mxu0 0
      %2862 = vmatpush1.bf16.msra.mxu0 0
      %2863 = vmatprep.subr.bf16.mxu0 0
      %2864 = vmatpush1.bf16.msra.mxu0 0
      %2865 = vmatprep.subr.bf16.mxu0 0
      %2866 = vmatpush1.bf16.msra.mxu0 0
      %2867 = vmatprep.subr.bf16.mxu0 0
      %2868 = vmatpush1.bf16.msra.mxu0 0
      %2869 = vmatprep.subr.bf16.mxu0 0
      %2870 = vmatpush1.bf16.msra.mxu0 0
      %2871 = vmatprep.subr.bf16.mxu0 0
      %2872 = vmatpush1.bf16.msra.mxu0 0
      %2873 = vmatprep.subr.bf16.mxu0 0
      %2874 = vmatpush1.bf16.msra.mxu0 0
      %2875 = vmatprep.subr.bf16.mxu0 0
      %2876 = vmatpush1.bf16.msra.mxu0 0
      %2877 = vmatprep.mubr.bf16.mxu0 0
      %2878 = vmatmul.mubr.bf16.gmra.mrb[0].mxu0 %v2831
      %v2879 = vpop.f32.mrb[0].mxu0
      %v2880 = vadd.f32 0.0, %v2879
      %v2881 = vpop.f32.mrb[0].mxu0
      %v2882 = vpop.f32.mrb[0].mxu0
      %v2883 = vadd.f32 0.0, %v2882
      %v2884 = vpop.f32.mrb[0].mxu0
      %2885 = vmatprep.mubr.bf16.mxu0 0
      %2886 = vmatmul.mubr.bf16.gmra.mrb[0].mxu0 %v2834
      %v2887 = vpop.f32.mrb[0].mxu0
      %v2888 = vadd.f32 0.0, %v2887
      %v2889 = vpop.f32.mrb[0].mxu0
      %v2890 = vpop.f32.mrb[0].mxu0
      %v2891 = vadd.f32 0.0, %v2890
      %v2892 = vpop.f32.mrb[0].mxu0
      %2893 = vmatprep.mubr.bf16.mxu0 0
      %2894 = vmatmul.mubr.bf16.gmra.mrb[0].mxu0 %v2837
      %v2895 = vpop.f32.mrb[0].mxu0
      %v2896 = vadd.f32 0.0, %v2895
      %v2897 = vpop.f32.mrb[0].mxu0
      %v2898 = vpop.f32.mrb[0].mxu0
      %v2899 = vadd.f32 0.0, %v2898
      %v2900 = vpop.f32.mrb[0].mxu0
      %2901 = vmatprep.mubr.bf16.mxu0 0
      %2902 = vmatmul.mubr.bf16.gmra.mrb[0].mxu0 %v2840
      %v2903 = vpop.f32.mrb[0].mxu0
      %v2904 = vadd.f32 0.0, %v2903
      %v2905 = vpop.f32.mrb[0].mxu0
      %v2906 = vpop.f32.mrb[0].mxu0
      %v2907 = vadd.f32 0.0, %v2906
      %v2908 = vpop.f32.mrb[0].mxu0
      %2909 = vdwg.mxu0
      %v2911 = vsel %vm537, %v2811, 0
      %v2914 = vsel %vm537, %v2812, 0
      %v2917 = vsel %vm537, %v2813, 0
      %v2920 = vsel %vm537, %v2814, 0
      %v2923 = vsel %vm700, %v2815, 0
      %2925 = vmatprep.subr.bf16.mxu0 0
      %2926 = vmatpush1.bf16.msra.mxu0 %v2923
      %2927 = vmatprep.subr.bf16.mxu0 0
      %2928 = vmatpush1.bf16.msra.mxu0 0
      %2929 = vmatprep.subr.bf16.mxu0 0
      %2930 = vmatpush1.bf16.msra.mxu0 0
      %2931 = vmatprep.subr.bf16.mxu0 0
      %2932 = vmatpush1.bf16.msra.mxu0 0
      %2933 = vmatprep.subr.bf16.mxu0 0
      %2934 = vmatpush1.bf16.msra.mxu0 0
      %2935 = vmatprep.subr.bf16.mxu0 0
      %2936 = vmatpush1.bf16.msra.mxu0 0
      %2937 = vmatprep.subr.bf16.mxu0 0
      %2938 = vmatpush1.bf16.msra.mxu0 0
      %2939 = vmatprep.subr.bf16.mxu0 0
      %2940 = vmatpush1.bf16.msra.mxu0 0
      %2941 = vmatprep.subr.bf16.mxu0 0
      %2942 = vmatpush1.bf16.msra.mxu0 0
      %2943 = vmatprep.subr.bf16.mxu0 0
      %2944 = vmatpush1.bf16.msra.mxu0 0
      %2945 = vmatprep.subr.bf16.mxu0 0
      %2946 = vmatpush1.bf16.msra.mxu0 0
      %2947 = vmatprep.subr.bf16.mxu0 0
      %2948 = vmatpush1.bf16.msra.mxu0 0
      %2949 = vmatprep.subr.bf16.mxu0 0
      %2950 = vmatpush1.bf16.msra.mxu0 0
      %2951 = vmatprep.subr.bf16.mxu0 0
      %2952 = vmatpush1.bf16.msra.mxu0 0
      %2953 = vmatprep.subr.bf16.mxu0 0
      %2954 = vmatpush1.bf16.msra.mxu0 0
      %2955 = vmatprep.subr.bf16.mxu0 0
      %2956 = vmatpush1.bf16.msra.mxu0 0
      %2957 = vmatprep.mubr.bf16.mxu0 0
      %2958 = vmatmul.mubr.bf16.gmra.mrb[0].mxu0 %v2911
      %v2959 = vpop.f32.mrb[0].mxu0
      %v2960 = vadd.f32 %v2880, %v2959
      %v2961 = vpop.f32.mrb[0].mxu0
      %v2962 = vpop.f32.mrb[0].mxu0
      %v2963 = vadd.f32 %v2883, %v2962
      %v2964 = vpop.f32.mrb[0].mxu0
      %2965 = vmatprep.mubr.bf16.mxu0 0
      %2966 = vmatmul.mubr.bf16.gmra.mrb[0].mxu0 %v2914
      %v2967 = vpop.f32.mrb[0].mxu0
      %v2968 = vadd.f32 %v2888, %v2967
      %v2969 = vpop.f32.mrb[0].mxu0
      %v2970 = vpop.f32.mrb[0].mxu0
      %v2971 = vadd.f32 %v2891, %v2970
      %v2972 = vpop.f32.mrb[0].mxu0
      %2973 = vmatprep.mubr.bf16.mxu0 0
      %2974 = vmatmul.mubr.bf16.gmra.mrb[0].mxu0 %v2917
      %v2975 = vpop.f32.mrb[0].mxu0
      %v2976 = vadd.f32 %v2896, %v2975
      %v2977 = vpop.f32.mrb[0].mxu0
      %v2978 = vpop.f32.mrb[0].mxu0
      %v2979 = vadd.f32 %v2899, %v2978
      %v2980 = vpop.f32.mrb[0].mxu0
      %2981 = vmatprep.mubr.bf16.mxu0 0
      %2982 = vmatmul.mubr.bf16.gmra.mrb[0].mxu0 %v2920
      %v2983 = vpop.f32.mrb[0].mxu0
      %v2984 = vadd.f32 %v2904, %v2983
      %v2985 = vpop.f32.mrb[0].mxu0
      %v2986 = vpop.f32.mrb[0].mxu0
      %v2987 = vadd.f32 %v2907, %v2986
      %v2988 = vpop.f32.mrb[0].mxu0
      %2989 = vdwg.mxu0
      %v2990 = vld [vmem:[#allocation2 + $0x2] sm:$0xff]
      %v2991 = vld [vmem:[#allocation2 + $0x12] sm:$0xff]
      %v2992 = vld [vmem:[#allocation2 + $0x22] sm:$0xff]
      %v2993 = vld [vmem:[#allocation2 + $0x32] sm:$0xff]
      %v2994 = vld [vmem:[#allocation2 + $0x42] sm:$0xff]
      %v2995 = vld [vmem:[#allocation2 + $0x52] sm:$0xff]
      %v2996 = vld [vmem:[#allocation2 + $0x62] sm:$0xff]
      %v2997 = vld [vmem:[#allocation2 + $0x72] sm:$0xff]
      %v2998 = vpack.c.bf16 %v2991, %v2990
      %v2999 = vpack.c.bf16 %v2993, %v2992
      %v3000 = vpack.c.bf16 %v2995, %v2994
      %v3001 = vpack.c.bf16 %v2997, %v2996
      %s3002 = scalar_lea.vmem %s8, 4
      %v3003 = vld [vmem:[%s3002] sm:$0x3]
      %v3005 = vsel %vm537, %v2998, 0
      %v3008 = vsel %vm537, %v2999, 0
      %v3011 = vsel %vm537, %v3000, 0
      %v3014 = vsel %vm537, %v3001, 0
      %v3017 = vsel %vm700, %v3003, 0
      %3019 = vmatprep.subr.bf16.mxu0 0
      %3020 = vmatpush1.bf16.msra.mxu0 %v3017
      %3021 = vmatprep.subr.bf16.mxu0 0
      %3022 = vmatpush1.bf16.msra.mxu0 0
      %3023 = vmatprep.subr.bf16.mxu0 0
      %3024 = vmatpush1.bf16.msra.mxu0 0
      %3025 = vmatprep.subr.bf16.mxu0 0
      %3026 = vmatpush1.bf16.msra.mxu0 0
      %3027 = vmatprep.subr.bf16.mxu0 0
      %3028 = vmatpush1.bf16.msra.mxu0 0
      %3029 = vmatprep.subr.bf16.mxu0 0
      %3030 = vmatpush1.bf16.msra.mxu0 0
      %3031 = vmatprep.subr.bf16.mxu0 0
      %3032 = vmatpush1.bf16.msra.mxu0 0
      %3033 = vmatprep.subr.bf16.mxu0 0
      %3034 = vmatpush1.bf16.msra.mxu0 0
      %3035 = vmatprep.subr.bf16.mxu0 0
      %3036 = vmatpush1.bf16.msra.mxu0 0
      %3037 = vmatprep.subr.bf16.mxu0 0
      %3038 = vmatpush1.bf16.msra.mxu0 0
      %3039 = vmatprep.subr.bf16.mxu0 0
      %3040 = vmatpush1.bf16.msra.mxu0 0
      %3041 = vmatprep.subr.bf16.mxu0 0
      %3042 = vmatpush1.bf16.msra.mxu0 0
      %3043 = vmatprep.subr.bf16.mxu0 0
      %3044 = vmatpush1.bf16.msra.mxu0 0
      %3045 = vmatprep.subr.bf16.mxu0 0
      %3046 = vmatpush1.bf16.msra.mxu0 0
      %3047 = vmatprep.subr.bf16.mxu0 0
      %3048 = vmatpush1.bf16.msra.mxu0 0
      %3049 = vmatprep.subr.bf16.mxu0 0
      %3050 = vmatpush1.bf16.msra.mxu0 0
      %3051 = vmatprep.mubr.bf16.mxu0 0
      %3052 = vmatmul.mubr.bf16.gmra.mrb[0].mxu0 %v3005
      %v3053 = vpop.f32.mrb[0].mxu0
      %v3054 = vadd.f32 0.0, %v3053
      %v3055 = vpop.f32.mrb[0].mxu0
      %v3056 = vpop.f32.mrb[0].mxu0
      %v3057 = vadd.f32 0.0, %v3056
      %v3058 = vpop.f32.mrb[0].mxu0
      %3059 = vmatprep.mubr.bf16.mxu0 0
      %3060 = vmatmul.mubr.bf16.gmra.mrb[0].mxu0 %v3008
      %v3061 = vpop.f32.mrb[0].mxu0
      %v3062 = vadd.f32 0.0, %v3061
      %v3063 = vpop.f32.mrb[0].mxu0
      %v3064 = vpop.f32.mrb[0].mxu0
      %v3065 = vadd.f32 0.0, %v3064
      %v3066 = vpop.f32.mrb[0].mxu0
      %3067 = vmatprep.mubr.bf16.mxu0 0
      %3068 = vmatmul.mubr.bf16.gmra.mrb[0].mxu0 %v3011
      %v3069 = vpop.f32.mrb[0].mxu0
      %v3070 = vadd.f32 0.0, %v3069
      %v3071 = vpop.f32.mrb[0].mxu0
      %v3072 = vpop.f32.mrb[0].mxu0
      %v3073 = vadd.f32 0.0, %v3072
      %v3074 = vpop.f32.mrb[0].mxu0
      %3075 = vmatprep.mubr.bf16.mxu0 0
      %3076 = vmatmul.mubr.bf16.gmra.mrb[0].mxu0 %v3014
      %v3077 = vpop.f32.mrb[0].mxu0
      %v3078 = vadd.f32 0.0, %v3077
      %v3079 = vpop.f32.mrb[0].mxu0
      %v3080 = vpop.f32.mrb[0].mxu0
      %v3081 = vadd.f32 0.0, %v3080
      %v3082 = vpop.f32.mrb[0].mxu0
      %3083 = vdwg.mxu0
      %v3084 = vadd.f32 %v2960, %v3054
      %v3085 = vadd.f32 %v2963, %v3057
      %v3086 = vadd.f32 %v2968, %v3062
      %v3087 = vadd.f32 %v2971, %v3065
      %v3088 = vadd.f32 %v2976, %v3070
      %v3089 = vadd.f32 %v2979, %v3073
      %v3090 = vadd.f32 %v2984, %v3078
      %v3091 = vadd.f32 %v2987, %v3081
      %v3092 = vld [vmem:[%s652] sm:$0xff]
      %v3093 = vld [vmem:[%s652 + $0x10] sm:$0xff]
      %v3094 = vld [vmem:[%s652 + $0x20] sm:$0xff]
      %v3095 = vld [vmem:[%s652 + $0x30] sm:$0xff]
      %v3096 = vld [vmem:[%s652 + $0x40] sm:$0xff]
      %v3097 = vld [vmem:[%s652 + $0x50] sm:$0xff]
      %v3098 = vld [vmem:[%s652 + $0x60] sm:$0xff]
      %v3099 = vld [vmem:[%s652 + $0x70] sm:$0xff]
      %v3100 = vpack.c.bf16 %v3093, %v3092
      %v3101 = vpack.c.bf16 %v3095, %v3094
      %v3102 = vpack.c.bf16 %v3097, %v3096
      %v3103 = vpack.c.bf16 %v3099, %v3098
      %s3104 = scalar_lea.vmem %s8, 6
      %v3105 = vld [vmem:[%s3104] sm:$0x3]
      %v3107 = vsel %vm537, %v3100, 0
      %v3110 = vsel %vm537, %v3101, 0
      %v3113 = vsel %vm537, %v3102, 0
      %v3116 = vsel %vm537, %v3103, 0
      %v3119 = vsel %vm700, %v3105, 0
      %3121 = vmatprep.subr.bf16.mxu0 0
      %3122 = vmatpush1.bf16.msra.mxu0 %v3119
      %3123 = vmatprep.subr.bf16.mxu0 0
      %3124 = vmatpush1.bf16.msra.mxu0 0
      %3125 = vmatprep.subr.bf16.mxu0 0
      %3126 = vmatpush1.bf16.msra.mxu0 0
      %3127 = vmatprep.subr.bf16.mxu0 0
      %3128 = vmatpush1.bf16.msra.mxu0 0
      %3129 = vmatprep.subr.bf16.mxu0 0
      %3130 = vmatpush1.bf16.msra.mxu0 0
      %3131 = vmatprep.subr.bf16.mxu0 0
      %3132 = vmatpush1.bf16.msra.mxu0 0
      %3133 = vmatprep.subr.bf16.mxu0 0
      %3134 = vmatpush1.bf16.msra.mxu0 0
      %3135 = vmatprep.subr.bf16.mxu0 0
      %3136 = vmatpush1.bf16.msra.mxu0 0
      %3137 = vmatprep.subr.bf16.mxu0 0
      %3138 = vmatpush1.bf16.msra.mxu0 0
      %3139 = vmatprep.subr.bf16.mxu0 0
      %3140 = vmatpush1.bf16.msra.mxu0 0
      %3141 = vmatprep.subr.bf16.mxu0 0
      %3142 = vmatpush1.bf16.msra.mxu0 0
      %3143 = vmatprep.subr.bf16.mxu0 0
      %3144 = vmatpush1.bf16.msra.mxu0 0
      %3145 = vmatprep.subr.bf16.mxu0 0
      %3146 = vmatpush1.bf16.msra.mxu0 0
      %3147 = vmatprep.subr.bf16.mxu0 0
      %3148 = vmatpush1.bf16.msra.mxu0 0
      %3149 = vmatprep.subr.bf16.mxu0 0
      %3150 = vmatpush1.bf16.msra.mxu0 0
      %3151 = vmatprep.subr.bf16.mxu0 0
      %3152 = vmatpush1.bf16.msra.mxu0 0
      %3153 = vmatprep.mubr.bf16.mxu0 0
      %3154 = vmatmul.mubr.bf16.gmra.mrb[0].mxu0 %v3107
      %v3155 = vpop.f32.mrb[0].mxu0
      %v3156 = vadd.f32 0.0, %v3155
      %v3157 = vpop.f32.mrb[0].mxu0
      %v3158 = vpop.f32.mrb[0].mxu0
      %v3159 = vadd.f32 0.0, %v3158
      %v3160 = vpop.f32.mrb[0].mxu0
      %3161 = vmatprep.mubr.bf16.mxu0 0
      %3162 = vmatmul.mubr.bf16.gmra.mrb[0].mxu0 %v3110
      %v3163 = vpop.f32.mrb[0].mxu0
      %v3164 = vadd.f32 0.0, %v3163
      %v3165 = vpop.f32.mrb[0].mxu0
      %v3166 = vpop.f32.mrb[0].mxu0
      %v3167 = vadd.f32 0.0, %v3166
      %v3168 = vpop.f32.mrb[0].mxu0
      %3169 = vmatprep.mubr.bf16.mxu0 0
      %3170 = vmatmul.mubr.bf16.gmra.mrb[0].mxu0 %v3113
      %v3171 = vpop.f32.mrb[0].mxu0
      %v3172 = vadd.f32 0.0, %v3171
      %v3173 = vpop.f32.mrb[0].mxu0
      %v3174 = vpop.f32.mrb[0].mxu0
      %v3175 = vadd.f32 0.0, %v3174
      %v3176 = vpop.f32.mrb[0].mxu0
      %3177 = vmatprep.mubr.bf16.mxu0 0
      %3178 = vmatmul.mubr.bf16.gmra.mrb[0].mxu0 %v3116
      %v3179 = vpop.f32.mrb[0].mxu0
      %v3180 = vadd.f32 0.0, %v3179
      %v3181 = vpop.f32.mrb[0].mxu0
      %v3182 = vpop.f32.mrb[0].mxu0
      %v3183 = vadd.f32 0.0, %v3182
      %v3184 = vpop.f32.mrb[0].mxu0
      %3185 = vdwg.mxu0
      %v3186 = vadd.f32 %v3084, %v3156
      %v3187 = vadd.f32 %v3085, %v3159
      %v3188 = vadd.f32 %v3086, %v3164
      %v3189 = vadd.f32 %v3087, %v3167
      %v3190 = vadd.f32 %v3088, %v3172
      %v3191 = vadd.f32 %v3089, %v3175
      %v3192 = vadd.f32 %v3090, %v3180
      %v3193 = vadd.f32 %v3091, %v3183
      %v3194 = vld [vmem:[%s652 + $0x1] sm:$0xff]
      %v3195 = vld [vmem:[%s652 + $0x11] sm:$0xff]
      %v3196 = vld [vmem:[%s652 + $0x21] sm:$0xff]
      %v3197 = vld [vmem:[%s652 + $0x31] sm:$0xff]
      %v3198 = vld [vmem:[%s652 + $0x41] sm:$0xff]
      %v3199 = vld [vmem:[%s652 + $0x51] sm:$0xff]
      %v3200 = vld [vmem:[%s652 + $0x61] sm:$0xff]
      %v3201 = vld [vmem:[%s652 + $0x71] sm:$0xff]
      %v3202 = vpack.c.bf16 %v3195, %v3194
      %v3203 = vpack.c.bf16 %v3197, %v3196
      %v3204 = vpack.c.bf16 %v3199, %v3198
      %v3205 = vpack.c.bf16 %v3201, %v3200
      %s3206 = scalar_lea.vmem %s8, 8
      %v3207 = vld [vmem:[%s3206] sm:$0x3]
      %v3209 = vsel %vm537, %v3202, 0
      %v3212 = vsel %vm537, %v3203, 0
      %v3215 = vsel %vm537, %v3204, 0
      %v3218 = vsel %vm537, %v3205, 0
      %v3221 = vsel %vm700, %v3207, 0
      %3223 = vmatprep.subr.bf16.mxu0 0
      %3224 = vmatpush1.bf16.msra.mxu0 %v3221
      %3225 = vmatprep.subr.bf16.mxu0 0
      %3226 = vmatpush1.bf16.msra.mxu0 0
      %3227 = vmatprep.subr.bf16.mxu0 0
      %3228 = vmatpush1.bf16.msra.mxu0 0
      %3229 = vmatprep.subr.bf16.mxu0 0
      %3230 = vmatpush1.bf16.msra.mxu0 0
      %3231 = vmatprep.subr.bf16.mxu0 0
      %3232 = vmatpush1.bf16.msra.mxu0 0
      %3233 = vmatprep.subr.bf16.mxu0 0
      %3234 = vmatpush1.bf16.msra.mxu0 0
      %3235 = vmatprep.subr.bf16.mxu0 0
      %3236 = vmatpush1.bf16.msra.mxu0 0
      %3237 = vmatprep.subr.bf16.mxu0 0
      %3238 = vmatpush1.bf16.msra.mxu0 0
      %3239 = vmatprep.subr.bf16.mxu0 0
      %3240 = vmatpush1.bf16.msra.mxu0 0
      %3241 = vmatprep.subr.bf16.mxu0 0
      %3242 = vmatpush1.bf16.msra.mxu0 0
      %3243 = vmatprep.subr.bf16.mxu0 0
      %3244 = vmatpush1.bf16.msra.mxu0 0
      %3245 = vmatprep.subr.bf16.mxu0 0
      %3246 = vmatpush1.bf16.msra.mxu0 0
      %3247 = vmatprep.subr.bf16.mxu0 0
      %3248 = vmatpush1.bf16.msra.mxu0 0
      %3249 = vmatprep.subr.bf16.mxu0 0
      %3250 = vmatpush1.bf16.msra.mxu0 0
      %3251 = vmatprep.subr.bf16.mxu0 0
      %3252 = vmatpush1.bf16.msra.mxu0 0
      %3253 = vmatprep.subr.bf16.mxu0 0
      %3254 = vmatpush1.bf16.msra.mxu0 0
      %3255 = vmatprep.mubr.bf16.mxu0 0
      %3256 = vmatmul.mubr.bf16.gmra.mrb[0].mxu0 %v3209
      %v3257 = vpop.f32.mrb[0].mxu0
      %v3258 = vadd.f32 0.0, %v3257
      %v3259 = vpop.f32.mrb[0].mxu0
      %v3260 = vpop.f32.mrb[0].mxu0
      %v3261 = vadd.f32 0.0, %v3260
      %v3262 = vpop.f32.mrb[0].mxu0
      %3263 = vmatprep.mubr.bf16.mxu0 0
      %3264 = vmatmul.mubr.bf16.gmra.mrb[0].mxu0 %v3212
      %v3265 = vpop.f32.mrb[0].mxu0
      %v3266 = vadd.f32 0.0, %v3265
      %v3267 = vpop.f32.mrb[0].mxu0
      %v3268 = vpop.f32.mrb[0].mxu0
      %v3269 = vadd.f32 0.0, %v3268
      %v3270 = vpop.f32.mrb[0].mxu0
      %3271 = vmatprep.mubr.bf16.mxu0 0
      %3272 = vmatmul.mubr.bf16.gmra.mrb[0].mxu0 %v3215
      %v3273 = vpop.f32.mrb[0].mxu0
      %v3274 = vadd.f32 0.0, %v3273
      %v3275 = vpop.f32.mrb[0].mxu0
      %v3276 = vpop.f32.mrb[0].mxu0
      %v3277 = vadd.f32 0.0, %v3276
      %v3278 = vpop.f32.mrb[0].mxu0
      %3279 = vmatprep.mubr.bf16.mxu0 0
      %3280 = vmatmul.mubr.bf16.gmra.mrb[0].mxu0 %v3218
      %v3281 = vpop.f32.mrb[0].mxu0
      %v3282 = vadd.f32 0.0, %v3281
      %v3283 = vpop.f32.mrb[0].mxu0
      %v3284 = vpop.f32.mrb[0].mxu0
      %v3285 = vadd.f32 0.0, %v3284
      %v3286 = vpop.f32.mrb[0].mxu0
      %3287 = vdwg.mxu0
      %v3288 = vadd.f32 %v3186, %v3258
      %v3289 = vadd.f32 %v3187, %v3261
      %v3290 = vadd.f32 %v3188, %v3266
      %v3291 = vadd.f32 %v3189, %v3269
      %v3292 = vadd.f32 %v3190, %v3274
      %v3293 = vadd.f32 %v3191, %v3277
      %v3294 = vadd.f32 %v3192, %v3282
      %v3295 = vadd.f32 %v3193, %v3285
      %v3296 = vld [vmem:[%s652 + $0x2] sm:$0xff]
      %v3297 = vld [vmem:[%s652 + $0x12] sm:$0xff]
      %v3298 = vld [vmem:[%s652 + $0x22] sm:$0xff]
      %v3299 = vld [vmem:[%s652 + $0x32] sm:$0xff]
      %v3300 = vld [vmem:[%s652 + $0x42] sm:$0xff]
      %v3301 = vld [vmem:[%s652 + $0x52] sm:$0xff]
      %v3302 = vld [vmem:[%s652 + $0x62] sm:$0xff]
      %v3303 = vld [vmem:[%s652 + $0x72] sm:$0xff]
      %v3304 = vpack.c.bf16 %v3297, %v3296
      %v3305 = vpack.c.bf16 %v3299, %v3298
      %v3306 = vpack.c.bf16 %v3301, %v3300
      %v3307 = vpack.c.bf16 %v3303, %v3302
      %s3308 = scalar_lea.vmem %s8, 10
      %v3309 = vld [vmem:[%s3308] sm:$0x3]
      %v3311 = vsel %vm537, %v3304, 0
      %v3314 = vsel %vm537, %v3305, 0
      %v3317 = vsel %vm537, %v3306, 0
      %v3320 = vsel %vm537, %v3307, 0
      %v3323 = vsel %vm700, %v3309, 0
      %3325 = vmatprep.subr.bf16.mxu0 0
      %3326 = vmatpush1.bf16.msra.mxu0 %v3323
      %3327 = vmatprep.subr.bf16.mxu0 0
      %3328 = vmatpush1.bf16.msra.mxu0 0
      %3329 = vmatprep.subr.bf16.mxu0 0
      %3330 = vmatpush1.bf16.msra.mxu0 0
      %3331 = vmatprep.subr.bf16.mxu0 0
      %3332 = vmatpush1.bf16.msra.mxu0 0
      %3333 = vmatprep.subr.bf16.mxu0 0
      %3334 = vmatpush1.bf16.msra.mxu0 0
      %3335 = vmatprep.subr.bf16.mxu0 0
      %3336 = vmatpush1.bf16.msra.mxu0 0
      %3337 = vmatprep.subr.bf16.mxu0 0
      %3338 = vmatpush1.bf16.msra.mxu0 0
      %3339 = vmatprep.subr.bf16.mxu0 0
      %3340 = vmatpush1.bf16.msra.mxu0 0
      %3341 = vmatprep.subr.bf16.mxu0 0
      %3342 = vmatpush1.bf16.msra.mxu0 0
      %3343 = vmatprep.subr.bf16.mxu0 0
      %3344 = vmatpush1.bf16.msra.mxu0 0
      %3345 = vmatprep.subr.bf16.mxu0 0
      %3346 = vmatpush1.bf16.msra.mxu0 0
      %3347 = vmatprep.subr.bf16.mxu0 0
      %3348 = vmatpush1.bf16.msra.mxu0 0
      %3349 = vmatprep.subr.bf16.mxu0 0
      %3350 = vmatpush1.bf16.msra.mxu0 0
      %3351 = vmatprep.subr.bf16.mxu0 0
      %3352 = vmatpush1.bf16.msra.mxu0 0
      %3353 = vmatprep.subr.bf16.mxu0 0
      %3354 = vmatpush1.bf16.msra.mxu0 0
      %3355 = vmatprep.subr.bf16.mxu0 0
      %3356 = vmatpush1.bf16.msra.mxu0 0
      %3357 = vmatprep.mubr.bf16.mxu0 0
      %3358 = vmatmul.mubr.bf16.gmra.mrb[0].mxu0 %v3311
      %v3359 = vpop.f32.mrb[0].mxu0
      %v3360 = vadd.f32 0.0, %v3359
      %v3361 = vpop.f32.mrb[0].mxu0
      %v3362 = vpop.f32.mrb[0].mxu0
      %v3363 = vadd.f32 0.0, %v3362
      %v3364 = vpop.f32.mrb[0].mxu0
      %3365 = vmatprep.mubr.bf16.mxu0 0
      %3366 = vmatmul.mubr.bf16.gmra.mrb[0].mxu0 %v3314
      %v3367 = vpop.f32.mrb[0].mxu0
      %v3368 = vadd.f32 0.0, %v3367
      %v3369 = vpop.f32.mrb[0].mxu0
      %v3370 = vpop.f32.mrb[0].mxu0
      %v3371 = vadd.f32 0.0, %v3370
      %v3372 = vpop.f32.mrb[0].mxu0
      %3373 = vmatprep.mubr.bf16.mxu0 0
      %3374 = vmatmul.mubr.bf16.gmra.mrb[0].mxu0 %v3317
      %v3375 = vpop.f32.mrb[0].mxu0
      %v3376 = vadd.f32 0.0, %v3375
      %v3377 = vpop.f32.mrb[0].mxu0
      %v3378 = vpop.f32.mrb[0].mxu0
      %v3379 = vadd.f32 0.0, %v3378
      %v3380 = vpop.f32.mrb[0].mxu0
      %3381 = vmatprep.mubr.bf16.mxu0 0
      %3382 = vmatmul.mubr.bf16.gmra.mrb[0].mxu0 %v3320
      %v3383 = vpop.f32.mrb[0].mxu0
      %v3384 = vadd.f32 0.0, %v3383
      %v3385 = vpop.f32.mrb[0].mxu0
      %v3386 = vpop.f32.mrb[0].mxu0
      %v3387 = vadd.f32 0.0, %v3386
      %v3388 = vpop.f32.mrb[0].mxu0
      %3389 = vdwg.mxu0
      %v3390 = vadd.f32 %v3288, %v3360
      %v3391 = vadd.f32 %v3289, %v3363
      %v3392 = vadd.f32 %v3290, %v3368
      %v3393 = vadd.f32 %v3291, %v3371
      %v3394 = vadd.f32 %v3292, %v3376
      %v3395 = vadd.f32 %v3293, %v3379
      %v3396 = vadd.f32 %v3294, %v3384
      %v3397 = vadd.f32 %v3295, %v3387
      %v3398 = vld [vmem:[%s1257] sm:$0xff]
      %v3399 = vld [vmem:[%s1257 + $0x10] sm:$0xff]
      %v3400 = vld [vmem:[%s1257 + $0x20] sm:$0xff]
      %v3401 = vld [vmem:[%s1257 + $0x30] sm:$0xff]
      %v3402 = vld [vmem:[%s1257 + $0x40] sm:$0xff]
      %v3403 = vld [vmem:[%s1257 + $0x50] sm:$0xff]
      %v3404 = vld [vmem:[%s1257 + $0x60] sm:$0xff]
      %v3405 = vld [vmem:[%s1257 + $0x70] sm:$0xff]
      %v3406 = vpack.c.bf16 %v3399, %v3398
      %v3407 = vpack.c.bf16 %v3401, %v3400
      %v3408 = vpack.c.bf16 %v3403, %v3402
      %v3409 = vpack.c.bf16 %v3405, %v3404
      %s3410 = scalar_lea.vmem %s8, 12
      %v3411 = vld [vmem:[%s3410] sm:$0x3]
      %v3413 = vsel %vm537, %v3406, 0
      %v3416 = vsel %vm537, %v3407, 0
      %v3419 = vsel %vm537, %v3408, 0
      %v3422 = vsel %vm537, %v3409, 0
      %v3425 = vsel %vm700, %v3411, 0
      %3427 = vmatprep.subr.bf16.mxu0 0
      %3428 = vmatpush1.bf16.msra.mxu0 %v3425
      %3429 = vmatprep.subr.bf16.mxu0 0
      %3430 = vmatpush1.bf16.msra.mxu0 0
      %3431 = vmatprep.subr.bf16.mxu0 0
      %3432 = vmatpush1.bf16.msra.mxu0 0
      %3433 = vmatprep.subr.bf16.mxu0 0
      %3434 = vmatpush1.bf16.msra.mxu0 0
      %3435 = vmatprep.subr.bf16.mxu0 0
      %3436 = vmatpush1.bf16.msra.mxu0 0
      %3437 = vmatprep.subr.bf16.mxu0 0
      %3438 = vmatpush1.bf16.msra.mxu0 0
      %3439 = vmatprep.subr.bf16.mxu0 0
      %3440 = vmatpush1.bf16.msra.mxu0 0
      %3441 = vmatprep.subr.bf16.mxu0 0
      %3442 = vmatpush1.bf16.msra.mxu0 0
      %3443 = vmatprep.subr.bf16.mxu0 0
      %3444 = vmatpush1.bf16.msra.mxu0 0
      %3445 = vmatprep.subr.bf16.mxu0 0
      %3446 = vmatpush1.bf16.msra.mxu0 0
      %3447 = vmatprep.subr.bf16.mxu0 0
      %3448 = vmatpush1.bf16.msra.mxu0 0
      %3449 = vmatprep.subr.bf16.mxu0 0
      %3450 = vmatpush1.bf16.msra.mxu0 0
      %3451 = vmatprep.subr.bf16.mxu0 0
      %3452 = vmatpush1.bf16.msra.mxu0 0
      %3453 = vmatprep.subr.bf16.mxu0 0
      %3454 = vmatpush1.bf16.msra.mxu0 0
      %3455 = vmatprep.subr.bf16.mxu0 0
      %3456 = vmatpush1.bf16.msra.mxu0 0
      %3457 = vmatprep.subr.bf16.mxu0 0
      %3458 = vmatpush1.bf16.msra.mxu0 0
      %3459 = vmatprep.mubr.bf16.mxu0 0
      %3460 = vmatmul.mubr.bf16.gmra.mrb[0].mxu0 %v3413
      %v3461 = vpop.f32.mrb[0].mxu0
      %v3462 = vadd.f32 0.0, %v3461
      %v3463 = vpop.f32.mrb[0].mxu0
      %v3464 = vpop.f32.mrb[0].mxu0
      %v3465 = vadd.f32 0.0, %v3464
      %v3466 = vpop.f32.mrb[0].mxu0
      %3467 = vmatprep.mubr.bf16.mxu0 0
      %3468 = vmatmul.mubr.bf16.gmra.mrb[0].mxu0 %v3416
      %v3469 = vpop.f32.mrb[0].mxu0
      %v3470 = vadd.f32 0.0, %v3469
      %v3471 = vpop.f32.mrb[0].mxu0
      %v3472 = vpop.f32.mrb[0].mxu0
      %v3473 = vadd.f32 0.0, %v3472
      %v3474 = vpop.f32.mrb[0].mxu0
      %3475 = vmatprep.mubr.bf16.mxu0 0
      %3476 = vmatmul.mubr.bf16.gmra.mrb[0].mxu0 %v3419
      %v3477 = vpop.f32.mrb[0].mxu0
      %v3478 = vadd.f32 0.0, %v3477
      %v3479 = vpop.f32.mrb[0].mxu0
      %v3480 = vpop.f32.mrb[0].mxu0
      %v3481 = vadd.f32 0.0, %v3480
      %v3482 = vpop.f32.mrb[0].mxu0
      %3483 = vmatprep.mubr.bf16.mxu0 0
      %3484 = vmatmul.mubr.bf16.gmra.mrb[0].mxu0 %v3422
      %v3485 = vpop.f32.mrb[0].mxu0
      %v3486 = vadd.f32 0.0, %v3485
      %v3487 = vpop.f32.mrb[0].mxu0
      %v3488 = vpop.f32.mrb[0].mxu0
      %v3489 = vadd.f32 0.0, %v3488
      %v3490 = vpop.f32.mrb[0].mxu0
      %3491 = vdwg.mxu0
      %v3492 = vadd.f32 %v3390, %v3462
      %v3493 = vadd.f32 %v3391, %v3465
      %v3494 = vadd.f32 %v3392, %v3470
      %v3495 = vadd.f32 %v3393, %v3473
      %v3496 = vadd.f32 %v3394, %v3478
      %v3497 = vadd.f32 %v3395, %v3481
      %v3498 = vadd.f32 %v3396, %v3486
      %v3499 = vadd.f32 %v3397, %v3489
      %v3500 = vld [vmem:[%s1257 + $0x1] sm:$0xff]
      %v3501 = vld [vmem:[%s1257 + $0x11] sm:$0xff]
      %v3502 = vld [vmem:[%s1257 + $0x21] sm:$0xff]
      %v3503 = vld [vmem:[%s1257 + $0x31] sm:$0xff]
      %v3504 = vld [vmem:[%s1257 + $0x41] sm:$0xff]
      %v3505 = vld [vmem:[%s1257 + $0x51] sm:$0xff]
      %v3506 = vld [vmem:[%s1257 + $0x61] sm:$0xff]
      %v3507 = vld [vmem:[%s1257 + $0x71] sm:$0xff]
      %v3508 = vpack.c.bf16 %v3501, %v3500
      %v3509 = vpack.c.bf16 %v3503, %v3502
      %v3510 = vpack.c.bf16 %v3505, %v3504
      %v3511 = vpack.c.bf16 %v3507, %v3506
      %s3512 = scalar_lea.vmem %s8, 14
      %v3513 = vld [vmem:[%s3512] sm:$0x3]
      %v3515 = vsel %vm537, %v3508, 0
      %v3518 = vsel %vm537, %v3509, 0
      %v3521 = vsel %vm537, %v3510, 0
      %v3524 = vsel %vm537, %v3511, 0
      %v3527 = vsel %vm700, %v3513, 0
      %3529 = vmatprep.subr.bf16.mxu0 0
      %3530 = vmatpush1.bf16.msra.mxu0 %v3527
      %3531 = vmatprep.subr.bf16.mxu0 0
      %3532 = vmatpush1.bf16.msra.mxu0 0
      %3533 = vmatprep.subr.bf16.mxu0 0
      %3534 = vmatpush1.bf16.msra.mxu0 0
      %3535 = vmatprep.subr.bf16.mxu0 0
      %3536 = vmatpush1.bf16.msra.mxu0 0
      %3537 = vmatprep.subr.bf16.mxu0 0
      %3538 = vmatpush1.bf16.msra.mxu0 0
      %3539 = vmatprep.subr.bf16.mxu0 0
      %3540 = vmatpush1.bf16.msra.mxu0 0
      %3541 = vmatprep.subr.bf16.mxu0 0
      %3542 = vmatpush1.bf16.msra.mxu0 0
      %3543 = vmatprep.subr.bf16.mxu0 0
      %3544 = vmatpush1.bf16.msra.mxu0 0
      %3545 = vmatprep.subr.bf16.mxu0 0
      %3546 = vmatpush1.bf16.msra.mxu0 0
      %3547 = vmatprep.subr.bf16.mxu0 0
      %3548 = vmatpush1.bf16.msra.mxu0 0
      %3549 = vmatprep.subr.bf16.mxu0 0
      %3550 = vmatpush1.bf16.msra.mxu0 0
      %3551 = vmatprep.subr.bf16.mxu0 0
      %3552 = vmatpush1.bf16.msra.mxu0 0
      %3553 = vmatprep.subr.bf16.mxu0 0
      %3554 = vmatpush1.bf16.msra.mxu0 0
      %3555 = vmatprep.subr.bf16.mxu0 0
      %3556 = vmatpush1.bf16.msra.mxu0 0
      %3557 = vmatprep.subr.bf16.mxu0 0
      %3558 = vmatpush1.bf16.msra.mxu0 0
      %3559 = vmatprep.subr.bf16.mxu0 0
      %3560 = vmatpush1.bf16.msra.mxu0 0
      %3561 = vmatprep.mubr.bf16.mxu0 0
      %3562 = vmatmul.mubr.bf16.gmra.mrb[0].mxu0 %v3515
      %v3563 = vpop.f32.mrb[0].mxu0
      %v3564 = vadd.f32 0.0, %v3563
      %v3565 = vpop.f32.mrb[0].mxu0
      %v3566 = vpop.f32.mrb[0].mxu0
      %v3567 = vadd.f32 0.0, %v3566
      %v3568 = vpop.f32.mrb[0].mxu0
      %3569 = vmatprep.mubr.bf16.mxu0 0
      %3570 = vmatmul.mubr.bf16.gmra.mrb[0].mxu0 %v3518
      %v3571 = vpop.f32.mrb[0].mxu0
      %v3572 = vadd.f32 0.0, %v3571
      %v3573 = vpop.f32.mrb[0].mxu0
      %v3574 = vpop.f32.mrb[0].mxu0
      %v3575 = vadd.f32 0.0, %v3574
      %v3576 = vpop.f32.mrb[0].mxu0
      %3577 = vmatprep.mubr.bf16.mxu0 0
      %3578 = vmatmul.mubr.bf16.gmra.mrb[0].mxu0 %v3521
      %v3579 = vpop.f32.mrb[0].mxu0
      %v3580 = vadd.f32 0.0, %v3579
      %v3581 = vpop.f32.mrb[0].mxu0
      %v3582 = vpop.f32.mrb[0].mxu0
      %v3583 = vadd.f32 0.0, %v3582
      %v3584 = vpop.f32.mrb[0].mxu0
      %3585 = vmatprep.mubr.bf16.mxu0 0
      %3586 = vmatmul.mubr.bf16.gmra.mrb[0].mxu0 %v3524
      %v3587 = vpop.f32.mrb[0].mxu0
      %v3588 = vadd.f32 0.0, %v3587
      %v3589 = vpop.f32.mrb[0].mxu0
      %v3590 = vpop.f32.mrb[0].mxu0
      %v3591 = vadd.f32 0.0, %v3590
      %v3592 = vpop.f32.mrb[0].mxu0
      %3593 = vdwg.mxu0
      %v3594 = vadd.f32 %v3492, %v3564
      %v3595 = vadd.f32 %v3493, %v3567
      %v3596 = vadd.f32 %v3494, %v3572
      %v3597 = vadd.f32 %v3495, %v3575
      %v3598 = vadd.f32 %v3496, %v3580
      %v3599 = vadd.f32 %v3497, %v3583
      %v3600 = vadd.f32 %v3498, %v3588
      %v3601 = vadd.f32 %v3499, %v3591
      %v3602 = vld [vmem:[%s1257 + $0x2] sm:$0xff]
      %v3603 = vld [vmem:[%s1257 + $0x12] sm:$0xff]
      %v3604 = vld [vmem:[%s1257 + $0x22] sm:$0xff]
      %v3605 = vld [vmem:[%s1257 + $0x32] sm:$0xff]
      %v3606 = vld [vmem:[%s1257 + $0x42] sm:$0xff]
      %v3607 = vld [vmem:[%s1257 + $0x52] sm:$0xff]
      %v3608 = vld [vmem:[%s1257 + $0x62] sm:$0xff]
      %v3609 = vld [vmem:[%s1257 + $0x72] sm:$0xff]
      %v3610 = vpack.c.bf16 %v3603, %v3602
      %v3611 = vpack.c.bf16 %v3605, %v3604
      %v3612 = vpack.c.bf16 %v3607, %v3606
      %v3613 = vpack.c.bf16 %v3609, %v3608
      %s3614 = scalar_lea.vmem %s8, 16
      %v3615 = vld [vmem:[%s3614] sm:$0x3]
      %v3617 = vsel %vm537, %v3610, 0
      %v3620 = vsel %vm537, %v3611, 0
      %v3623 = vsel %vm537, %v3612, 0
      %v3626 = vsel %vm537, %v3613, 0
      %v3629 = vsel %vm700, %v3615, 0
      %3631 = vmatprep.subr.bf16.mxu0 0
      %3632 = vmatpush1.bf16.msra.mxu0 %v3629
      %3633 = vmatprep.subr.bf16.mxu0 0
      %3634 = vmatpush1.bf16.msra.mxu0 0
      %3635 = vmatprep.subr.bf16.mxu0 0
      %3636 = vmatpush1.bf16.msra.mxu0 0
      %3637 = vmatprep.subr.bf16.mxu0 0
      %3638 = vmatpush1.bf16.msra.mxu0 0
      %3639 = vmatprep.subr.bf16.mxu0 0
      %3640 = vmatpush1.bf16.msra.mxu0 0
      %3641 = vmatprep.subr.bf16.mxu0 0
      %3642 = vmatpush1.bf16.msra.mxu0 0
      %3643 = vmatprep.subr.bf16.mxu0 0
      %3644 = vmatpush1.bf16.msra.mxu0 0
      %3645 = vmatprep.subr.bf16.mxu0 0
      %3646 = vmatpush1.bf16.msra.mxu0 0
      %3647 = vmatprep.subr.bf16.mxu0 0
      %3648 = vmatpush1.bf16.msra.mxu0 0
      %3649 = vmatprep.subr.bf16.mxu0 0
      %3650 = vmatpush1.bf16.msra.mxu0 0
      %3651 = vmatprep.subr.bf16.mxu0 0
      %3652 = vmatpush1.bf16.msra.mxu0 0
      %3653 = vmatprep.subr.bf16.mxu0 0
      %3654 = vmatpush1.bf16.msra.mxu0 0
      %3655 = vmatprep.subr.bf16.mxu0 0
      %3656 = vmatpush1.bf16.msra.mxu0 0
      %3657 = vmatprep.subr.bf16.mxu0 0
      %3658 = vmatpush1.bf16.msra.mxu0 0
      %3659 = vmatprep.subr.bf16.mxu0 0
      %3660 = vmatpush1.bf16.msra.mxu0 0
      %3661 = vmatprep.subr.bf16.mxu0 0
      %3662 = vmatpush1.bf16.msra.mxu0 0
      %3663 = vmatprep.mubr.bf16.mxu0 0
      %3664 = vmatmul.mubr.bf16.gmra.mrb[0].mxu0 %v3617
      %v3665 = vpop.f32.mrb[0].mxu0
      %v3666 = vadd.f32 0.0, %v3665
      %v3667 = vpop.f32.mrb[0].mxu0
      %v3668 = vpop.f32.mrb[0].mxu0
      %v3669 = vadd.f32 0.0, %v3668
      %v3670 = vpop.f32.mrb[0].mxu0
      %3671 = vmatprep.mubr.bf16.mxu0 0
      %3672 = vmatmul.mubr.bf16.gmra.mrb[0].mxu0 %v3620
      %v3673 = vpop.f32.mrb[0].mxu0
      %v3674 = vadd.f32 0.0, %v3673
      %v3675 = vpop.f32.mrb[0].mxu0
      %v3676 = vpop.f32.mrb[0].mxu0
      %v3677 = vadd.f32 0.0, %v3676
      %v3678 = vpop.f32.mrb[0].mxu0
      %3679 = vmatprep.mubr.bf16.mxu0 0
      %3680 = vmatmul.mubr.bf16.gmra.mrb[0].mxu0 %v3623
      %v3681 = vpop.f32.mrb[0].mxu0
      %v3682 = vadd.f32 0.0, %v3681
      %v3683 = vpop.f32.mrb[0].mxu0
      %v3684 = vpop.f32.mrb[0].mxu0
      %v3685 = vadd.f32 0.0, %v3684
      %v3686 = vpop.f32.mrb[0].mxu0
      %3687 = vmatprep.mubr.bf16.mxu0 0
      %3688 = vmatmul.mubr.bf16.gmra.mrb[0].mxu0 %v3626
      %v3689 = vpop.f32.mrb[0].mxu0
      %v3690 = vadd.f32 0.0, %v3689
      %v3691 = vpop.f32.mrb[0].mxu0
      %v3692 = vpop.f32.mrb[0].mxu0
      %v3693 = vadd.f32 0.0, %v3692
      %v3694 = vpop.f32.mrb[0].mxu0
      %3695 = vdwg.mxu0
      %v3696 = vadd.f32 %v3594, %v3666
      %v3697 = vadd.f32 %v3595, %v3669
      %v3698 = vadd.f32 %v3596, %v3674
      %v3699 = vadd.f32 %v3597, %v3677
      %v3700 = vadd.f32 %v3598, %v3682
      %v3701 = vadd.f32 %v3599, %v3685
      %v3702 = vadd.f32 %v3600, %v3690
      %v3703 = vadd.f32 %v3601, %v3693
      %v3704 = vsel %vm565, %v3696, 0.0
      %v3705 = vsel %vm565, %v3697, 0.0
      %v3706 = vadd.f32 %v3704, %v3705
      %v3707 = vsel %vm565, %v3698, 0.0
      %v3708 = vadd.f32 %v3706, %v3707
      %v3709 = vsel %vm565, %v3699, 0.0
      %v3710 = vadd.f32 %v3708, %v3709
      %v3711 = vsel %vm565, %v3700, 0.0
      %v3712 = vadd.f32 %v3710, %v3711
      %v3713 = vsel %vm565, %v3701, 0.0
      %v3714 = vadd.f32 %v3712, %v3713
      %v3715 = vsel %vm565, %v3702, 0.0
      %v3716 = vadd.f32 %v3714, %v3715
      %v3717 = vsel %vm565, %v3703, 0.0
      %v3718 = vadd.f32 %v3716, %v3717
      %3719 = vadd.xlane.f32.xlu0 %v3718
      %v3720 = vpop.xlane.xlu0 %3719
      %v3721 = vrot.slane %v3720, 4
      %v3722 = vadd.f32 %v3720, %v3721
      %v3723 = vrot.slane %v3722, 2
      %v3724 = vadd.f32 %v3722, %v3723
      %v3725 = vrot.slane %v3724, 1
      %v3726 = vadd.f32 %v3724, %v3725
      %s3727 = vtos %v3726
      %v3728 = vrcp.pop 512.0
      %s3729 = vtos %v3728
      %s3730 = smul.f32 %s3727, %s3729
      %v3731 = vmul.f32 %v3696, %v3696
      %v3732 = vmul.f32 %v3697, %v3697
      %v3733 = vmul.f32 %v3698, %v3698
      %v3734 = vmul.f32 %v3699, %v3699
      %v3735 = vmul.f32 %v3700, %v3700
      %v3736 = vmul.f32 %v3701, %v3701
      %v3737 = vmul.f32 %v3702, %v3702
      %v3738 = vmul.f32 %v3703, %v3703
      %v3739 = vsel %vm565, %v3731, 0.0
      %v3740 = vsel %vm565, %v3732, 0.0
      %v3741 = vadd.f32 %v3739, %v3740
      %v3742 = vsel %vm565, %v3733, 0.0
      %v3743 = vadd.f32 %v3741, %v3742
      %v3744 = vsel %vm565, %v3734, 0.0
      %v3745 = vadd.f32 %v3743, %v3744
      %v3746 = vsel %vm565, %v3735, 0.0
      %v3747 = vadd.f32 %v3745, %v3746
      %v3748 = vsel %vm565, %v3736, 0.0
      %v3749 = vadd.f32 %v3747, %v3748
      %v3750 = vsel %vm565, %v3737, 0.0
      %v3751 = vadd.f32 %v3749, %v3750
      %v3752 = vsel %vm565, %v3738, 0.0
      %v3753 = vadd.f32 %v3751, %v3752
      %3754 = vadd.xlane.f32.xlu0 %v3753
      %v3755 = vpop.xlane.xlu0 %3754
      %v3756 = vrot.slane %v3755, 4
      %v3757 = vadd.f32 %v3755, %v3756
      %v3758 = vrot.slane %v3757, 2
      %v3759 = vadd.f32 %v3757, %v3758
      %v3760 = vrot.slane %v3759, 1
      %v3761 = vadd.f32 %v3759, %v3760
      %s3762 = vtos %v3761
      %v3763 = vrcp.pop 512.0
      %s3764 = vtos %v3763
      %s3765 = smul.f32 %s3762, %s3764
      %s3766 = smul.f32 %s3730, %s3730
      %s3767 = ssub.f32 %s3765, %s3766
      %s3768 = smax.f32 %s3767, 0.0
      %v3769 = vstv %s3730
      %v3770 = vsub.f32 %v3696, %v3769
      %v3771 = vsub.f32 %v3697, %v3769
      %v3772 = vsub.f32 %v3698, %v3769
      %v3773 = vsub.f32 %v3699, %v3769
      %v3774 = vsub.f32 %v3700, %v3769
      %v3775 = vsub.f32 %v3701, %v3769
      %v3776 = vsub.f32 %v3702, %v3769
      %v3777 = vsub.f32 %v3703, %v3769
      %s3778 = sadd.f32 %s3768, 1e-05
      %v3779 = vstv %s3778
      %v3780 = vrsqrt.pop %v3779
      %s3781 = vtos %v3780
      %v3782 = vstv %s3781
      %v3783 = vmul.f32 %v3770, %v3782
      %v3784 = vmul.f32 %v3771, %v3782
      %v3785 = vmul.f32 %v3772, %v3782
      %v3786 = vmul.f32 %v3773, %v3782
      %v3787 = vmul.f32 %v3774, %v3782
      %v3788 = vmul.f32 %v3775, %v3782
      %v3789 = vmul.f32 %v3776, %v3782
      %v3790 = vmul.f32 %v3777, %v3782
      %v3791 = vld [vmem:[%s9] sm:$0x1]
      %v3793 = vlaneseq
      %v3794 = vshrl.u32 %v3793, 7
      %v3795 = vsub.s32 0, %v3794
      %v3796 = vrot.slane %v3791, %v3795
      %v3798 = vmul.f32 %v3783, %v3796
      %v3799 = vmul.f32 %v3784, %v3796
      %v3800 = vmul.f32 %v3785, %v3796
      %v3801 = vmul.f32 %v3786, %v3796
      %v3802 = vmul.f32 %v3787, %v3796
      %v3803 = vmul.f32 %v3788, %v3796
      %v3804 = vmul.f32 %v3789, %v3796
      %v3805 = vmul.f32 %v3790, %v3796
      %v3806 = vld [vmem:[%s10] sm:$0x1]
      %v3808 = vlaneseq
      %v3809 = vshrl.u32 %v3808, 7
      %v3810 = vsub.s32 0, %v3809
      %v3811 = vrot.slane %v3806, %v3810
      %v3813 = vadd.f32 %v3798, %v3811
      %v3814 = vadd.f32 %v3799, %v3811
      %v3815 = vadd.f32 %v3800, %v3811
      %v3816 = vadd.f32 %v3801, %v3811
      %v3817 = vadd.f32 %v3802, %v3811
      %v3818 = vadd.f32 %v3803, %v3811
      %v3819 = vadd.f32 %v3804, %v3811
      %v3820 = vadd.f32 %v3805, %v3811
      %v3821 = vmul.f32 %v3813, 0.5
      %v3822 = vmul.f32 %v3814, 0.5
      %v3823 = vmul.f32 %v3815, 0.5
      %v3824 = vmul.f32 %v3816, 0.5
      %v3825 = vmul.f32 %v3817, 0.5
      %v3826 = vmul.f32 %v3818, 0.5
      %v3827 = vmul.f32 %v3819, 0.5
      %v3828 = vmul.f32 %v3820, 0.5
      %v3829 = vmul.f32 %v3813, 0.70710677
      %v3830 = vmul.f32 %v3814, 0.70710677
      %v3831 = vmul.f32 %v3815, 0.70710677
      %v3832 = vmul.f32 %v3816, 0.70710677
      %v3833 = vmul.f32 %v3817, 0.70710677
      %v3834 = vmul.f32 %v3818, 0.70710677
      %v3835 = vmul.f32 %v3819, 0.70710677
      %v3836 = vmul.f32 %v3820, 0.70710677
      %v3837 = verf.f32.pop %v3829
      %v3838 = verf.f32.pop %v3830
      %v3839 = verf.f32.pop %v3831
      %v3840 = verf.f32.pop %v3832
      %v3841 = verf.f32.pop %v3833
      %v3842 = verf.f32.pop %v3834
      %v3843 = verf.f32.pop %v3835
      %v3844 = verf.f32.pop %v3836
      %v3845 = vadd.f32 %v3837, 1.0
      %v3846 = vadd.f32 %v3838, 1.0
      %v3847 = vadd.f32 %v3839, 1.0
      %v3848 = vadd.f32 %v3840, 1.0
      %v3849 = vadd.f32 %v3841, 1.0
      %v3850 = vadd.f32 %v3842, 1.0
      %v3851 = vadd.f32 %v3843, 1.0
      %v3852 = vadd.f32 %v3844, 1.0
      %v3853 = vmul.f32 %v3821, %v3845
      %v3854 = vmul.f32 %v3822, %v3846
      %v3855 = vmul.f32 %v3823, %v3847
      %v3856 = vmul.f32 %v3824, %v3848
      %v3857 = vmul.f32 %v3825, %v3849
      %v3858 = vmul.f32 %v3826, %v3850
      %v3859 = vmul.f32 %v3827, %v3851
      %v3860 = vmul.f32 %v3828, %v3852
      %s3861 = scalar_lea.vmem [#allocation3], 16
      %3862 = vst.msk [vmem:[%s3861 + $0x1] sm:$0xff] %vm565, %v3853
      %3863 = vst.msk [vmem:[%s3861 + $0x11] sm:$0xff] %vm565, %v3854
      %3864 = vst.msk [vmem:[%s3861 + $0x21] sm:$0xff] %vm565, %v3855
      %3865 = vst.msk [vmem:[%s3861 + $0x31] sm:$0xff] %vm565, %v3856
      %3866 = vst.msk [vmem:[%s3861 + $0x41] sm:$0xff] %vm565, %v3857
      %3867 = vst.msk [vmem:[%s3861 + $0x51] sm:$0xff] %vm565, %v3858
      %3868 = vst.msk [vmem:[%s3861 + $0x61] sm:$0xff] %vm565, %v3859
      %3869 = vst.msk [vmem:[%s3861 + $0x71] sm:$0xff] %vm565, %v3860
      %v3870 = vld [vmem:[#allocation3] sm:$0xff]
      %v3871 = vld [vmem:[#allocation3 + $0x10] sm:$0xff]
      %v3872 = vld [vmem:[#allocation3 + $0x20] sm:$0xff]
      %v3873 = vld [vmem:[#allocation3 + $0x30] sm:$0xff]
      %v3874 = vld [vmem:[#allocation3 + $0x40] sm:$0xff]
      %v3875 = vld [vmem:[#allocation3 + $0x50] sm:$0xff]
      %v3876 = vld [vmem:[#allocation3 + $0x60] sm:$0xff]
      %v3877 = vld [vmem:[#allocation3 + $0x70] sm:$0xff]
      %v3878 = vpack.c.bf16 %v3871, %v3870
      %v3879 = vpack.c.bf16 %v3873, %v3872
      %v3880 = vpack.c.bf16 %v3875, %v3874
      %v3881 = vpack.c.bf16 %v3877, %v3876
      %v3882 = vld [vmem:[%s11] sm:$0xf]
      %v3883 = vld [vmem:[#allocation3 + $0x1] sm:$0xff]
      %v3884 = vld [vmem:[#allocation3 + $0x11] sm:$0xff]
      %v3885 = vld [vmem:[#allocation3 + $0x21] sm:$0xff]
      %v3886 = vld [vmem:[#allocation3 + $0x31] sm:$0xff]
      %v3887 = vld [vmem:[#allocation3 + $0x41] sm:$0xff]
      %v3888 = vld [vmem:[#allocation3 + $0x51] sm:$0xff]
      %v3889 = vld [vmem:[#allocation3 + $0x61] sm:$0xff]
      %v3890 = vld [vmem:[#allocation3 + $0x71] sm:$0xff]
      %v3891 = vpack.c.bf16 %v3884, %v3883
      %v3892 = vpack.c.bf16 %v3886, %v3885
      %v3893 = vpack.c.bf16 %v3888, %v3887
      %v3894 = vpack.c.bf16 %v3890, %v3889
      %s3895 = scalar_lea.vmem %s11, 4
      %v3896 = vld [vmem:[%s3895] sm:$0xf]
      %v3898 = vsel %vm565, %v3891, 0
      %v3901 = vsel %vm565, %v3892, 0
      %v3904 = vsel %vm565, %v3893, 0
      %v3907 = vsel %vm565, %v3894, 0
      %vm3909 = vcmask 1043456
      %v3911 = vsel %vm3909, %v3896, 0
      %3913 = vmatprep.subr.bf16.mxu0 0
      %3914 = vmatpush1.bf16.msra.mxu0 %v3911
      %3915 = vmatprep.subr.bf16.mxu0 0
      %3916 = vmatpush1.bf16.msra.mxu0 0
      %3917 = vmatprep.subr.bf16.mxu0 0
      %3918 = vmatpush1.bf16.msra.mxu0 0
      %3919 = vmatprep.subr.bf16.mxu0 0
      %3920 = vmatpush1.bf16.msra.mxu0 0
      %3921 = vmatprep.subr.bf16.mxu0 0
      %3922 = vmatpush1.bf16.msra.mxu0 0
      %3923 = vmatprep.subr.bf16.mxu0 0
      %3924 = vmatpush1.bf16.msra.mxu0 0
      %3925 = vmatprep.subr.bf16.mxu0 0
      %3926 = vmatpush1.bf16.msra.mxu0 0
      %3927 = vmatprep.subr.bf16.mxu0 0
      %3928 = vmatpush1.bf16.msra.mxu0 0
      %3929 = vmatprep.subr.bf16.mxu0 0
      %3930 = vmatpush1.bf16.msra.mxu0 0
      %3931 = vmatprep.subr.bf16.mxu0 0
      %3932 = vmatpush1.bf16.msra.mxu0 0
      %3933 = vmatprep.subr.bf16.mxu0 0
      %3934 = vmatpush1.bf16.msra.mxu0 0
      %3935 = vmatprep.subr.bf16.mxu0 0
      %3936 = vmatpush1.bf16.msra.mxu0 0
      %3937 = vmatprep.subr.bf16.mxu0 0
      %3938 = vmatpush1.bf16.msra.mxu0 0
      %3939 = vmatprep.subr.bf16.mxu0 0
      %3940 = vmatpush1.bf16.msra.mxu0 0
      %3941 = vmatprep.subr.bf16.mxu0 0
      %3942 = vmatpush1.bf16.msra.mxu0 0
      %3943 = vmatprep.subr.bf16.mxu0 0
      %3944 = vmatpush1.bf16.msra.mxu0 0
      %3945 = vmatprep.mubr.bf16.mxu0 0
      %3946 = vmatmul.mubr.bf16.gmra.mrb[0].mxu0 %v3898
      %v3947 = vpop.f32.mrb[0].mxu0
      %v3948 = vadd.f32 0.0, %v3947
      %v3949 = vpop.f32.mrb[0].mxu0
      %v3950 = vpop.f32.mrb[0].mxu0
      %v3951 = vadd.f32 0.0, %v3950
      %v3952 = vpop.f32.mrb[0].mxu0
      %3953 = vmatprep.mubr.bf16.mxu0 0
      %3954 = vmatmul.mubr.bf16.gmra.mrb[0].mxu0 %v3901
      %v3955 = vpop.f32.mrb[0].mxu0
      %v3956 = vadd.f32 0.0, %v3955
      %v3957 = vpop.f32.mrb[0].mxu0
      %v3958 = vpop.f32.mrb[0].mxu0
      %v3959 = vadd.f32 0.0, %v3958
      %v3960 = vpop.f32.mrb[0].mxu0
      %3961 = vmatprep.mubr.bf16.mxu0 0
      %3962 = vmatmul.mubr.bf16.gmra.mrb[0].mxu0 %v3904
      %v3963 = vpop.f32.mrb[0].mxu0
      %v3964 = vadd.f32 0.0, %v3963
      %v3965 = vpop.f32.mrb[0].mxu0
      %v3966 = vpop.f32.mrb[0].mxu0
      %v3967 = vadd.f32 0.0, %v3966
      %v3968 = vpop.f32.mrb[0].mxu0
      %3969 = vmatprep.mubr.bf16.mxu0 0
      %3970 = vmatmul.mubr.bf16.gmra.mrb[0].mxu0 %v3907
      %v3971 = vpop.f32.mrb[0].mxu0
      %v3972 = vadd.f32 0.0, %v3971
      %v3973 = vpop.f32.mrb[0].mxu0
      %v3974 = vpop.f32.mrb[0].mxu0
      %v3975 = vadd.f32 0.0, %v3974
      %v3976 = vpop.f32.mrb[0].mxu0
      %3977 = vdwg.mxu0
      %v3979 = vsel %vm565, %v3878, 0
      %v3982 = vsel %vm565, %v3879, 0
      %v3985 = vsel %vm565, %v3880, 0
      %v3988 = vsel %vm565, %v3881, 0
      %v3991 = vsel %vm3909, %v3882, 0
      %3993 = vmatprep.subr.bf16.mxu0 0
      %3994 = vmatpush1.bf16.msra.mxu0 %v3991
      %3995 = vmatprep.subr.bf16.mxu0 0
      %3996 = vmatpush1.bf16.msra.mxu0 0
      %3997 = vmatprep.subr.bf16.mxu0 0
      %3998 = vmatpush1.bf16.msra.mxu0 0
      %3999 = vmatprep.subr.bf16.mxu0 0
      %4000 = vmatpush1.bf16.msra.mxu0 0
      %4001 = vmatprep.subr.bf16.mxu0 0
      %4002 = vmatpush1.bf16.msra.mxu0 0
      %4003 = vmatprep.subr.bf16.mxu0 0
      %4004 = vmatpush1.bf16.msra.mxu0 0
      %4005 = vmatprep.subr.bf16.mxu0 0
      %4006 = vmatpush1.bf16.msra.mxu0 0
      %4007 = vmatprep.subr.bf16.mxu0 0
      %4008 = vmatpush1.bf16.msra.mxu0 0
      %4009 = vmatprep.subr.bf16.mxu0 0
      %4010 = vmatpush1.bf16.msra.mxu0 0
      %4011 = vmatprep.subr.bf16.mxu0 0
      %4012 = vmatpush1.bf16.msra.mxu0 0
      %4013 = vmatprep.subr.bf16.mxu0 0
      %4014 = vmatpush1.bf16.msra.mxu0 0
      %4015 = vmatprep.subr.bf16.mxu0 0
      %4016 = vmatpush1.bf16.msra.mxu0 0
      %4017 = vmatprep.subr.bf16.mxu0 0
      %4018 = vmatpush1.bf16.msra.mxu0 0
      %4019 = vmatprep.subr.bf16.mxu0 0
      %4020 = vmatpush1.bf16.msra.mxu0 0
      %4021 = vmatprep.subr.bf16.mxu0 0
      %4022 = vmatpush1.bf16.msra.mxu0 0
      %4023 = vmatprep.subr.bf16.mxu0 0
      %4024 = vmatpush1.bf16.msra.mxu0 0
      %4025 = vmatprep.mubr.bf16.mxu0 0
      %4026 = vmatmul.mubr.bf16.gmra.mrb[0].mxu0 %v3979
      %v4027 = vpop.f32.mrb[0].mxu0
      %v4028 = vadd.f32 %v3948, %v4027
      %v4029 = vpop.f32.mrb[0].mxu0
      %v4030 = vpop.f32.mrb[0].mxu0
      %v4031 = vadd.f32 %v3951, %v4030
      %v4032 = vpop.f32.mrb[0].mxu0
      %4033 = vmatprep.mubr.bf16.mxu0 0
      %4034 = vmatmul.mubr.bf16.gmra.mrb[0].mxu0 %v3982
      %v4035 = vpop.f32.mrb[0].mxu0
      %v4036 = vadd.f32 %v3956, %v4035
      %v4037 = vpop.f32.mrb[0].mxu0
      %v4038 = vpop.f32.mrb[0].mxu0
      %v4039 = vadd.f32 %v3959, %v4038
      %v4040 = vpop.f32.mrb[0].mxu0
      %4041 = vmatprep.mubr.bf16.mxu0 0
      %4042 = vmatmul.mubr.bf16.gmra.mrb[0].mxu0 %v3985
      %v4043 = vpop.f32.mrb[0].mxu0
      %v4044 = vadd.f32 %v3964, %v4043
      %v4045 = vpop.f32.mrb[0].mxu0
      %v4046 = vpop.f32.mrb[0].mxu0
      %v4047 = vadd.f32 %v3967, %v4046
      %v4048 = vpop.f32.mrb[0].mxu0
      %4049 = vmatprep.mubr.bf16.mxu0 0
      %4050 = vmatmul.mubr.bf16.gmra.mrb[0].mxu0 %v3988
      %v4051 = vpop.f32.mrb[0].mxu0
      %v4052 = vadd.f32 %v3972, %v4051
      %v4053 = vpop.f32.mrb[0].mxu0
      %v4054 = vpop.f32.mrb[0].mxu0
      %v4055 = vadd.f32 %v3975, %v4054
      %v4056 = vpop.f32.mrb[0].mxu0
      %4057 = vdwg.mxu0
      %v4058 = vld [vmem:[#allocation3 + $0x2] sm:$0xff]
      %v4059 = vld [vmem:[#allocation3 + $0x12] sm:$0xff]
      %v4060 = vld [vmem:[#allocation3 + $0x22] sm:$0xff]
      %v4061 = vld [vmem:[#allocation3 + $0x32] sm:$0xff]
      %v4062 = vld [vmem:[#allocation3 + $0x42] sm:$0xff]
      %v4063 = vld [vmem:[#allocation3 + $0x52] sm:$0xff]
      %v4064 = vld [vmem:[#allocation3 + $0x62] sm:$0xff]
      %v4065 = vld [vmem:[#allocation3 + $0x72] sm:$0xff]
      %v4066 = vpack.c.bf16 %v4059, %v4058
      %v4067 = vpack.c.bf16 %v4061, %v4060
      %v4068 = vpack.c.bf16 %v4063, %v4062
      %v4069 = vpack.c.bf16 %v4065, %v4064
      %s4070 = scalar_lea.vmem %s11, 8
      %v4071 = vld [vmem:[%s4070] sm:$0xf]
      %v4073 = vsel %vm565, %v4066, 0
      %v4076 = vsel %vm565, %v4067, 0
      %v4079 = vsel %vm565, %v4068, 0
      %v4082 = vsel %vm565, %v4069, 0
      %v4085 = vsel %vm3909, %v4071, 0
      %4087 = vmatprep.subr.bf16.mxu0 0
      %4088 = vmatpush1.bf16.msra.mxu0 %v4085
      %4089 = vmatprep.subr.bf16.mxu0 0
      %4090 = vmatpush1.bf16.msra.mxu0 0
      %4091 = vmatprep.subr.bf16.mxu0 0
      %4092 = vmatpush1.bf16.msra.mxu0 0
      %4093 = vmatprep.subr.bf16.mxu0 0
      %4094 = vmatpush1.bf16.msra.mxu0 0
      %4095 = vmatprep.subr.bf16.mxu0 0
      %4096 = vmatpush1.bf16.msra.mxu0 0
      %4097 = vmatprep.subr.bf16.mxu0 0
      %4098 = vmatpush1.bf16.msra.mxu0 0
      %4099 = vmatprep.subr.bf16.mxu0 0
      %4100 = vmatpush1.bf16.msra.mxu0 0
      %4101 = vmatprep.subr.bf16.mxu0 0
      %4102 = vmatpush1.bf16.msra.mxu0 0
      %4103 = vmatprep.subr.bf16.mxu0 0
      %4104 = vmatpush1.bf16.msra.mxu0 0
      %4105 = vmatprep.subr.bf16.mxu0 0
      %4106 = vmatpush1.bf16.msra.mxu0 0
      %4107 = vmatprep.subr.bf16.mxu0 0
      %4108 = vmatpush1.bf16.msra.mxu0 0
      %4109 = vmatprep.subr.bf16.mxu0 0
      %4110 = vmatpush1.bf16.msra.mxu0 0
      %4111 = vmatprep.subr.bf16.mxu0 0
      %4112 = vmatpush1.bf16.msra.mxu0 0
      %4113 = vmatprep.subr.bf16.mxu0 0
      %4114 = vmatpush1.bf16.msra.mxu0 0
      %4115 = vmatprep.subr.bf16.mxu0 0
      %4116 = vmatpush1.bf16.msra.mxu0 0
      %4117 = vmatprep.subr.bf16.mxu0 0
      %4118 = vmatpush1.bf16.msra.mxu0 0
      %4119 = vmatprep.mubr.bf16.mxu0 0
      %4120 = vmatmul.mubr.bf16.gmra.mrb[0].mxu0 %v4073
      %v4121 = vpop.f32.mrb[0].mxu0
      %v4122 = vadd.f32 0.0, %v4121
      %v4123 = vpop.f32.mrb[0].mxu0
      %v4124 = vpop.f32.mrb[0].mxu0
      %v4125 = vadd.f32 0.0, %v4124
      %v4126 = vpop.f32.mrb[0].mxu0
      %4127 = vmatprep.mubr.bf16.mxu0 0
      %4128 = vmatmul.mubr.bf16.gmra.mrb[0].mxu0 %v4076
      %v4129 = vpop.f32.mrb[0].mxu0
      %v4130 = vadd.f32 0.0, %v4129
      %v4131 = vpop.f32.mrb[0].mxu0
      %v4132 = vpop.f32.mrb[0].mxu0
      %v4133 = vadd.f32 0.0, %v4132
      %v4134 = vpop.f32.mrb[0].mxu0
      %4135 = vmatprep.mubr.bf16.mxu0 0
      %4136 = vmatmul.mubr.bf16.gmra.mrb[0].mxu0 %v4079
      %v4137 = vpop.f32.mrb[0].mxu0
      %v4138 = vadd.f32 0.0, %v4137
      %v4139 = vpop.f32.mrb[0].mxu0
      %v4140 = vpop.f32.mrb[0].mxu0
      %v4141 = vadd.f32 0.0, %v4140
      %v4142 = vpop.f32.mrb[0].mxu0
      %4143 = vmatprep.mubr.bf16.mxu0 0
      %4144 = vmatmul.mubr.bf16.gmra.mrb[0].mxu0 %v4082
      %v4145 = vpop.f32.mrb[0].mxu0
      %v4146 = vadd.f32 0.0, %v4145
      %v4147 = vpop.f32.mrb[0].mxu0
      %v4148 = vpop.f32.mrb[0].mxu0
      %v4149 = vadd.f32 0.0, %v4148
      %v4150 = vpop.f32.mrb[0].mxu0
      %4151 = vdwg.mxu0
      %v4152 = vadd.f32 %v4028, %v4122
      %v4153 = vadd.f32 %v4031, %v4125
      %v4154 = vadd.f32 %v4036, %v4130
      %v4155 = vadd.f32 %v4039, %v4133
      %v4156 = vadd.f32 %v4044, %v4138
      %v4157 = vadd.f32 %v4047, %v4141
      %v4158 = vadd.f32 %v4052, %v4146
      %v4159 = vadd.f32 %v4055, %v4149
      %v4160 = vld [vmem:[%s3861] sm:$0xff]
      %v4161 = vld [vmem:[%s3861 + $0x10] sm:$0xff]
      %v4162 = vld [vmem:[%s3861 + $0x20] sm:$0xff]
      %v4163 = vld [vmem:[%s3861 + $0x30] sm:$0xff]
      %v4164 = vld [vmem:[%s3861 + $0x40] sm:$0xff]
      %v4165 = vld [vmem:[%s3861 + $0x50] sm:$0xff]
      %v4166 = vld [vmem:[%s3861 + $0x60] sm:$0xff]
      %v4167 = vld [vmem:[%s3861 + $0x70] sm:$0xff]
      %v4168 = vpack.c.bf16 %v4161, %v4160
      %v4169 = vpack.c.bf16 %v4163, %v4162
      %v4170 = vpack.c.bf16 %v4165, %v4164
      %v4171 = vpack.c.bf16 %v4167, %v4166
      %s4172 = scalar_lea.vmem %s11, 12
      %v4173 = vld [vmem:[%s4172] sm:$0xf]
      %v4175 = vsel %vm565, %v4168, 0
      %v4178 = vsel %vm565, %v4169, 0
      %v4181 = vsel %vm565, %v4170, 0
      %v4184 = vsel %vm565, %v4171, 0
      %v4187 = vsel %vm3909, %v4173, 0
      %4189 = vmatprep.subr.bf16.mxu0 0
      %4190 = vmatpush1.bf16.msra.mxu0 %v4187
      %4191 = vmatprep.subr.bf16.mxu0 0
      %4192 = vmatpush1.bf16.msra.mxu0 0
      %4193 = vmatprep.subr.bf16.mxu0 0
      %4194 = vmatpush1.bf16.msra.mxu0 0
      %4195 = vmatprep.subr.bf16.mxu0 0
      %4196 = vmatpush1.bf16.msra.mxu0 0
      %4197 = vmatprep.subr.bf16.mxu0 0
      %4198 = vmatpush1.bf16.msra.mxu0 0
      %4199 = vmatprep.subr.bf16.mxu0 0
      %4200 = vmatpush1.bf16.msra.mxu0 0
      %4201 = vmatprep.subr.bf16.mxu0 0
      %4202 = vmatpush1.bf16.msra.mxu0 0
      %4203 = vmatprep.subr.bf16.mxu0 0
      %4204 = vmatpush1.bf16.msra.mxu0 0
      %4205 = vmatprep.subr.bf16.mxu0 0
      %4206 = vmatpush1.bf16.msra.mxu0 0
      %4207 = vmatprep.subr.bf16.mxu0 0
      %4208 = vmatpush1.bf16.msra.mxu0 0
      %4209 = vmatprep.subr.bf16.mxu0 0
      %4210 = vmatpush1.bf16.msra.mxu0 0
      %4211 = vmatprep.subr.bf16.mxu0 0
      %4212 = vmatpush1.bf16.msra.mxu0 0
      %4213 = vmatprep.subr.bf16.mxu0 0
      %4214 = vmatpush1.bf16.msra.mxu0 0
      %4215 = vmatprep.subr.bf16.mxu0 0
      %4216 = vmatpush1.bf16.msra.mxu0 0
      %4217 = vmatprep.subr.bf16.mxu0 0
      %4218 = vmatpush1.bf16.msra.mxu0 0
      %4219 = vmatprep.subr.bf16.mxu0 0
      %4220 = vmatpush1.bf16.msra.mxu0 0
      %4221 = vmatprep.mubr.bf16.mxu0 0
      %4222 = vmatmul.mubr.bf16.gmra.mrb[0].mxu0 %v4175
      %v4223 = vpop.f32.mrb[0].mxu0
      %v4224 = vadd.f32 0.0, %v4223
      %v4225 = vpop.f32.mrb[0].mxu0
      %v4226 = vpop.f32.mrb[0].mxu0
      %v4227 = vadd.f32 0.0, %v4226
      %v4228 = vpop.f32.mrb[0].mxu0
      %4229 = vmatprep.mubr.bf16.mxu0 0
      %4230 = vmatmul.mubr.bf16.gmra.mrb[0].mxu0 %v4178
      %v4231 = vpop.f32.mrb[0].mxu0
      %v4232 = vadd.f32 0.0, %v4231
      %v4233 = vpop.f32.mrb[0].mxu0
      %v4234 = vpop.f32.mrb[0].mxu0
      %v4235 = vadd.f32 0.0, %v4234
      %v4236 = vpop.f32.mrb[0].mxu0
      %4237 = vmatprep.mubr.bf16.mxu0 0
      %4238 = vmatmul.mubr.bf16.gmra.mrb[0].mxu0 %v4181
      %v4239 = vpop.f32.mrb[0].mxu0
      %v4240 = vadd.f32 0.0, %v4239
      %v4241 = vpop.f32.mrb[0].mxu0
      %v4242 = vpop.f32.mrb[0].mxu0
      %v4243 = vadd.f32 0.0, %v4242
      %v4244 = vpop.f32.mrb[0].mxu0
      %4245 = vmatprep.mubr.bf16.mxu0 0
      %4246 = vmatmul.mubr.bf16.gmra.mrb[0].mxu0 %v4184
      %v4247 = vpop.f32.mrb[0].mxu0
      %v4248 = vadd.f32 0.0, %v4247
      %v4249 = vpop.f32.mrb[0].mxu0
      %v4250 = vpop.f32.mrb[0].mxu0
      %v4251 = vadd.f32 0.0, %v4250
      %v4252 = vpop.f32.mrb[0].mxu0
      %4253 = vdwg.mxu0
      %v4254 = vadd.f32 %v4152, %v4224
      %v4255 = vadd.f32 %v4153, %v4227
      %v4256 = vadd.f32 %v4154, %v4232
      %v4257 = vadd.f32 %v4155, %v4235
      %v4258 = vadd.f32 %v4156, %v4240
      %v4259 = vadd.f32 %v4157, %v4243
      %v4260 = vadd.f32 %v4158, %v4248
      %v4261 = vadd.f32 %v4159, %v4251
      %v4262 = vld [vmem:[%s3861 + $0x1] sm:$0xff]
      %v4263 = vld [vmem:[%s3861 + $0x11] sm:$0xff]
      %v4264 = vld [vmem:[%s3861 + $0x21] sm:$0xff]
      %v4265 = vld [vmem:[%s3861 + $0x31] sm:$0xff]
      %v4266 = vld [vmem:[%s3861 + $0x41] sm:$0xff]
      %v4267 = vld [vmem:[%s3861 + $0x51] sm:$0xff]
      %v4268 = vld [vmem:[%s3861 + $0x61] sm:$0xff]
      %v4269 = vld [vmem:[%s3861 + $0x71] sm:$0xff]
      %v4270 = vpack.c.bf16 %v4263, %v4262
      %v4271 = vpack.c.bf16 %v4265, %v4264
      %v4272 = vpack.c.bf16 %v4267, %v4266
      %v4273 = vpack.c.bf16 %v4269, %v4268
      %s4274 = scalar_lea.vmem %s11, 16
      %v4275 = vld [vmem:[%s4274] sm:$0xf]
      %v4277 = vsel %vm565, %v4270, 0
      %v4280 = vsel %vm565, %v4271, 0
      %v4283 = vsel %vm565, %v4272, 0
      %v4286 = vsel %vm565, %v4273, 0
      %v4289 = vsel %vm3909, %v4275, 0
      %4291 = vmatprep.subr.bf16.mxu0 0
      %4292 = vmatpush1.bf16.msra.mxu0 %v4289
      %4293 = vmatprep.subr.bf16.mxu0 0
      %4294 = vmatpush1.bf16.msra.mxu0 0
      %4295 = vmatprep.subr.bf16.mxu0 0
      %4296 = vmatpush1.bf16.msra.mxu0 0
      %4297 = vmatprep.subr.bf16.mxu0 0
      %4298 = vmatpush1.bf16.msra.mxu0 0
      %4299 = vmatprep.subr.bf16.mxu0 0
      %4300 = vmatpush1.bf16.msra.mxu0 0
      %4301 = vmatprep.subr.bf16.mxu0 0
      %4302 = vmatpush1.bf16.msra.mxu0 0
      %4303 = vmatprep.subr.bf16.mxu0 0
      %4304 = vmatpush1.bf16.msra.mxu0 0
      %4305 = vmatprep.subr.bf16.mxu0 0
      %4306 = vmatpush1.bf16.msra.mxu0 0
      %4307 = vmatprep.subr.bf16.mxu0 0
      %4308 = vmatpush1.bf16.msra.mxu0 0
      %4309 = vmatprep.subr.bf16.mxu0 0
      %4310 = vmatpush1.bf16.msra.mxu0 0
      %4311 = vmatprep.subr.bf16.mxu0 0
      %4312 = vmatpush1.bf16.msra.mxu0 0
      %4313 = vmatprep.subr.bf16.mxu0 0
      %4314 = vmatpush1.bf16.msra.mxu0 0
      %4315 = vmatprep.subr.bf16.mxu0 0
      %4316 = vmatpush1.bf16.msra.mxu0 0
      %4317 = vmatprep.subr.bf16.mxu0 0
      %4318 = vmatpush1.bf16.msra.mxu0 0
      %4319 = vmatprep.subr.bf16.mxu0 0
      %4320 = vmatpush1.bf16.msra.mxu0 0
      %4321 = vmatprep.subr.bf16.mxu0 0
      %4322 = vmatpush1.bf16.msra.mxu0 0
      %4323 = vmatprep.mubr.bf16.mxu0 0
      %4324 = vmatmul.mubr.bf16.gmra.mrb[0].mxu0 %v4277
      %v4325 = vpop.f32.mrb[0].mxu0
      %v4326 = vadd.f32 0.0, %v4325
      %v4327 = vpop.f32.mrb[0].mxu0
      %v4328 = vpop.f32.mrb[0].mxu0
      %v4329 = vadd.f32 0.0, %v4328
      %v4330 = vpop.f32.mrb[0].mxu0
      %4331 = vmatprep.mubr.bf16.mxu0 0
      %4332 = vmatmul.mubr.bf16.gmra.mrb[0].mxu0 %v4280
      %v4333 = vpop.f32.mrb[0].mxu0
      %v4334 = vadd.f32 0.0, %v4333
      %v4335 = vpop.f32.mrb[0].mxu0
      %v4336 = vpop.f32.mrb[0].mxu0
      %v4337 = vadd.f32 0.0, %v4336
      %v4338 = vpop.f32.mrb[0].mxu0
      %4339 = vmatprep.mubr.bf16.mxu0 0
      %4340 = vmatmul.mubr.bf16.gmra.mrb[0].mxu0 %v4283
      %v4341 = vpop.f32.mrb[0].mxu0
      %v4342 = vadd.f32 0.0, %v4341
      %v4343 = vpop.f32.mrb[0].mxu0
      %v4344 = vpop.f32.mrb[0].mxu0
      %v4345 = vadd.f32 0.0, %v4344
      %v4346 = vpop.f32.mrb[0].mxu0
      %4347 = vmatprep.mubr.bf16.mxu0 0
      %4348 = vmatmul.mubr.bf16.gmra.mrb[0].mxu0 %v4286
      %v4349 = vpop.f32.mrb[0].mxu0
      %v4350 = vadd.f32 0.0, %v4349
      %v4351 = vpop.f32.mrb[0].mxu0
      %v4352 = vpop.f32.mrb[0].mxu0
      %v4353 = vadd.f32 0.0, %v4352
      %v4354 = vpop.f32.mrb[0].mxu0
      %4355 = vdwg.mxu0
      %v4356 = vadd.f32 %v4254, %v4326
      %v4357 = vadd.f32 %v4255, %v4329
      %v4358 = vadd.f32 %v4256, %v4334
      %v4359 = vadd.f32 %v4257, %v4337
      %v4360 = vadd.f32 %v4258, %v4342
      %v4361 = vadd.f32 %v4259, %v4345
      %v4362 = vadd.f32 %v4260, %v4350
      %v4363 = vadd.f32 %v4261, %v4353
      %v4364 = vld [vmem:[%s3861 + $0x2] sm:$0xff]
      %v4365 = vld [vmem:[%s3861 + $0x12] sm:$0xff]
      %v4366 = vld [vmem:[%s3861 + $0x22] sm:$0xff]
      %v4367 = vld [vmem:[%s3861 + $0x32] sm:$0xff]
      %v4368 = vld [vmem:[%s3861 + $0x42] sm:$0xff]
      %v4369 = vld [vmem:[%s3861 + $0x52] sm:$0xff]
      %v4370 = vld [vmem:[%s3861 + $0x62] sm:$0xff]
      %v4371 = vld [vmem:[%s3861 + $0x72] sm:$0xff]
      %v4372 = vpack.c.bf16 %v4365, %v4364
      %v4373 = vpack.c.bf16 %v4367, %v4366
      %v4374 = vpack.c.bf16 %v4369, %v4368
      %v4375 = vpack.c.bf16 %v4371, %v4370
      %s4376 = scalar_lea.vmem %s11, 20
      %v4377 = vld [vmem:[%s4376] sm:$0xf]
      %v4379 = vsel %vm565, %v4372, 0
      %v4382 = vsel %vm565, %v4373, 0
      %v4385 = vsel %vm565, %v4374, 0
      %v4388 = vsel %vm565, %v4375, 0
      %v4391 = vsel %vm3909, %v4377, 0
      %4393 = vmatprep.subr.bf16.mxu0 0
      %4394 = vmatpush1.bf16.msra.mxu0 %v4391
      %4395 = vmatprep.subr.bf16.mxu0 0
      %4396 = vmatpush1.bf16.msra.mxu0 0
      %4397 = vmatprep.subr.bf16.mxu0 0
      %4398 = vmatpush1.bf16.msra.mxu0 0
      %4399 = vmatprep.subr.bf16.mxu0 0
      %4400 = vmatpush1.bf16.msra.mxu0 0
      %4401 = vmatprep.subr.bf16.mxu0 0
      %4402 = vmatpush1.bf16.msra.mxu0 0
      %4403 = vmatprep.subr.bf16.mxu0 0
      %4404 = vmatpush1.bf16.msra.mxu0 0
      %4405 = vmatprep.subr.bf16.mxu0 0
      %4406 = vmatpush1.bf16.msra.mxu0 0
      %4407 = vmatprep.subr.bf16.mxu0 0
      %4408 = vmatpush1.bf16.msra.mxu0 0
      %4409 = vmatprep.subr.bf16.mxu0 0
      %4410 = vmatpush1.bf16.msra.mxu0 0
      %4411 = vmatprep.subr.bf16.mxu0 0
      %4412 = vmatpush1.bf16.msra.mxu0 0
      %4413 = vmatprep.subr.bf16.mxu0 0
      %4414 = vmatpush1.bf16.msra.mxu0 0
      %4415 = vmatprep.subr.bf16.mxu0 0
      %4416 = vmatpush1.bf16.msra.mxu0 0
      %4417 = vmatprep.subr.bf16.mxu0 0
      %4418 = vmatpush1.bf16.msra.mxu0 0
      %4419 = vmatprep.subr.bf16.mxu0 0
      %4420 = vmatpush1.bf16.msra.mxu0 0
      %4421 = vmatprep.subr.bf16.mxu0 0
      %4422 = vmatpush1.bf16.msra.mxu0 0
      %4423 = vmatprep.subr.bf16.mxu0 0
      %4424 = vmatpush1.bf16.msra.mxu0 0
      %4425 = vmatprep.mubr.bf16.mxu0 0
      %4426 = vmatmul.mubr.bf16.gmra.mrb[0].mxu0 %v4379
      %v4427 = vpop.f32.mrb[0].mxu0
      %v4428 = vadd.f32 0.0, %v4427
      %v4429 = vpop.f32.mrb[0].mxu0
      %v4430 = vpop.f32.mrb[0].mxu0
      %v4431 = vadd.f32 0.0, %v4430
      %v4432 = vpop.f32.mrb[0].mxu0
      %4433 = vmatprep.mubr.bf16.mxu0 0
      %4434 = vmatmul.mubr.bf16.gmra.mrb[0].mxu0 %v4382
      %v4435 = vpop.f32.mrb[0].mxu0
      %v4436 = vadd.f32 0.0, %v4435
      %v4437 = vpop.f32.mrb[0].mxu0
      %v4438 = vpop.f32.mrb[0].mxu0
      %v4439 = vadd.f32 0.0, %v4438
      %v4440 = vpop.f32.mrb[0].mxu0
      %4441 = vmatprep.mubr.bf16.mxu0 0
      %4442 = vmatmul.mubr.bf16.gmra.mrb[0].mxu0 %v4385
      %v4443 = vpop.f32.mrb[0].mxu0
      %v4444 = vadd.f32 0.0, %v4443
      %v4445 = vpop.f32.mrb[0].mxu0
      %v4446 = vpop.f32.mrb[0].mxu0
      %v4447 = vadd.f32 0.0, %v4446
      %v4448 = vpop.f32.mrb[0].mxu0
      %4449 = vmatprep.mubr.bf16.mxu0 0
      %4450 = vmatmul.mubr.bf16.gmra.mrb[0].mxu0 %v4388
      %v4451 = vpop.f32.mrb[0].mxu0
      %v4452 = vadd.f32 0.0, %v4451
      %v4453 = vpop.f32.mrb[0].mxu0
      %v4454 = vpop.f32.mrb[0].mxu0
      %v4455 = vadd.f32 0.0, %v4454
      %v4456 = vpop.f32.mrb[0].mxu0
      %4457 = vdwg.mxu0
      %v4458 = vadd.f32 %v4356, %v4428
      %v4459 = vadd.f32 %v4357, %v4431
      %v4460 = vadd.f32 %v4358, %v4436
      %v4461 = vadd.f32 %v4359, %v4439
      %v4462 = vadd.f32 %v4360, %v4444
      %v4463 = vadd.f32 %v4361, %v4447
      %v4464 = vadd.f32 %v4362, %v4452
      %v4465 = vadd.f32 %v4363, %v4455
      %s4466 = scalar_lea.vmem [#allocation3], 32
      %v4467 = vld [vmem:[%s4466] sm:$0xff]
      %v4468 = vld [vmem:[%s4466 + $0x10] sm:$0xff]
      %v4469 = vld [vmem:[%s4466 + $0x20] sm:$0xff]
      %v4470 = vld [vmem:[%s4466 + $0x30] sm:$0xff]
      %v4471 = vld [vmem:[%s4466 + $0x40] sm:$0xff]
      %v4472 = vld [vmem:[%s4466 + $0x50] sm:$0xff]
      %v4473 = vld [vmem:[%s4466 + $0x60] sm:$0xff]
      %v4474 = vld [vmem:[%s4466 + $0x70] sm:$0xff]
      %v4475 = vpack.c.bf16 %v4468, %v4467
      %v4476 = vpack.c.bf16 %v4470, %v4469
      %v4477 = vpack.c.bf16 %v4472, %v4471
      %v4478 = vpack.c.bf16 %v4474, %v4473
      %s4479 = scalar_lea.vmem %s11, 24
      %v4480 = vld [vmem:[%s4479] sm:$0xf]
      %v4482 = vsel %vm565, %v4475, 0
      %v4485 = vsel %vm565, %v4476, 0
      %v4488 = vsel %vm565, %v4477, 0
      %v4491 = vsel %vm565, %v4478, 0
      %v4494 = vsel %vm3909, %v4480, 0
      %4496 = vmatprep.subr.bf16.mxu0 0
      %4497 = vmatpush1.bf16.msra.mxu0 %v4494
      %4498 = vmatprep.subr.bf16.mxu0 0
      %4499 = vmatpush1.bf16.msra.mxu0 0
      %4500 = vmatprep.subr.bf16.mxu0 0
      %4501 = vmatpush1.bf16.msra.mxu0 0
      %4502 = vmatprep.subr.bf16.mxu0 0
      %4503 = vmatpush1.bf16.msra.mxu0 0
      %4504 = vmatprep.subr.bf16.mxu0 0
      %4505 = vmatpush1.bf16.msra.mxu0 0
      %4506 = vmatprep.subr.bf16.mxu0 0
      %4507 = vmatpush1.bf16.msra.mxu0 0
      %4508 = vmatprep.subr.bf16.mxu0 0
      %4509 = vmatpush1.bf16.msra.mxu0 0
      %4510 = vmatprep.subr.bf16.mxu0 0
      %4511 = vmatpush1.bf16.msra.mxu0 0
      %4512 = vmatprep.subr.bf16.mxu0 0
      %4513 = vmatpush1.bf16.msra.mxu0 0
      %4514 = vmatprep.subr.bf16.mxu0 0
      %4515 = vmatpush1.bf16.msra.mxu0 0
      %4516 = vmatprep.subr.bf16.mxu0 0
      %4517 = vmatpush1.bf16.msra.mxu0 0
      %4518 = vmatprep.subr.bf16.mxu0 0
      %4519 = vmatpush1.bf16.msra.mxu0 0
      %4520 = vmatprep.subr.bf16.mxu0 0
      %4521 = vmatpush1.bf16.msra.mxu0 0
      %4522 = vmatprep.subr.bf16.mxu0 0
      %4523 = vmatpush1.bf16.msra.mxu0 0
      %4524 = vmatprep.subr.bf16.mxu0 0
      %4525 = vmatpush1.bf16.msra.mxu0 0
      %4526 = vmatprep.subr.bf16.mxu0 0
      %4527 = vmatpush1.bf16.msra.mxu0 0
      %4528 = vmatprep.mubr.bf16.mxu0 0
      %4529 = vmatmul.mubr.bf16.gmra.mrb[0].mxu0 %v4482
      %v4530 = vpop.f32.mrb[0].mxu0
      %v4531 = vadd.f32 0.0, %v4530
      %v4532 = vpop.f32.mrb[0].mxu0
      %v4533 = vpop.f32.mrb[0].mxu0
      %v4534 = vadd.f32 0.0, %v4533
      %v4535 = vpop.f32.mrb[0].mxu0
      %4536 = vmatprep.mubr.bf16.mxu0 0
      %4537 = vmatmul.mubr.bf16.gmra.mrb[0].mxu0 %v4485
      %v4538 = vpop.f32.mrb[0].mxu0
      %v4539 = vadd.f32 0.0, %v4538
      %v4540 = vpop.f32.mrb[0].mxu0
      %v4541 = vpop.f32.mrb[0].mxu0
      %v4542 = vadd.f32 0.0, %v4541
      %v4543 = vpop.f32.mrb[0].mxu0
      %4544 = vmatprep.mubr.bf16.mxu0 0
      %4545 = vmatmul.mubr.bf16.gmra.mrb[0].mxu0 %v4488
      %v4546 = vpop.f32.mrb[0].mxu0
      %v4547 = vadd.f32 0.0, %v4546
      %v4548 = vpop.f32.mrb[0].mxu0
      %v4549 = vpop.f32.mrb[0].mxu0
      %v4550 = vadd.f32 0.0, %v4549
      %v4551 = vpop.f32.mrb[0].mxu0
      %4552 = vmatprep.mubr.bf16.mxu0 0
      %4553 = vmatmul.mubr.bf16.gmra.mrb[0].mxu0 %v4491
      %v4554 = vpop.f32.mrb[0].mxu0
      %v4555 = vadd.f32 0.0, %v4554
      %v4556 = vpop.f32.mrb[0].mxu0
      %v4557 = vpop.f32.mrb[0].mxu0
      %v4558 = vadd.f32 0.0, %v4557
      %v4559 = vpop.f32.mrb[0].mxu0
      %4560 = vdwg.mxu0
      %v4561 = vadd.f32 %v4458, %v4531
      %v4562 = vadd.f32 %v4459, %v4534
      %v4563 = vadd.f32 %v4460, %v4539
      %v4564 = vadd.f32 %v4461, %v4542
      %v4565 = vadd.f32 %v4462, %v4547
      %v4566 = vadd.f32 %v4463, %v4550
      %v4567 = vadd.f32 %v4464, %v4555
      %v4568 = vadd.f32 %v4465, %v4558
      %v4569 = vld [vmem:[%s4466 + $0x1] sm:$0xff]
      %v4570 = vld [vmem:[%s4466 + $0x11] sm:$0xff]
      %v4571 = vld [vmem:[%s4466 + $0x21] sm:$0xff]
      %v4572 = vld [vmem:[%s4466 + $0x31] sm:$0xff]
      %v4573 = vld [vmem:[%s4466 + $0x41] sm:$0xff]
      %v4574 = vld [vmem:[%s4466 + $0x51] sm:$0xff]
      %v4575 = vld [vmem:[%s4466 + $0x61] sm:$0xff]
      %v4576 = vld [vmem:[%s4466 + $0x71] sm:$0xff]
      %v4577 = vpack.c.bf16 %v4570, %v4569
      %v4578 = vpack.c.bf16 %v4572, %v4571
      %v4579 = vpack.c.bf16 %v4574, %v4573
      %v4580 = vpack.c.bf16 %v4576, %v4575
      %s4581 = scalar_lea.vmem %s11, 28
      %v4582 = vld [vmem:[%s4581] sm:$0xf]
      %v4584 = vsel %vm565, %v4577, 0
      %v4587 = vsel %vm565, %v4578, 0
      %v4590 = vsel %vm565, %v4579, 0
      %v4593 = vsel %vm565, %v4580, 0
      %v4596 = vsel %vm3909, %v4582, 0
      %4598 = vmatprep.subr.bf16.mxu0 0
      %4599 = vmatpush1.bf16.msra.mxu0 %v4596
      %4600 = vmatprep.subr.bf16.mxu0 0
      %4601 = vmatpush1.bf16.msra.mxu0 0
      %4602 = vmatprep.subr.bf16.mxu0 0
      %4603 = vmatpush1.bf16.msra.mxu0 0
      %4604 = vmatprep.subr.bf16.mxu0 0
      %4605 = vmatpush1.bf16.msra.mxu0 0
      %4606 = vmatprep.subr.bf16.mxu0 0
      %4607 = vmatpush1.bf16.msra.mxu0 0
      %4608 = vmatprep.subr.bf16.mxu0 0
      %4609 = vmatpush1.bf16.msra.mxu0 0
      %4610 = vmatprep.subr.bf16.mxu0 0
      %4611 = vmatpush1.bf16.msra.mxu0 0
      %4612 = vmatprep.subr.bf16.mxu0 0
      %4613 = vmatpush1.bf16.msra.mxu0 0
      %4614 = vmatprep.subr.bf16.mxu0 0
      %4615 = vmatpush1.bf16.msra.mxu0 0
      %4616 = vmatprep.subr.bf16.mxu0 0
      %4617 = vmatpush1.bf16.msra.mxu0 0
      %4618 = vmatprep.subr.bf16.mxu0 0
      %4619 = vmatpush1.bf16.msra.mxu0 0
      %4620 = vmatprep.subr.bf16.mxu0 0
      %4621 = vmatpush1.bf16.msra.mxu0 0
      %4622 = vmatprep.subr.bf16.mxu0 0
      %4623 = vmatpush1.bf16.msra.mxu0 0
      %4624 = vmatprep.subr.bf16.mxu0 0
      %4625 = vmatpush1.bf16.msra.mxu0 0
      %4626 = vmatprep.subr.bf16.mxu0 0
      %4627 = vmatpush1.bf16.msra.mxu0 0
      %4628 = vmatprep.subr.bf16.mxu0 0
      %4629 = vmatpush1.bf16.msra.mxu0 0
      %4630 = vmatprep.mubr.bf16.mxu0 0
      %4631 = vmatmul.mubr.bf16.gmra.mrb[0].mxu0 %v4584
      %v4632 = vpop.f32.mrb[0].mxu0
      %v4633 = vadd.f32 0.0, %v4632
      %v4634 = vpop.f32.mrb[0].mxu0
      %v4635 = vpop.f32.mrb[0].mxu0
      %v4636 = vadd.f32 0.0, %v4635
      %v4637 = vpop.f32.mrb[0].mxu0
      %4638 = vmatprep.mubr.bf16.mxu0 0
      %4639 = vmatmul.mubr.bf16.gmra.mrb[0].mxu0 %v4587
      %v4640 = vpop.f32.mrb[0].mxu0
      %v4641 = vadd.f32 0.0, %v4640
      %v4642 = vpop.f32.mrb[0].mxu0
      %v4643 = vpop.f32.mrb[0].mxu0
      %v4644 = vadd.f32 0.0, %v4643
      %v4645 = vpop.f32.mrb[0].mxu0
      %4646 = vmatprep.mubr.bf16.mxu0 0
      %4647 = vmatmul.mubr.bf16.gmra.mrb[0].mxu0 %v4590
      %v4648 = vpop.f32.mrb[0].mxu0
      %v4649 = vadd.f32 0.0, %v4648
      %v4650 = vpop.f32.mrb[0].mxu0
      %v4651 = vpop.f32.mrb[0].mxu0
      %v4652 = vadd.f32 0.0, %v4651
      %v4653 = vpop.f32.mrb[0].mxu0
      %4654 = vmatprep.mubr.bf16.mxu0 0
      %4655 = vmatmul.mubr.bf16.gmra.mrb[0].mxu0 %v4593
      %v4656 = vpop.f32.mrb[0].mxu0
      %v4657 = vadd.f32 0.0, %v4656
      %v4658 = vpop.f32.mrb[0].mxu0
      %v4659 = vpop.f32.mrb[0].mxu0
      %v4660 = vadd.f32 0.0, %v4659
      %v4661 = vpop.f32.mrb[0].mxu0
      %4662 = vdwg.mxu0
      %v4663 = vadd.f32 %v4561, %v4633
      %v4664 = vadd.f32 %v4562, %v4636
      %v4665 = vadd.f32 %v4563, %v4641
      %v4666 = vadd.f32 %v4564, %v4644
      %v4667 = vadd.f32 %v4565, %v4649
      %v4668 = vadd.f32 %v4566, %v4652
      %v4669 = vadd.f32 %v4567, %v4657
      %v4670 = vadd.f32 %v4568, %v4660
      %v4671 = vld [vmem:[%s4466 + $0x2] sm:$0xff]
      %v4672 = vld [vmem:[%s4466 + $0x12] sm:$0xff]
      %v4673 = vld [vmem:[%s4466 + $0x22] sm:$0xff]
      %v4674 = vld [vmem:[%s4466 + $0x32] sm:$0xff]
      %v4675 = vld [vmem:[%s4466 + $0x42] sm:$0xff]
      %v4676 = vld [vmem:[%s4466 + $0x52] sm:$0xff]
      %v4677 = vld [vmem:[%s4466 + $0x62] sm:$0xff]
      %v4678 = vld [vmem:[%s4466 + $0x72] sm:$0xff]
      %v4679 = vpack.c.bf16 %v4672, %v4671
      %v4680 = vpack.c.bf16 %v4674, %v4673
      %v4681 = vpack.c.bf16 %v4676, %v4675
      %v4682 = vpack.c.bf16 %v4678, %v4677
      %s4683 = scalar_lea.vmem %s11, 32
      %v4684 = vld [vmem:[%s4683] sm:$0xf]
      %v4686 = vsel %vm565, %v4679, 0
      %v4689 = vsel %vm565, %v4680, 0
      %v4692 = vsel %vm565, %v4681, 0
      %v4695 = vsel %vm565, %v4682, 0
      %v4698 = vsel %vm3909, %v4684, 0
      %4700 = vmatprep.subr.bf16.mxu0 0
      %4701 = vmatpush1.bf16.msra.mxu0 %v4698
      %4702 = vmatprep.subr.bf16.mxu0 0
      %4703 = vmatpush1.bf16.msra.mxu0 0
      %4704 = vmatprep.subr.bf16.mxu0 0
      %4705 = vmatpush1.bf16.msra.mxu0 0
      %4706 = vmatprep.subr.bf16.mxu0 0
      %4707 = vmatpush1.bf16.msra.mxu0 0
      %4708 = vmatprep.subr.bf16.mxu0 0
      %4709 = vmatpush1.bf16.msra.mxu0 0
      %4710 = vmatprep.subr.bf16.mxu0 0
      %4711 = vmatpush1.bf16.msra.mxu0 0
      %4712 = vmatprep.subr.bf16.mxu0 0
      %4713 = vmatpush1.bf16.msra.mxu0 0
      %4714 = vmatprep.subr.bf16.mxu0 0
      %4715 = vmatpush1.bf16.msra.mxu0 0
      %4716 = vmatprep.subr.bf16.mxu0 0
      %4717 = vmatpush1.bf16.msra.mxu0 0
      %4718 = vmatprep.subr.bf16.mxu0 0
      %4719 = vmatpush1.bf16.msra.mxu0 0
      %4720 = vmatprep.subr.bf16.mxu0 0
      %4721 = vmatpush1.bf16.msra.mxu0 0
      %4722 = vmatprep.subr.bf16.mxu0 0
      %4723 = vmatpush1.bf16.msra.mxu0 0
      %4724 = vmatprep.subr.bf16.mxu0 0
      %4725 = vmatpush1.bf16.msra.mxu0 0
      %4726 = vmatprep.subr.bf16.mxu0 0
      %4727 = vmatpush1.bf16.msra.mxu0 0
      %4728 = vmatprep.subr.bf16.mxu0 0
      %4729 = vmatpush1.bf16.msra.mxu0 0
      %4730 = vmatprep.subr.bf16.mxu0 0
      %4731 = vmatpush1.bf16.msra.mxu0 0
      %4732 = vmatprep.mubr.bf16.mxu0 0
      %4733 = vmatmul.mubr.bf16.gmra.mrb[0].mxu0 %v4686
      %v4734 = vpop.f32.mrb[0].mxu0
      %v4735 = vadd.f32 0.0, %v4734
      %v4736 = vpop.f32.mrb[0].mxu0
      %v4737 = vpop.f32.mrb[0].mxu0
      %v4738 = vadd.f32 0.0, %v4737
      %v4739 = vpop.f32.mrb[0].mxu0
      %4740 = vmatprep.mubr.bf16.mxu0 0
      %4741 = vmatmul.mubr.bf16.gmra.mrb[0].mxu0 %v4689
      %v4742 = vpop.f32.mrb[0].mxu0
      %v4743 = vadd.f32 0.0, %v4742
      %v4744 = vpop.f32.mrb[0].mxu0
      %v4745 = vpop.f32.mrb[0].mxu0
      %v4746 = vadd.f32 0.0, %v4745
      %v4747 = vpop.f32.mrb[0].mxu0
      %4748 = vmatprep.mubr.bf16.mxu0 0
      %4749 = vmatmul.mubr.bf16.gmra.mrb[0].mxu0 %v4692
      %v4750 = vpop.f32.mrb[0].mxu0
      %v4751 = vadd.f32 0.0, %v4750
      %v4752 = vpop.f32.mrb[0].mxu0
      %v4753 = vpop.f32.mrb[0].mxu0
      %v4754 = vadd.f32 0.0, %v4753
      %v4755 = vpop.f32.mrb[0].mxu0
      %4756 = vmatprep.mubr.bf16.mxu0 0
      %4757 = vmatmul.mubr.bf16.gmra.mrb[0].mxu0 %v4695
      %v4758 = vpop.f32.mrb[0].mxu0
      %v4759 = vadd.f32 0.0, %v4758
      %v4760 = vpop.f32.mrb[0].mxu0
      %v4761 = vpop.f32.mrb[0].mxu0
      %v4762 = vadd.f32 0.0, %v4761
      %v4763 = vpop.f32.mrb[0].mxu0
      %4764 = vdwg.mxu0
      %v4765 = vadd.f32 %v4663, %v4735
      %v4766 = vadd.f32 %v4664, %v4738
      %v4767 = vadd.f32 %v4665, %v4743
      %v4768 = vadd.f32 %v4666, %v4746
      %v4769 = vadd.f32 %v4667, %v4751
      %v4770 = vadd.f32 %v4668, %v4754
      %v4771 = vadd.f32 %v4669, %v4759
      %v4772 = vadd.f32 %v4670, %v4762
      %v4773 = vsel %vm565, %v4765, 0.0
      %v4774 = vsel %vm565, %v4766, 0.0
      %v4775 = vadd.f32 %v4773, %v4774
      %v4776 = vsel %vm565, %v4767, 0.0
      %v4777 = vadd.f32 %v4775, %v4776
      %v4778 = vsel %vm565, %v4768, 0.0
      %v4779 = vadd.f32 %v4777, %v4778
      %v4780 = vsel %vm565, %v4769, 0.0
      %v4781 = vadd.f32 %v4779, %v4780
      %v4782 = vsel %vm565, %v4770, 0.0
      %v4783 = vadd.f32 %v4781, %v4782
      %v4784 = vsel %vm565, %v4771, 0.0
      %v4785 = vadd.f32 %v4783, %v4784
      %v4786 = vsel %vm565, %v4772, 0.0
      %v4787 = vadd.f32 %v4785, %v4786
      %4788 = vadd.xlane.f32.xlu0 %v4787
      %v4789 = vpop.xlane.xlu0 %4788
      %v4790 = vrot.slane %v4789, 4
      %v4791 = vadd.f32 %v4789, %v4790
      %v4792 = vrot.slane %v4791, 2
      %v4793 = vadd.f32 %v4791, %v4792
      %v4794 = vrot.slane %v4793, 1
      %v4795 = vadd.f32 %v4793, %v4794
      %s4796 = vtos %v4795
      %v4797 = vrcp.pop 512.0
      %s4798 = vtos %v4797
      %s4799 = smul.f32 %s4796, %s4798
      %v4800 = vmul.f32 %v4765, %v4765
      %v4801 = vmul.f32 %v4766, %v4766
      %v4802 = vmul.f32 %v4767, %v4767
      %v4803 = vmul.f32 %v4768, %v4768
      %v4804 = vmul.f32 %v4769, %v4769
      %v4805 = vmul.f32 %v4770, %v4770
      %v4806 = vmul.f32 %v4771, %v4771
      %v4807 = vmul.f32 %v4772, %v4772
      %v4808 = vsel %vm565, %v4800, 0.0
      %v4809 = vsel %vm565, %v4801, 0.0
      %v4810 = vadd.f32 %v4808, %v4809
      %v4811 = vsel %vm565, %v4802, 0.0
      %v4812 = vadd.f32 %v4810, %v4811
      %v4813 = vsel %vm565, %v4803, 0.0
      %v4814 = vadd.f32 %v4812, %v4813
      %v4815 = vsel %vm565, %v4804, 0.0
      %v4816 = vadd.f32 %v4814, %v4815
      %v4817 = vsel %vm565, %v4805, 0.0
      %v4818 = vadd.f32 %v4816, %v4817
      %v4819 = vsel %vm565, %v4806, 0.0
      %v4820 = vadd.f32 %v4818, %v4819
      %v4821 = vsel %vm565, %v4807, 0.0
      %v4822 = vadd.f32 %v4820, %v4821
      %4823 = vadd.xlane.f32.xlu0 %v4822
      %v4824 = vpop.xlane.xlu0 %4823
      %v4825 = vrot.slane %v4824, 4
      %v4826 = vadd.f32 %v4824, %v4825
      %v4827 = vrot.slane %v4826, 2
      %v4828 = vadd.f32 %v4826, %v4827
      %v4829 = vrot.slane %v4828, 1
      %v4830 = vadd.f32 %v4828, %v4829
      %s4831 = vtos %v4830
      %v4832 = vrcp.pop 512.0
      %s4833 = vtos %v4832
      %s4834 = smul.f32 %s4831, %s4833
      %s4835 = smul.f32 %s4799, %s4799
      %s4836 = ssub.f32 %s4834, %s4835
      %s4837 = smax.f32 %s4836, 0.0
      %v4838 = vstv %s4799
      %v4839 = vsub.f32 %v4765, %v4838
      %v4840 = vsub.f32 %v4766, %v4838
      %v4841 = vsub.f32 %v4767, %v4838
      %v4842 = vsub.f32 %v4768, %v4838
      %v4843 = vsub.f32 %v4769, %v4838
      %v4844 = vsub.f32 %v4770, %v4838
      %v4845 = vsub.f32 %v4771, %v4838
      %v4846 = vsub.f32 %v4772, %v4838
      %s4847 = sadd.f32 %s4837, 1e-05
      %v4848 = vstv %s4847
      %v4849 = vrsqrt.pop %v4848
      %s4850 = vtos %v4849
      %v4851 = vstv %s4850
      %v4852 = vmul.f32 %v4839, %v4851
      %v4853 = vmul.f32 %v4840, %v4851
      %v4854 = vmul.f32 %v4841, %v4851
      %v4855 = vmul.f32 %v4842, %v4851
      %v4856 = vmul.f32 %v4843, %v4851
      %v4857 = vmul.f32 %v4844, %v4851
      %v4858 = vmul.f32 %v4845, %v4851
      %v4859 = vmul.f32 %v4846, %v4851
      %v4860 = vld [vmem:[%s12] sm:$0x1]
      %v4862 = vlaneseq
      %v4863 = vshrl.u32 %v4862, 7
      %v4864 = vsub.s32 0, %v4863
      %v4865 = vrot.slane %v4860, %v4864
      %v4867 = vmul.f32 %v4852, %v4865
      %v4868 = vmul.f32 %v4853, %v4865
      %v4869 = vmul.f32 %v4854, %v4865
      %v4870 = vmul.f32 %v4855, %v4865
      %v4871 = vmul.f32 %v4856, %v4865
      %v4872 = vmul.f32 %v4857, %v4865
      %v4873 = vmul.f32 %v4858, %v4865
      %v4874 = vmul.f32 %v4859, %v4865
      %v4875 = vld [vmem:[%s13] sm:$0x1]
      %v4877 = vlaneseq
      %v4878 = vshrl.u32 %v4877, 7
      %v4879 = vsub.s32 0, %v4878
      %v4880 = vrot.slane %v4875, %v4879
      %v4882 = vadd.f32 %v4867, %v4880
      %v4883 = vadd.f32 %v4868, %v4880
      %v4884 = vadd.f32 %v4869, %v4880
      %v4885 = vadd.f32 %v4870, %v4880
      %v4886 = vadd.f32 %v4871, %v4880
      %v4887 = vadd.f32 %v4872, %v4880
      %v4888 = vadd.f32 %v4873, %v4880
      %v4889 = vadd.f32 %v4874, %v4880
      %v4890 = vld [vmem:[%s530] sm:$0x1]
      %v4891 = vxor.u32 %v4890, 2147483648
      %v4892 = vmul.f32 %v4891, 1.442695
      %v4893 = vpow.pop %v4892
      %v4894 = vadd.f32 %v4893, 1.0
      %v4895 = vrcp.pop %v4894
      %v4896 = vmul.f32 1.0, %v4895
      %v4897 = vmul.f32 %v4890, %v4896
      %v4898 = vpack.c.bf16 %v4897, %v4897
      %v4899 = vld [vmem:[%s14] sm:$0xf]
      %v4900 = vld [vmem:[%s14 + $0x4] sm:$0xf]
      %v4901 = vld [vmem:[%s14 + $0x8] sm:$0xf]
      %v4902 = vld [vmem:[%s14 + $0xc] sm:$0xf]
      %v4903 = vld [vmem:[%s15] sm:$0x1]
      %v4908 = vunpack.c.l.b16 %v4899
      %v4909 = vunpack.c.l.b16 %v4900
      %v4910 = vunpack.c.l.b16 %v4901
      %v4911 = vunpack.c.l.b16 %v4902
      %v4912 = vpack.c.b16 %v4909, %v4908
      %v4913 = vpack.c.b16 %v4911, %v4910
      %vm4916 = vcmask 261120
      %v4918 = vsel %vm4916, %v4898, 0
      %4920 = vmatprep.subr.bf16.mxu0 0
      %4921 = vmatpush1.bf16.msra.mxu0 %v4912
      %4922 = vmatprep.subr.bf16.mxu0 0
      %4923 = vmatpush1.bf16.msra.mxu0 %v4913
      %4924 = vmatprep.subr.bf16.mxu0 0
      %4925 = vmatpush1.bf16.msra.mxu0 0
      %4926 = vmatprep.subr.bf16.mxu0 0
      %4927 = vmatpush1.bf16.msra.mxu0 0
      %4928 = vmatprep.subr.bf16.mxu0 0
      %4929 = vmatpush1.bf16.msra.mxu0 0
      %4930 = vmatprep.subr.bf16.mxu0 0
      %4931 = vmatpush1.bf16.msra.mxu0 0
      %4932 = vmatprep.subr.bf16.mxu0 0
      %4933 = vmatpush1.bf16.msra.mxu0 0
      %4934 = vmatprep.subr.bf16.mxu0 0
      %4935 = vmatpush1.bf16.msra.mxu0 0
      %4936 = vmatprep.subr.bf16.mxu0 0
      %4937 = vmatpush1.bf16.msra.mxu0 0
      %4938 = vmatprep.subr.bf16.mxu0 0
      %4939 = vmatpush1.bf16.msra.mxu0 0
      %4940 = vmatprep.subr.bf16.mxu0 0
      %4941 = vmatpush1.bf16.msra.mxu0 0
      %4942 = vmatprep.subr.bf16.mxu0 0
      %4943 = vmatpush1.bf16.msra.mxu0 0
      %4944 = vmatprep.subr.bf16.mxu0 0
      %4945 = vmatpush1.bf16.msra.mxu0 0
      %4946 = vmatprep.subr.bf16.mxu0 0
      %4947 = vmatpush1.bf16.msra.mxu0 0
      %4948 = vmatprep.subr.bf16.mxu0 0
      %4949 = vmatpush1.bf16.msra.mxu0 0
      %4950 = vmatprep.subr.bf16.mxu0 0
      %4951 = vmatpush1.bf16.msra.mxu0 0
      %4952 = vmatprep.mubr.bf16.mxu0 0
      %4953 = vmatmul.mubr.bf16.gmra.mrb[0].mxu0 %v4918
      %v4954 = vpop.f32.mrb[0].mxu0
      %v4955 = vadd.f32 %v4903, %v4954
      %v4956 = vpop.f32.mrb[0].mxu0
      %v4957 = vpop.f32.mrb[0].mxu0
      %v4958 = vpop.f32.mrb[0].mxu0
      %4959 = vdwg.mxu0
      %v4960 = vlaneseq
      %v4961 = vshrl.u32 %v4960, 7
      %v4962 = vsub.s32 0, %v4961
      %v4963 = vrot.slane %v4955, %v4962
      %v4964 = vadd.f32 %v4882, %v4963
      %v4965 = vadd.f32 %v4883, %v4963
      %v4966 = vadd.f32 %v4884, %v4963
      %v4967 = vadd.f32 %v4885, %v4963
      %v4968 = vadd.f32 %v4886, %v4963
      %v4969 = vadd.f32 %v4887, %v4963
      %v4970 = vadd.f32 %v4888, %v4963
      %v4971 = vadd.f32 %v4889, %v4963
      %4972 = vst.msk [vmem:[%s535] sm:$0xff] %vm565, %v4964
      %4973 = vst.msk [vmem:[%s535 + $0x8] sm:$0xff] %vm565, %v4965
      %4974 = vst.msk [vmem:[%s535 + $0x10] sm:$0xff] %vm565, %v4966
      %4975 = vst.msk [vmem:[%s535 + $0x18] sm:$0xff] %vm565, %v4967
      %4976 = vst.msk [vmem:[%s535 + $0x20] sm:$0xff] %vm565, %v4968
      %4977 = vst.msk [vmem:[%s535 + $0x28] sm:$0xff] %vm565, %v4969
      %4978 = vst.msk [vmem:[%s535 + $0x30] sm:$0xff] %vm565, %v4970
      %4979 = vst.msk [vmem:[%s535 + $0x38] sm:$0xff] %vm565, %v4971
      %p4980 = scmp.lt.s32.totalorder %s27, 1
      %s4981 = scalar_select %p4980, %s27, 1
      %s4982 = smul.addr %s4981, 8
      %s4983 = smul.addr %s4982, 8
      %s4984 = scalar_lea.vmem %s16, %s4983
      // Predicated region
      $region85: #{down_pallas.1} parent=83 // pred_check
        %p4985 = pneg %p391
      $region86: #{down_pallas.1} parent=83 // pred_check_branch
        %4987 = sbr.rel (%p4985) target = $region88
      $region87: #{down_pallas.1} parent=83 // pred_region
        _
      $region88: #{down_pallas.1} parent=83 // pred_fallthru
        _
    $region84: #{down_pallas.1} parent=5 // pred_fallthru
      _
    %p4988 = scmp.le.s32.totalorder 2, %s22
    // Predicated region
    $region89: #{down_pallas.1} parent=5 // pred_check
      %p4989 = pneg %p4988
    $region90: #{down_pallas.1} parent=5 // pred_check_branch
      %4991 = sbr.rel (%p4989) target = $region92
    $region91: #{down_pallas.1} parent=5 // pred_region
      %s4992 = ssub.s32 %s22, 2
      // Predicated region
      $region93: #{down_pallas.1} parent=91 // pred_check
        %p4993 = pneg %p397
      $region94: #{down_pallas.1} parent=91 // pred_check_branch
        %4995 = sbr.rel (%p4993) target = $region96
      $region95: #{down_pallas.1} parent=91 // pred_region
        %p4996 = scmp.lt.s32.totalorder %s28, 1
        %s4997 = scalar_select %p4996, %s28, 1
        %s4998 = smul.addr %s4997, 8
        %s4999 = smul.addr %s4998, 8
        %s5000 = scalar_lea.vmem %s16, %s4999
      $region96: #{down_pallas.1} parent=91 // pred_fallthru
        _
    $region92: #{down_pallas.1} parent=5 // pred_fallthru
      _
  $region6: #{down_pallas.1} parent=0 // loop_footer
    %s26 = sadd.s32 1, %s22
  $region7: #{down_pallas.1} parent=0 // loop_footer_branch
    %21 = sbr.rel target = $region3
  $region8: #{down_pallas.1} parent=0 // loop_exit
    _

</llo_original>
